<compile_context>
chip_gen: v7x
topology: tpu7x:2x2x1
jax: 0.10.0
libtpu: 0.0.40
codegen_flags: <defaults>
</compile_context>

<pallas_src>
import functools

import jax
import jax.numpy as jnp
from jax import lax
from jax.experimental import pallas as pl
from jax.experimental.pallas import tpu as pltpu

LANE = 128


def _round_up(x, m):
    return ((x + m - 1) // m) * m


# ----------------------------------------------------------------------------
# gatherData (glue, plain JAX): keep >0 entries per row in original order,
# pad to a bucketed (multiple-of-128) length; padding mask is True on pads.
# ----------------------------------------------------------------------------
def gather_data(data, labels, pad_value, bucket=LANE):
    B, G = data.shape
    # One host sync picks a *bucketed* static length; downstream kernels only
    # recompile per bucket (multiple of 128), not per exact count.
    # TODO(synk): this host sync will stall inside a fully jitted caller.
    max_num = max(int(jnp.max(jnp.sum(labels, axis=1))), 1)
    S = _round_up(max_num, bucket)
    take = min(S, G)
    idx = jnp.arange(G)[None, :]
    key = jnp.where(labels, idx, idx + G)              # valid entries sort first
    order = jnp.argsort(key, axis=1)[:, :take]
    gathered = jnp.take_along_axis(data, order, axis=1)
    valid = jnp.take_along_axis(labels, order, axis=1)
    pad = jnp.asarray(pad_value, dtype=data.dtype)
    new_data = jnp.where(valid, gathered, pad)
    padding = jnp.logical_not(valid)
    if S > take:
        extra = S - take
        new_data = jnp.concatenate(
            [new_data, jnp.full((B, extra), pad_value, data.dtype)], axis=1)
        padding = jnp.concatenate(
            [padding, jnp.ones((B, extra), bool)], axis=1)
    return new_data, padding, max_num


# ----------------------------------------------------------------------------
# Kernel 1: transformer encoder (post-LN, single-head attention with additive
# key-padding bias), layer-gridded + batch-gridded, fused masked max-pool.
# ----------------------------------------------------------------------------
def _layer_norm(h, gamma, beta, eps=1e-5):
    mean = jnp.mean(h, axis=-1, keepdims=True)
    var = jnp.mean((h - mean) ** 2, axis=-1, keepdims=True)
    return (h - mean) * lax.rsqrt(var + eps) * gamma + beta


def encoder_kernel(x_ref, bias_ref, pmask_ref,
                   wqkv_ref, bqkv_ref, wo_ref, bo_ref, ln_ref,
                   w1_ref, b1_ref, w2_ref, b2_ref,
                   pooled_ref, h_scratch, *, kv_tile):
    layer = pl.program_id(1)
    n_layers = pl.num_programs(1)
    TB, S, H = h_scratch.shape

    # Initialize the residual carry from the embedded input at the first layer.
    @pl.when(layer == 0)
    def _():
        h_scratch[...] = x_ref[...]

    h = h_scratch[...]                               # (TB, S, H) f32
    x2 = h.reshape(TB * S, H)
    x2b = x2.astype(jnp.bfloat16)

    # Fused QKV projection (1/sqrt(H) scale pre-folded into the Q weight slice).
    qkv = jnp.dot(x2b, wqkv_ref[0],
                  preferred_element_type=jnp.float32) + bqkv_ref[0]
    q = qkv[:, 0 * H:1 * H].reshape(TB, S, H).astype(jnp.bfloat16)
    k = qkv[:, 1 * H:2 * H].reshape(TB, S, H).astype(jnp.bfloat16)
    v = qkv[:, 2 * H:3 * H].reshape(TB, S, H).astype(jnp.bfloat16)

    bias = bias_ref[...]                             # (TB, 1, S) f32, -1e9 on pads

    # Flash-style attention: online softmax over kv tiles (no dense (S,S) f32).
    m_i = jnp.full((TB, S, 1), -jnp.inf, jnp.float32)
    l_i = jnp.zeros((TB, S, 1), jnp.float32)
    acc = jnp.zeros((TB, S, H), jnp.float32)
    for j in range(S // kv_tile):                    # static tile count per bucket
        kj = k[:, j * kv_tile:(j + 1) * kv_tile, :]
        vj = v[:, j * kv_tile:(j + 1) * kv_tile, :]
        bj = bias[:, :, j * kv_tile:(j + 1) * kv_tile]
        sj = lax.dot_general(q, kj, (((2,), (2,)), ((0,), (0,))),
                             preferred_element_type=jnp.float32) + bj
        m_new = jnp.maximum(m_i, jnp.max(sj, axis=-1, keepdims=True))
        alpha = jnp.exp(m_i - m_new)
        pj = jnp.exp(sj - m_new)
        l_i = alpha * l_i + jnp.sum(pj, axis=-1, keepdims=True)
        acc = alpha * acc + lax.dot_general(pj.astype(jnp.bfloat16), vj,
                                            (((2,), (1,)), ((0,), (0,))),
                                            preferred_element_type=jnp.float32)
        m_i = m_new
    attn = acc * pl.reciprocal(l_i, approx=True)     # EUP reciprocal

    proj = jnp.dot(attn.reshape(TB * S, H).astype(jnp.bfloat16), wo_ref[0],
                   preferred_element_type=jnp.float32) + bo_ref[0]

    ln = ln_ref[0]                                   # (4, H): g1, b1, g2, b2
    h1 = _layer_norm(x2 + proj, ln[0:1], ln[1:2])

    ff = jnp.maximum(
        jnp.dot(h1.astype(jnp.bfloat16), w1_ref[0],
                preferred_element_type=jnp.float32) + b1_ref[0], 0.0)
    ff = jnp.dot(ff.astype(jnp.bfloat16), w2_ref[0],
                 preferred_element_type=jnp.float32) + b2_ref[0]

    h_new = _layer_norm(h1 + ff, ln[2:3], ln[3:4]).reshape(TB, S, H)
    h_scratch[...] = h_new

    # Fused masked max-pool at the last layer; only (TB, 1, H) leaves the kernel.
    @pl.when(layer == n_layers - 1)
    def _():
        pmask = pmask_ref[...]                       # (1, S): 1.0 on torch-visible cols
        masked = jnp.where(pmask[:, :, None] > 0.5, h_new, jnp.float32(-1e30))
        pooled_ref[...] = jnp.max(masked, axis=1, keepdims=True)


def encoder_forward(x_emb, attn_bias, pool_mask, enc_params, *, batch_tile=1):
    B, S, H = x_emb.shape
    L = enc_params["wqkv"].shape[0]
    FFN = enc_params["w1"].shape[-1]
    TB = batch_tile
    assert B % TB == 0 and S % LANE == 0
    kv_tile = next(c for c in (512, 384, 256, 128) if S % c == 0)

    def per_layer(tail):
        return pl.BlockSpec((1,) + tail, lambda b, l: (l,) + (0,) * len(tail))

    in_specs = [
        pl.BlockSpec((TB, S, H), lambda b, l: (b, 0, 0)),   # x_emb  (fetched once per b)
        pl.BlockSpec((TB, 1, S), lambda b, l: (b, 0, 0)),   # attn_bias
        pl.BlockSpec((1, S), lambda b, l: (0, 0)),          # pool_mask
        per_layer((H, 3 * H)),                              # wqkv
        per_layer((1, 3 * H)),                              # bqkv
        per_layer((H, H)),                                  # wo
        per_layer((1, H)),                                  # bo
        per_layer((4, H)),                                  # ln params
        per_layer((H, FFN)),                                # w1
        per_layer((1, FFN)),                                # b1
        per_layer((FFN, H)),                                # w2
        per_layer((1, H)),                                  # b2
    ]
    out_spec = pl.BlockSpec((TB, 1, H), lambda b, l: (b, 0, 0))

    kernel = functools.partial(encoder_kernel, kv_tile=kv_tile)
    pooled = pl.pallas_call(
        kernel,
        grid=(B // TB, L),
        out_shape=jax.ShapeDtypeStruct((B, 1, H), jnp.float32),
        in_specs=in_specs,
        out_specs=out_spec,
        scratch_shapes=[pltpu.VMEM((TB, S, H), jnp.float32)],   # residual carry
        compiler_params=pltpu.CompilerParams(
            dimension_semantics=("parallel", "arbitrary"),
            vmem_limit_bytes=32 * 1024 * 1024),
    )(x_emb, attn_bias, pool_mask,
      enc_params["wqkv"], enc_params["bqkv"], enc_params["wo"], enc_params["bo"],
      enc_params["ln"], enc_params["w1"], enc_params["b1"], enc_params["w2"],
      enc_params["b2"])
    return pooled.reshape(B, H)


# ----------------------------------------------------------------------------
# Kernel 2: BatchNorm1d (affine=False, eps=1e-6, batch stats) + MLP head.
# ----------------------------------------------------------------------------
def head_kernel(pooled_ref, fcw1_ref, fcb1_ref, fcw2_ref, fcb2_ref, o_ref):
    pooled = pooled_ref[...]                         # (B, H) f32
    mean = jnp.mean(pooled, axis=0, keepdims=True)   # training-mode batch stats
    var = jnp.mean((pooled - mean) ** 2, axis=0, keepdims=True)
    z = (pooled - mean) * lax.rsqrt(var + 1e-6)
    y = jnp.maximum(
        jnp.dot(z.astype(jnp.bfloat16), fcw1_ref[...],
                preferred_element_type=jnp.float32) + fcb1_ref[...], 0.0)
    o_ref[...] = (jnp.dot(y.astype(jnp.bfloat16), fcw2_ref[...],
                          preferred_element_type=jnp.float32) + fcb2_ref[...])


def head_forward(pooled, head_params, num_classes):
    B, _ = pooled.shape
    cls_pad = head_params["fc_w2"].shape[1]
    vspec = pl.BlockSpec(memory_space=pltpu.MemorySpace.VMEM)
    out = pl.pallas_call(
        head_kernel,
        out_shape=jax.ShapeDtypeStruct((B, cls_pad), jnp.float32),
        in_specs=[vspec] * 5,
        out_specs=vspec,
        compiler_params=pltpu.CompilerParams(vmem_limit_bytes=16 * 1024 * 1024),
    )(pooled, head_params["fc_w1"], head_params["fc_b1"],
      head_params["fc_w2"], head_params["fc_b2"])
    return out[:, :num_classes]                      # drop lane padding of logits


def linear_probing_forward(x_emb, attn_bias, pool_mask, enc_params, head_params,
                           num_classes):
    pooled = encoder_forward(x_emb, attn_bias, pool_mask, enc_params)
    return head_forward(pooled, head_params, num_classes)


# ----------------------------------------------------------------------------
# main
# ----------------------------------------------------------------------------
if __name__ == "__main__":
    key = jax.random.PRNGKey(0)

    B = 2
    NUM_GENES = 192      # stand-in for 19264 genes
    HIDDEN = 128         # lane-dense stand-in for encoder hidden_dim
    FFN = 256
    NUM_LAYERS = 2
    FC_HIDDEN = 512      # nn.Linear(hidden, 512)
    NUM_CLASSES = 21     # nn.Linear(512, 21)
    CLS_PAD = _round_up(NUM_CLASSES, LANE)
    PAD_TOKEN_ID = 0.0
    PAD_GENE_ID = NUM_GENES

    keys = jax.random.split(key, 16)

    def init(k, shape, scale=0.1):
        return scale * jax.random.normal(k, shape, jnp.float32)

    # token_emb ~ Linear(1 -> HIDDEN); pos_emb = embedding table (+1 row for pad id)
    token_w = init(keys[1], (HIDDEN,))
    token_b = init(keys[2], (HIDDEN,))
    pos_table = init(keys[3], (NUM_GENES + 1, HIDDEN))

    ln_row = jnp.concatenate([jnp.ones((1, HIDDEN)), jnp.zeros((1, HIDDEN)),
                              jnp.ones((1, HIDDEN)), jnp.zeros((1, HIDDEN))],
                             axis=0).astype(jnp.float32)          # (4, H)

    wqkv, bqkv, wo, bo, w1, b1, w2, b2 = [], [], [], [], [], [], [], []
    for l in range(NUM_LAYERS):
        lk = jax.random.split(keys[4 + l], 8)
        wqkv.append(init(lk[0], (HIDDEN, 3 * HIDDEN)))
        bqkv.append(init(lk[1], (1, 3 * HIDDEN)))
        wo.append(init(lk[2], (HIDDEN, HIDDEN)))
        bo.append(init(lk[3], (1, HIDDEN)))
        w1.append(init(lk[4], (HIDDEN, FFN)))
        b1.append(init(lk[5], (1, FFN)))
        w2.append(init(lk[6], (FFN, HIDDEN)))
        b2.append(init(lk[7], (1, HIDDEN)))

    # Fold the 1/sqrt(H) attention scale into the Q slice of the fused QKV
    # weight+bias (zero in-kernel scaling work on the score tensor).
    attn_scale = 1.0 / (float(HIDDEN) ** 0.5)
    wqkv_s = jnp.stack(wqkv).at[:, :, :HIDDEN].multiply(attn_scale)
    bqkv_s = jnp.stack(bqkv).at[:, :, :HIDDEN].multiply(attn_scale)

    enc_params = dict(
        wqkv=wqkv_s.astype(jnp.bfloat16),             # matmul operands -> bf16
        bqkv=bqkv_s,
        wo=jnp.stack(wo).astype(jnp.bfloat16),
        bo=jnp.stack(bo),
        ln=jnp.stack([ln_row] * NUM_LAYERS),
        w1=jnp.stack(w1).astype(jnp.bfloat16),
        b1=jnp.stack(b1),
        w2=jnp.stack(w2).astype(jnp.bfloat16),
        b2=jnp.stack(b2),
    )

    fc_w1 = init(keys[8], (HIDDEN, FC_HIDDEN)).astype(jnp.bfloat16)
    fc_b1 = init(keys[9], (1, FC_HIDDEN))
    fc_w2_raw = init(keys[10], (FC_HIDDEN, NUM_CLASSES))
    fc_b2_raw = init(keys[11], (1, NUM_CLASSES))
    fc_w2 = (jnp.zeros((FC_HIDDEN, CLS_PAD), jnp.float32)
             .at[:, :NUM_CLASSES].set(fc_w2_raw)).astype(jnp.bfloat16)
    fc_b2 = jnp.zeros((1, CLS_PAD), jnp.float32).at[:, :NUM_CLASSES].set(fc_b2_raw)
    head_params = dict(fc_w1=fc_w1, fc_b1=fc_b1, fc_w2=fc_w2, fc_b2=fc_b2)

    # raw expression input: (B, G), roughly half the entries > 0
    x_raw = jax.random.normal(keys[0], (B, NUM_GENES), jnp.float32)

    # ---- gather + embedding (glue, plain JAX) ----
    value_labels = x_raw > 0
    x_g, x_padding, max_num = gather_data(x_raw, value_labels, PAD_TOKEN_ID)     # (B, S)
    gene_ids = jnp.tile(jnp.arange(NUM_GENES, dtype=jnp.int32)[None, :], (B, 1))
    pos_ids, _, _ = gather_data(gene_ids, value_labels, PAD_GENE_ID)             # (B, S)
    S = x_g.shape[1]

    x_emb = (x_g[:, :, None] * token_w[None, None, :] + token_b[None, None, :]
             + jnp.take(pos_table, pos_ids, axis=0)).astype(jnp.float32)         # (B, S, H)

    # additive key-padding bias for attention: (B, 1, S)
    attn_bias = jnp.where(x_padding, -1e9, 0.0).astype(jnp.float32)[:, None, :]
    # torch max-pools over exactly max_num gathered positions (incl. its own
    # pads); mask only the extra bucket-padding columns beyond max_num.
    pool_mask = (jnp.arange(S) < max_num).astype(jnp.float32)[None, :]

    # ---- forward pass: encoder+pool kernel, then BN+MLP head kernel ----
    logits = linear_probing_forward(x_emb, attn_bias, pool_mask,
                                    enc_params, head_params, NUM_CLASSES)
    logits = jax.block_until_ready(logits)

    assert logits.shape == (B, NUM_CLASSES)
    assert bool(jnp.all(jnp.isfinite(logits)))
    print("KERNEL_OK")
</pallas_src>

<mosaic_0001>
module attributes {stable_mosaic.version = 11 : i64} {
  func.func @encoder_kernel(%arg0: i32, %arg1: i32, %arg2: memref<1x128x128xf32, #tpu.memory_space<vmem>>, %arg3: memref<1x1x128xf32, #tpu.memory_space<vmem>>, %arg4: memref<1x128xf32, #tpu.memory_space<vmem>>, %arg5: memref<1x128x384xbf16, #tpu.memory_space<vmem>>, %arg6: memref<1x1x384xf32, #tpu.memory_space<vmem>>, %arg7: memref<1x128x128xbf16, #tpu.memory_space<vmem>>, %arg8: memref<1x1x128xf32, #tpu.memory_space<vmem>>, %arg9: memref<1x4x128xf32, #tpu.memory_space<vmem>>, %arg10: memref<1x128x256xbf16, #tpu.memory_space<vmem>>, %arg11: memref<1x1x256xf32, #tpu.memory_space<vmem>>, %arg12: memref<1x256x128xbf16, #tpu.memory_space<vmem>>, %arg13: memref<1x1x128xf32, #tpu.memory_space<vmem>>, %arg14: memref<1x1x128xf32, #tpu.memory_space<vmem>>, %arg15: memref<1x128x128xf32, #tpu.memory_space<vmem>>) attributes {dimension_semantics = [#tpu.dimension_semantics<parallel>, #tpu.dimension_semantics<arbitrary>], iteration_bounds = array<i64: 2, 2>, scalar_prefetch = 0 : i64, scratch_operands = 1 : i64, tpu.core_type = #tpu.core_type<tc>, window_params = [{transform_indices = @transform_0, window_bounds = array<i64: 1, 128, 128>}, {transform_indices = @transform_1, window_bounds = array<i64: 1, 1, 128>}, {pipeline_mode = #tpu.pipeline_mode<synchronous>, transform_indices = @transform_2, window_bounds = array<i64: 1, 128>}, {transform_indices = @transform_3, window_bounds = array<i64: 1, 128, 384>}, {transform_indices = @transform_4, window_bounds = array<i64: 1, 1, 384>}, {transform_indices = @transform_5, window_bounds = array<i64: 1, 128, 128>}, {transform_indices = @transform_6, window_bounds = array<i64: 1, 1, 128>}, {transform_indices = @transform_7, window_bounds = array<i64: 1, 4, 128>}, {transform_indices = @transform_8, window_bounds = array<i64: 1, 128, 256>}, {transform_indices = @transform_9, window_bounds = array<i64: 1, 1, 256>}, {transform_indices = @transform_10, window_bounds = array<i64: 1, 256, 128>}, {transform_indices = @transform_11, window_bounds = array<i64: 1, 1, 128>}, {transform_indices = @transform_12, window_bounds = array<i64: 1, 1, 128>}]} {
    %c0_i32 = arith.constant 0 : i32
    %0 = arith.cmpi eq, %arg1, %c0_i32 : i32
    %1 = arith.extui %0 : i1 to i32
    %c0_i32_0 = arith.constant 0 : i32
    %2 = arith.cmpi ne, %1, %c0_i32_0 : i32
    scf.if %2 {
      %c0_58 = arith.constant 0 : index
      %c0_59 = arith.constant 0 : index
      %c0_60 = arith.constant 0 : index
      %133 = vector.load %arg2[%c0_58, %c0_59, %c0_60] : memref<1x128x128xf32, #tpu.memory_space<vmem>>, vector<1x128x128xf32>
      %c0_61 = arith.constant 0 : index
      %c0_62 = arith.constant 0 : index
      %c0_63 = arith.constant 0 : index
      %134 = vector.load %arg15[%c0_61, %c0_62, %c0_63] : memref<1x128x128xf32, #tpu.memory_space<vmem>>, vector<1x128x128xf32>
      tpu.vector_store %arg15[%c0_61, %c0_62, %c0_63], %133 {strides = array<i32>} : memref<1x128x128xf32, #tpu.memory_space<vmem>>, vector<1x128x128xf32>,
    } else {
    }
    %c0 = arith.constant 0 : index
    %c0_1 = arith.constant 0 : index
    %c0_2 = arith.constant 0 : index
    %3 = vector.load %arg15[%c0, %c0_1, %c0_2] : memref<1x128x128xf32, #tpu.memory_space<vmem>>, vector<1x128x128xf32>
    %4 = vector.shape_cast %3 : vector<1x128x128xf32> to vector<128x128xf32>
    %5 = arith.truncf %4 : vector<128x128xf32> to vector<128x128xbf16>
    %c0_3 = arith.constant 0 : index
    %c0_4 = arith.constant 0 : index
    %c0_5 = arith.constant 0 : index
    %6 = vector.load %arg5[%c0_3, %c0_4, %c0_5] : memref<1x128x384xbf16, #tpu.memory_space<vmem>>, vector<1x128x384xbf16>
    %7 = vector.shape_cast %6 : vector<1x128x384xbf16> to vector<128x384xbf16>
    %cst = arith.constant dense<0.000000e+00> : vector<128x384xf32>
    %8 = tpu.matmul %5, %7, %cst {dimension_numbers = #tpu.dot_dimension_numbers<[1], [0], [0], [1], [0, 0, 1, 1], [], []>} : vector<128x128xbf16>, vector<128x384xbf16>, vector<128x384xf32> -> vector<128x384xf32>
    %c0_6 = arith.constant 0 : index
    %c0_7 = arith.constant 0 : index
    %c0_8 = arith.constant 0 : index
    %9 = vector.load %arg6[%c0_6, %c0_7, %c0_8] : memref<1x1x384xf32, #tpu.memory_space<vmem>>, vector<1x1x384xf32>
    %10 = vector.shape_cast %9 : vector<1x1x384xf32> to vector<1x384xf32>
    %11 = vector.broadcast %10 : vector<1x384xf32> to vector<128x384xf32>
    %12 = arith.addf %8, %11 : vector<128x384xf32>
    %13 = vector.extract_strided_slice %12 {offsets = [0, 0], sizes = [128, 128], strides = [1, 1]} : vector<128x384xf32> to vector<128x128xf32>
    %14 = vector.shape_cast %13 : vector<128x128xf32> to vector<1x128x128xf32>
    %15 = arith.truncf %14 : vector<1x128x128xf32> to vector<1x128x128xbf16>
    %16 = vector.extract_strided_slice %12 {offsets = [0, 128], sizes = [128, 128], strides = [1, 1]} : vector<128x384xf32> to vector<128x128xf32>
    %17 = vector.shape_cast %16 : vector<128x128xf32> to vector<1x128x128xf32>
    %18 = arith.truncf %17 : vector<1x128x128xf32> to vector<1x128x128xbf16>
    %19 = vector.extract_strided_slice %12 {offsets = [0, 256], sizes = [128, 128], strides = [1, 1]} : vector<128x384xf32> to vector<128x128xf32>
    %20 = vector.shape_cast %19 : vector<128x128xf32> to vector<1x128x128xf32>
    %21 = arith.truncf %20 : vector<1x128x128xf32> to vector<1x128x128xbf16>
    %c0_9 = arith.constant 0 : index
    %c0_10 = arith.constant 0 : index
    %c0_11 = arith.constant 0 : index
    %22 = vector.load %arg3[%c0_9, %c0_10, %c0_11] : memref<1x1x128xf32, #tpu.memory_space<vmem>>, vector<1x1x128xf32>
    %cst_12 = arith.constant 0xFF800000 : f32
    %23 = vector.broadcast %cst_12 : f32 to vector<1x128x1xf32>
    %cst_13 = arith.constant 0.000000e+00 : f32
    %24 = vector.broadcast %cst_13 : f32 to vector<1x128x1xf32>
    %cst_14 = arith.constant 0.000000e+00 : f32
    %25 = vector.broadcast %cst_14 : f32 to vector<1x128x128xf32>
    %cst_15 = arith.constant dense<0.000000e+00> : vector<1x128x128xf32>
    %26 = tpu.matmul %15, %18, %cst_15 {dimension_numbers = #tpu.dot_dimension_numbers<[2], [2], [1], [1], [0, 0, 0, 1, 1, 1], [0], [0]>} : vector<1x128x128xbf16>, vector<1x128x128xbf16>, vector<1x128x128xf32> -> vector<1x128x128xf32>
    %27 = vector.broadcast %22 : vector<1x1x128xf32> to vector<1x128x128xf32>
    %28 = arith.addf %26, %27 : vector<1x128x128xf32>
    %cst_16 = arith.constant dense<0xFF800000> : vector<1x128xf32>
    %29 = vector.multi_reduction <maximumf>, %28, %cst_16 [2] : vector<1x128x128xf32> to vector<1x128xf32>
    %30 = vector.shape_cast %29 : vector<1x128xf32> to vector<1x128x1xf32>
    %31 = arith.maximumf %23, %30 : vector<1x128x1xf32>
    %32 = arith.subf %23, %31 : vector<1x128x1xf32>
    %33 = math.exp %32 : vector<1x128x1xf32>
    %34 = vector.broadcast %31 : vector<1x128x1xf32> to vector<1x128x128xf32>
    %35 = arith.subf %28, %34 : vector<1x128x128xf32>
    %36 = math.exp %35 : vector<1x128x128xf32>
    %37 = arith.mulf %33, %24 : vector<1x128x1xf32>
    %cst_17 = arith.constant dense<0.000000e+00> : vector<1x128xf32>
    %38 = vector.multi_reduction <add>, %36, %cst_17 [2] : vector<1x128x128xf32> to vector<1x128xf32>
    %39 = vector.shape_cast %38 : vector<1x128xf32> to vector<1x128x1xf32>
    %40 = arith.addf %37, %39 : vector<1x128x1xf32>
    %41 = vector.broadcast %33 : vector<1x128x1xf32> to vector<1x128x128xf32>
    %42 = arith.mulf %41, %25 : vector<1x128x128xf32>
    %43 = arith.truncf %36 : vector<1x128x128xf32> to vector<1x128x128xbf16>
    %cst_18 = arith.constant dense<0.000000e+00> : vector<1x128x128xf32>
    %44 = tpu.matmul %43, %21, %cst_18 {dimension_numbers = #tpu.dot_dimension_numbers<[2], [1], [1], [2], [0, 0, 0, 1, 1, 2], [0], [0]>} : vector<1x128x128xbf16>, vector<1x128x128xbf16>, vector<1x128x128xf32> -> vector<1x128x128xf32>
    %45 = arith.addf %42, %44 : vector<1x128x128xf32>
    %46 = tpu.reciprocal %40 {approx = true} : vector<1x128x1xf32> -> vector<1x128x1xf32>
    %47 = vector.broadcast %46 : vector<1x128x1xf32> to vector<1x128x128xf32>
    %48 = arith.mulf %45, %47 : vector<1x128x128xf32>
    %49 = vector.shape_cast %48 : vector<1x128x128xf32> to vector<128x128xf32>
    %50 = arith.truncf %49 : vector<128x128xf32> to vector<128x128xbf16>
    %c0_19 = arith.constant 0 : index
    %c0_20 = arith.constant 0 : index
    %c0_21 = arith.constant 0 : index
    %51 = vector.load %arg7[%c0_19, %c0_20, %c0_21] : memref<1x128x128xbf16, #tpu.memory_space<vmem>>, vector<1x128x128xbf16>
    %52 = vector.shape_cast %51 : vector<1x128x128xbf16> to vector<128x128xbf16>
    %cst_22 = arith.constant dense<0.000000e+00> : vector<128x128xf32>
    %53 = tpu.matmul %50, %52, %cst_22 {dimension_numbers = #tpu.dot_dimension_numbers<[1], [0], [0], [1], [0, 0, 1, 1], [], []>} : vector<128x128xbf16>, vector<128x128xbf16>, vector<128x128xf32> -> vector<128x128xf32>
    %c0_23 = arith.constant 0 : index
    %c0_24 = arith.constant 0 : index
    %c0_25 = arith.constant 0 : index
    %54 = vector.load %arg8[%c0_23, %c0_24, %c0_25] : memref<1x1x128xf32, #tpu.memory_space<vmem>>, vector<1x1x128xf32>
    %55 = vector.shape_cast %54 : vector<1x1x128xf32> to vector<1x128xf32>
    %56 = vector.broadcast %55 : vector<1x128xf32> to vector<128x128xf32>
    %57 = arith.addf %53, %56 : vector<128x128xf32>
    %c0_26 = arith.constant 0 : index
    %c0_27 = arith.constant 0 : index
    %c0_28 = arith.constant 0 : index
    %58 = vector.load %arg9[%c0_26, %c0_27, %c0_28] : memref<1x4x128xf32, #tpu.memory_space<vmem>>, vector<1x4x128xf32>
    %59 = vector.shape_cast %58 : vector<1x4x128xf32> to vector<4x128xf32>
    %60 = arith.addf %4, %57 : vector<128x128xf32>
    %61 = vector.extract_strided_slice %59 {offsets = [0, 0], sizes = [1, 128], strides = [1, 1]} : vector<4x128xf32> to vector<1x128xf32>
    %62 = vector.extract_strided_slice %59 {offsets = [1, 0], sizes = [1, 128], strides = [1, 1]} : vector<4x128xf32> to vector<1x128xf32>
    %cst_29 = arith.constant dense<0.000000e+00> : vector<128xf32>
    %63 = vector.multi_reduction <add>, %60, %cst_29 [1] : vector<128x128xf32> to vector<128xf32>
    %64 = vector.shape_cast %63 : vector<128xf32> to vector<128x1xf32>
    %cst_30 = arith.constant 1.280000e+02 : f32
    %65 = vector.broadcast %cst_30 : f32 to vector<128x1xf32>
    %66 = arith.divf %64, %65 : vector<128x1xf32>
    %67 = vector.broadcast %66 : vector<128x1xf32> to vector<128x128xf32>
    %68 = arith.subf %60, %67 : vector<128x128xf32>
    %69 = arith.mulf %68, %68 : vector<128x128xf32>
    %cst_31 = arith.constant dense<0.000000e+00> : vector<128xf32>
    %70 = vector.multi_reduction <add>, %69, %cst_31 [1] : vector<128x128xf32> to vector<128xf32>
    %71 = vector.shape_cast %70 : vector<128xf32> to vector<128x1xf32>
    %cst_32 = arith.constant 1.280000e+02 : f32
    %72 = vector.broadcast %cst_32 : f32 to vector<128x1xf32>
    %73 = arith.divf %71, %72 : vector<128x1xf32>
    %74 = vector.broadcast %66 : vector<128x1xf32> to vector<128x128xf32>
    %75 = arith.subf %60, %74 : vector<128x128xf32>
    %cst_33 = arith.constant 9.99999974E-6 : f32
    %76 = vector.broadcast %cst_33 : f32 to vector<128x1xf32>
    %77 = arith.addf %73, %76 : vector<128x1xf32>
    %78 = math.rsqrt %77 : vector<128x1xf32>
    %79 = vector.broadcast %78 : vector<128x1xf32> to vector<128x128xf32>
    %80 = arith.mulf %75, %79 : vector<128x128xf32>
    %81 = vector.broadcast %61 : vector<1x128xf32> to vector<128x128xf32>
    %82 = arith.mulf %80, %81 : vector<128x128xf32>
    %83 = vector.broadcast %62 : vector<1x128xf32> to vector<128x128xf32>
    %84 = arith.addf %82, %83 : vector<128x128xf32>
    %85 = arith.truncf %84 : vector<128x128xf32> to vector<128x128xbf16>
    %c0_34 = arith.constant 0 : index
    %c0_35 = arith.constant 0 : index
    %c0_36 = arith.constant 0 : index
    %86 = vector.load %arg10[%c0_34, %c0_35, %c0_36] : memref<1x128x256xbf16, #tpu.memory_space<vmem>>, vector<1x128x256xbf16>
    %87 = vector.shape_cast %86 : vector<1x128x256xbf16> to vector<128x256xbf16>
    %cst_37 = arith.constant dense<0.000000e+00> : vector<128x256xf32>
    %88 = tpu.matmul %85, %87, %cst_37 {dimension_numbers = #tpu.dot_dimension_numbers<[1], [0], [0], [1], [0, 0, 1, 1], [], []>} : vector<128x128xbf16>, vector<128x256xbf16>, vector<128x256xf32> -> vector<128x256xf32>
    %c0_38 = arith.constant 0 : index
    %c0_39 = arith.constant 0 : index
    %c0_40 = arith.constant 0 : index
    %89 = vector.load %arg11[%c0_38, %c0_39, %c0_40] : memref<1x1x256xf32, #tpu.memory_space<vmem>>, vector<1x1x256xf32>
    %90 = vector.shape_cast %89 : vector<1x1x256xf32> to vector<1x256xf32>
    %91 = vector.broadcast %90 : vector<1x256xf32> to vector<128x256xf32>
    %92 = arith.addf %88, %91 : vector<128x256xf32>
    %cst_41 = arith.constant 0.000000e+00 : f32
    %93 = vector.broadcast %cst_41 : f32 to vector<128x256xf32>
    %94 = arith.maximumf %92, %93 : vector<128x256xf32>
    %95 = arith.truncf %94 : vector<128x256xf32> to vector<128x256xbf16>
    %c0_42 = arith.constant 0 : index
    %c0_43 = arith.constant 0 : index
    %c0_44 = arith.constant 0 : index
    %96 = vector.load %arg12[%c0_42, %c0_43, %c0_44] : memref<1x256x128xbf16, #tpu.memory_space<vmem>>, vector<1x256x128xbf16>
    %97 = vector.shape_cast %96 : vector<1x256x128xbf16> to vector<256x128xbf16>
    %cst_45 = arith.constant dense<0.000000e+00> : vector<128x128xf32>
    %98 = tpu.matmul %95, %97, %cst_45 {dimension_numbers = #tpu.dot_dimension_numbers<[1], [0], [0], [1], [0, 0, 1, 1], [], []>} : vector<128x256xbf16>, vector<256x128xbf16>, vector<128x128xf32> -> vector<128x128xf32>
    %c0_46 = arith.constant 0 : index
    %c0_47 = arith.constant 0 : index
    %c0_48 = arith.constant 0 : index
    %99 = vector.load %arg13[%c0_46, %c0_47, %c0_48] : memref<1x1x128xf32, #tpu.memory_space<vmem>>, vector<1x1x128xf32>
    %100 = vector.shape_cast %99 : vector<1x1x128xf32> to vector<1x128xf32>
    %101 = vector.broadcast %100 : vector<1x128xf32> to vector<128x128xf32>
    %102 = arith.addf %98, %101 : vector<128x128xf32>
    %103 = arith.addf %84, %102 : vector<128x128xf32>
    %104 = vector.extract_strided_slice %59 {offsets = [2, 0], sizes = [1, 128], strides = [1, 1]} : vector<4x128xf32> to vector<1x128xf32>
    %105 = vector.extract_strided_slice %59 {offsets = [3, 0], sizes = [1, 128], strides = [1, 1]} : vector<4x128xf32> to vector<1x128xf32>
    %cst_49 = arith.constant dense<0.000000e+00> : vector<128xf32>
    %106 = vector.multi_reduction <add>, %103, %cst_49 [1] : vector<128x128xf32> to vector<128xf32>
    %107 = vector.shape_cast %106 : vector<128xf32> to vector<128x1xf32>
    %cst_50 = arith.constant 1.280000e+02 : f32
    %108 = vector.broadcast %cst_50 : f32 to vector<128x1xf32>
    %109 = arith.divf %107, %108 : vector<128x1xf32>
    %110 = vector.broadcast %109 : vector<128x1xf32> to vector<128x128xf32>
    %111 = arith.subf %103, %110 : vector<128x128xf32>
    %112 = arith.mulf %111, %111 : vector<128x128xf32>
    %cst_51 = arith.constant dense<0.000000e+00> : vector<128xf32>
    %113 = vector.multi_reduction <add>, %112, %cst_51 [1] : vector<128x128xf32> to vector<128xf32>
    %114 = vector.shape_cast %113 : vector<128xf32> to vector<128x1xf32>
    %cst_52 = arith.constant 1.280000e+02 : f32
    %115 = vector.broadcast %cst_52 : f32 to vector<128x1xf32>
    %116 = arith.divf %114, %115 : vector<128x1xf32>
    %117 = vector.broadcast %109 : vector<128x1xf32> to vector<128x128xf32>
    %118 = arith.subf %103, %117 : vector<128x128xf32>
    %cst_53 = arith.constant 9.99999974E-6 : f32
    %119 = vector.broadcast %cst_53 : f32 to vector<128x1xf32>
    %120 = arith.addf %116, %119 : vector<128x1xf32>
    %121 = math.rsqrt %120 : vector<128x1xf32>
    %122 = vector.broadcast %121 : vector<128x1xf32> to vector<128x128xf32>
    %123 = arith.mulf %118, %122 : vector<128x128xf32>
    %124 = vector.broadcast %104 : vector<1x128xf32> to vector<128x128xf32>
    %125 = arith.mulf %123, %124 : vector<128x128xf32>
    %126 = vector.broadcast %105 : vector<1x128xf32> to vector<128x128xf32>
    %127 = arith.addf %125, %126 : vector<128x128xf32>
    %128 = vector.shape_cast %127 : vector<128x128xf32> to vector<1x128x128xf32>
    %c0_54 = arith.constant 0 : index
    %c0_55 = arith.constant 0 : index
    %c0_56 = arith.constant 0 : index
    %129 = vector.load %arg15[%c0_54, %c0_55, %c0_56] : memref<1x128x128xf32, #tpu.memory_space<vmem>>, vector<1x128x128xf32>
    tpu.vector_store %arg15[%c0_54, %c0_55, %c0_56], %128 {strides = array<i32>} : memref<1x128x128xf32, #tpu.memory_space<vmem>>, vector<1x128x128xf32>,
    %c1_i32 = arith.constant 1 : i32
    %130 = arith.cmpi eq, %arg1, %c1_i32 : i32
    %131 = arith.extui %130 : i1 to i32
    %c0_i32_57 = arith.constant 0 : i32
    %132 = arith.cmpi ne, %131, %c0_i32_57 : i32
    scf.if %132 {
      %c0_58 = arith.constant 0 : index
      %c0_59 = arith.constant 0 : index
      %133 = vector.load %arg4[%c0_58, %c0_59] : memref<1x128xf32, #tpu.memory_space<vmem>>, vector<1x128xf32>
      %134 = vector.shape_cast %133 : vector<1x128xf32> to vector<1x128x1xf32>
      %cst_60 = arith.constant 5.000000e-01 : f32
      %135 = vector.broadcast %cst_60 : f32 to vector<1x128x1xf32>
      %136 = arith.cmpf ogt, %134, %135 : vector<1x128x1xf32>
      %cst_61 = arith.constant -1.000000e+30 : f32
      %137 = vector.shape_cast %136 : vector<1x128x1xi1> to vector<1x128x1xi1>
      %138 = vector.broadcast %137 : vector<1x128x1xi1> to vector<1x128x128xi1>
      %139 = vector.broadcast %cst_61 : f32 to vector<1x128x128xf32>
      %140 = arith.select %138, %128, %139 : vector<1x128x128xi1>, vector<1x128x128xf32>
      %cst_62 = arith.constant dense<0xFF800000> : vector<1x128xf32>
      %141 = vector.multi_reduction <maximumf>, %140, %cst_62 [1] : vector<1x128x128xf32> to vector<1x128xf32>
      %142 = vector.shape_cast %141 : vector<1x128xf32> to vector<1x1x128xf32>
      %c0_63 = arith.constant 0 : index
      %c0_64 = arith.constant 0 : index
      %c0_65 = arith.constant 0 : index
      %143 = vector.load %arg14[%c0_63, %c0_64, %c0_65] : memref<1x1x128xf32, #tpu.memory_space<vmem>>, vector<1x1x128xf32>
      tpu.vector_store %arg14[%c0_63, %c0_64, %c0_65], %142 {strides = array<i32>} : memref<1x1x128xf32, #tpu.memory_space<vmem>>, vector<1x1x128xf32>,
    } else {
    }
    return
  }
  func.func @transform_0(%arg0: i32, %arg1: i32) -> (i32, i32, i32) {
    %c0_i32 = arith.constant 0 : i32
    %c0_i32_0 = arith.constant 0 : i32
    %c0_i32_1 = arith.constant 0 : i32
    return %arg0, %c0_i32, %c0_i32_0 : i32, i32, i32
  }
  func.func @transform_1(%arg0: i32, %arg1: i32) -> (i32, i32, i32) {
    %c0_i32 = arith.constant 0 : i32
    %c0_i32_0 = arith.constant 0 : i32
    %c0_i32_1 = arith.constant 0 : i32
    return %arg0, %c0_i32, %c0_i32_0 : i32, i32, i32
  }
  func.func @transform_2(%arg0: i32, %arg1: i32) -> (i32, i32) {
    %c0_i32 = arith.constant 0 : i32
    %c0_i32_0 = arith.constant 0 : i32
    %c0_i32_1 = arith.constant 0 : i32
    return %c0_i32, %c0_i32_0 : i32, i32
  }
  func.func @transform_3(%arg0: i32, %arg1: i32) -> (i32, i32, i32) {
    %c0_i32 = arith.constant 0 : i32
    %c0_i32_0 = arith.constant 0 : i32
    %c0_i32_1 = arith.constant 0 : i32
    return %arg1, %c0_i32, %c0_i32_0 : i32, i32, i32
  }
  func.func @transform_4(%arg0: i32, %arg1: i32) -> (i32, i32, i32) {
    %c0_i32 = arith.constant 0 : i32
    %c0_i32_0 = arith.constant 0 : i32
    %c0_i32_1 = arith.constant 0 : i32
    return %arg1, %c0_i32, %c0_i32_0 : i32, i32, i32
  }
  func.func @transform_5(%arg0: i32, %arg1: i32) -> (i32, i32, i32) {
    %c0_i32 = arith.constant 0 : i32
    %c0_i32_0 = arith.constant 0 : i32
    %c0_i32_1 = arith.constant 0 : i32
    return %arg1, %c0_i32, %c0_i32_0 : i32, i32, i32
  }
  func.func @transform_6(%arg0: i32, %arg1: i32) -> (i32, i32, i32) {
    %c0_i32 = arith.constant 0 : i32
    %c0_i32_0 = arith.constant 0 : i32
    %c0_i32_1 = arith.constant 0 : i32
    return %arg1, %c0_i32, %c0_i32_0 : i32, i32, i32
  }
  func.func @transform_7(%arg0: i32, %arg1: i32) -> (i32, i32, i32) {
    %c0_i32 = arith.constant 0 : i32
    %c0_i32_0 = arith.constant 0 : i32
    %c0_i32_1 = arith.constant 0 : i32
    return %arg1, %c0_i32, %c0_i32_0 : i32, i32, i32
  }
  func.func @transform_8(%arg0: i32, %arg1: i32) -> (i32, i32, i32) {
    %c0_i32 = arith.constant 0 : i32
    %c0_i32_0 = arith.constant 0 : i32
    %c0_i32_1 = arith.constant 0 : i32
    return %arg1, %c0_i32, %c0_i32_0 : i32, i32, i32
  }
  func.func @transform_9(%arg0: i32, %arg1: i32) -> (i32, i32, i32) {
    %c0_i32 = arith.constant 0 : i32
    %c0_i32_0 = arith.constant 0 : i32
    %c0_i32_1 = arith.constant 0 : i32
    return %arg1, %c0_i32, %c0_i32_0 : i32, i32, i32
  }
  func.func @transform_10(%arg0: i32, %arg1: i32) -> (i32, i32, i32) {
    %c0_i32 = arith.constant 0 : i32
    %c0_i32_0 = arith.constant 0 : i32
    %c0_i32_1 = arith.constant 0 : i32
    return %arg1, %c0_i32, %c0_i32_0 : i32, i32, i32
  }
  func.func @transform_11(%arg0: i32, %arg1: i32) -> (i32, i32, i32) {
    %c0_i32 = arith.constant 0 : i32
    %c0_i32_0 = arith.constant 0 : i32
    %c0_i32_1 = arith.constant 0 : i32
    return %arg1, %c0_i32, %c0_i32_0 : i32, i32, i32
  }
  func.func @transform_12(%arg0: i32, %arg1: i32) -> (i32, i32, i32) {
    %c0_i32 = arith.constant 0 : i32
    %c0_i32_0 = arith.constant 0 : i32
    %c0_i32_1 = arith.constant 0 : i32
    return %arg0, %c0_i32, %c0_i32_0 : i32, i32, i32
  }
}

</mosaic_0001>

<llo_original>
// kernel: tpu_custom_call.1
$region0: #{tpu_custom_call.1}
  #allocation0 [shape = 'u32[]', space=smem, size = 0x4, offset = 0x4, fixed_abs, tag = 'smem constant byte address 0x4 - core index']
  #allocation1 [shape = 'u32[144,128]{1,0:T(1,128)}', space=vmem, size = 0x12000, scoped, tag = 'internal scratch']
  #allocation2 [shape = 'f32[1,128,128]{2,1,0:T(8,128)}', space=vmem, size = 0x10000, scoped, tag = 'scratch operand']
  %s0 = inlined_call_operand.hbm [shape: f32[2,128,128], index: 0, kind: input, shape index: {}]
  %s1 = inlined_call_operand.hbm [shape: f32[2,1,128], index: 1, kind: input, shape index: {}]
  %s2 = inlined_call_operand.hbm [shape: f32[1,128], index: 2, kind: input, shape index: {}]
  %s3 = inlined_call_operand.hbm [shape: bf16[2,128,384], index: 3, kind: input, shape index: {}]
  %s4 = inlined_call_operand.vmem [shape: f32[2,1,384], index: 4, kind: input, shape index: {}]
  %s5 = inlined_call_operand.hbm [shape: bf16[2,128,128], index: 5, kind: input, shape index: {}]
  %s6 = inlined_call_operand.vmem [shape: f32[2,1,128], index: 6, kind: input, shape index: {}]
  %s7 = inlined_call_operand.vmem [shape: f32[2,4,128], index: 7, kind: input, shape index: {}]
  %s8 = inlined_call_operand.hbm [shape: bf16[2,128,256], index: 8, kind: input, shape index: {}]
  %s9 = inlined_call_operand.vmem [shape: f32[2,1,256], index: 9, kind: input, shape index: {}]
  %s10 = inlined_call_operand.hbm [shape: bf16[2,256,128], index: 10, kind: input, shape index: {}]
  %s11 = inlined_call_operand.vmem [shape: f32[2,1,128], index: 11, kind: input, shape index: {}]
  %s12 = inlined_call_operand.hbm [shape: f32[2,1,128], index: 12, kind: output, shape index: {}]
  %s13 = sld [smem:[#allocation0]]
  $region117: #{tpu_custom_call.1} parent=0
    _
  %s15 = ssub.s32 1, %s13
  %s16 = scalar_select 0, %s15, %s13
  $region1: #{tpu_custom_call.1} parent=0
    #allocation3 [shape = 'u8[131072]{0}', space=vmem, size = 0x20000, scoped, tag = 'input window, operand 0']
    #allocation4 [shape = 's32[2]{0}', space=sflag, size = 0x8, scoped, tag = 'scoped memory for tpu_custom_call.1']
    #allocation5 [shape = 's32[2]{0}', space=sflag, size = 0x8, scoped, tag = 'scoped memory for tpu_custom_call.1']
    #allocation6 [shape = 'u8[1024]{0}', space=vmem, size = 0x400, scoped, tag = 'input window, operand 1']
    #allocation7 [shape = 's32[2]{0}', space=sflag, size = 0x8, scoped, tag = 'scoped memory for tpu_custom_call.1']
    #allocation8 [shape = 'u8[512]{0}', space=vmem, size = 0x400, scoped, tag = 'input window, operand 2, single buffered']
    #allocation9 [shape = 'u8[196608]{0}', space=vmem, size = 0x30000, scoped, tag = 'input window, operand 3']
    #allocation10 [shape = 's32[2]{0}', space=sflag, size = 0x8, scoped, tag = 'scoped memory for tpu_custom_call.1']
    #allocation11 [shape = 'u8[65536]{0}', space=vmem, size = 0x10000, scoped, tag = 'input window, operand 5']
    #allocation12 [shape = 'u8[131072]{0}', space=vmem, size = 0x20000, scoped, tag = 'input window, operand 8']
    #allocation13 [shape = 's32[2]{0}', space=sflag, size = 0x8, scoped, tag = 'scoped memory for tpu_custom_call.1']
    #allocation14 [shape = 'u8[131072]{0}', space=vmem, size = 0x20000, scoped, tag = 'input window, operand 10']
    #allocation15 [shape = 'u8[1024]{0}', space=vmem, size = 0x400, scoped, tag = 'output window, operand 0']
    %17 = vsyncpa [#allocation4], 0
    %s18 = scalar_lea.sflag [#allocation4], 1
    %19 = vsyncpa %s18, 0
    %20 = vsyncpa [#allocation7], 0
    %s21 = scalar_lea.sflag [#allocation7], 1
    %22 = vsyncpa %s21, 0
    %23 = vsyncpa [#allocation10], 0
    %s24 = scalar_lea.sflag [#allocation10], 1
    %25 = vsyncpa %s24, 0
    %26 = vsyncpa [#allocation13], 0
    %s27 = scalar_lea.sflag [#allocation13], 1
    %28 = vsyncpa %s27, 0
    %29 = vsyncpa [#allocation5], 0
    %s30 = scalar_lea.sflag [#allocation5], 1
    %31 = vsyncpa %s30, 0
    loop: start=0, step=1, limit=6
    $region2: #{tpu_custom_call.1} parent=1 // loop_pre_header
      _
    $region3: #{tpu_custom_call.1} parent=1 // loop_header
      %s33 = sphi 0, %s37
      %p34 = scmp.ge.s32.totalorder %s33, 6
      %s40 = sphi 0, %s52
      %s41 = sphi 0, %s48
      %s42 = sphi 0, %s40
      %s43 = sphi 0, %s41
      %s44 = sphi 0, %s42
      %s45 = sphi 0, %s43
      %s55 = sphi 0, %s57
      %s58 = sphi 0, %s55
      %s59 = sphi 0, %s58
      %s75 = sphi 0, %s59
      %s81 = sphi 0, %s83
      %s84 = sphi 0, %s81
      %s85 = sphi 0, %s84
      %s101 = sphi 0, %s85
      %s105 = sphi 0, %s105
      %s107 = sphi 0, %s105
      %s108 = sphi 0, %s107
      %s122 = sphi 0, %s108
      %s128 = sphi 0, %s130
      %s131 = sphi 0, %s128
      %s132 = sphi 0, %s131
      %s148 = sphi 0, %s132
      %s154 = sphi 0, %s156
      %s157 = sphi 0, %s154
      %s158 = sphi 0, %s157
      %s174 = sphi 0, %s158
      %s180 = sphi 0, %s182
      %s183 = sphi 0, %s180
      %s184 = sphi 0, %s183
      %s200 = sphi 0, %s184
      %s206 = sphi 0, %s208
      %s209 = sphi 0, %s206
      %s210 = sphi 0, %s209
      %s226 = sphi 0, %s210
      %s232 = sphi 0, %s234
      %s235 = sphi 0, %s232
      %s236 = sphi 0, %s235
      %s252 = sphi 0, %s236
      %s258 = sphi 0, %s260
      %s261 = sphi 0, %s258
      %s262 = sphi 0, %s261
      %s278 = sphi 0, %s262
      %s284 = sphi 0, %s286
      %s287 = sphi 0, %s284
      %s288 = sphi 0, %s287
      %s304 = sphi 0, %s288
      %s310 = sphi 0, %s312
      %s313 = sphi 0, %s310
      %s314 = sphi 0, %s313
      %s330 = sphi 0, %s314
      %s336 = sphi 0, %s338
      %s339 = sphi 0, %s336
      %s340 = sphi 0, %s339
      %s356 = sphi 0, %s340
      %s362 = sphi 0, %s364
      %s365 = sphi 0, %s362
      %s366 = sphi 0, %s365
      %s382 = sphi 0, %s366
    $region4: #{tpu_custom_call.1} parent=1 // loop_header_branch
      %36 = sbr.rel (%p34) target = $region8
    $region5: #{tpu_custom_call.1} parent=1 // loop_body
      %s38 = ssub.s32 %s33, 1
      %s39 = ssub.s32 %s33, 2
      %s46 = sadd.s32 1, %s41
      %p47 = scmp.ge.s32.totalorder %s46, 2
      %s48 = scalar_select %p47, 0, %s46
      %s49 = sadd.s32 1, %s40
      %s50 = scalar_select %p47, %s49, %s40
      %p51 = scmp.ge.s32.totalorder %s50, 2
      %s52 = scalar_select %p51, 0, %s50
      %s53 = ssub.s32 %s40, %s52
      %p54 = scmp.eq.s32.totalorder %s53, 0
      %s56 = sadd.s32 %s55, 1
      %s57 = scalar_select %p54, %s55, %s56
      %p60 = pneg %p54
      %p61 = scmp.eq.s32.totalorder %s33, 3
      %p62 = por %p60, %p61
      %p63 = scmp.ne.s32.totalorder %s55, %s58
      %p64 = scmp.eq.s32.totalorder %s33, 0
      %p65 = por %p63, %p64
      %p66 = scmp.ne.s32.totalorder %s55, %s58
      %p67 = scmp.eq.s32.totalorder %s38, 3
      %p68 = por %p66, %p67
      %p69 = scmp.ne.s32.totalorder %s58, %s59
      %p70 = scmp.eq.s32.totalorder %s38, 0
      %p71 = por %p69, %p70
      %p72 = scmp.ne.s32.totalorder %s58, %s59
      %p73 = scmp.eq.s32.totalorder %s39, 3
      %p74 = por %p72, %p73
      %p76 = scmp.ne.s32.totalorder %s59, %s75
      %p77 = scmp.eq.s32.totalorder %s39, 0
      %p78 = por %p76, %p77
      %s79 = ssub.s32 %s40, %s52
      %p80 = scmp.eq.s32.totalorder %s79, 0
      %s82 = sadd.s32 %s81, 1
      %s83 = scalar_select %p80, %s81, %s82
      %p86 = pneg %p80
      %p87 = scmp.eq.s32.totalorder %s33, 3
      %p88 = por %p86, %p87
      %p89 = scmp.ne.s32.totalorder %s81, %s84
      %p90 = scmp.eq.s32.totalorder %s33, 0
      %p91 = por %p89, %p90
      %p92 = scmp.ne.s32.totalorder %s81, %s84
      %p93 = scmp.eq.s32.totalorder %s38, 3
      %p94 = por %p92, %p93
      %p95 = scmp.ne.s32.totalorder %s84, %s85
      %p96 = scmp.eq.s32.totalorder %s38, 0
      %p97 = por %p95, %p96
      %p98 = scmp.ne.s32.totalorder %s84, %s85
      %p99 = scmp.eq.s32.totalorder %s39, 3
      %p100 = por %p98, %p99
      %p102 = scmp.ne.s32.totalorder %s85, %s101
      %p103 = scmp.eq.s32.totalorder %s39, 0
      %p104 = por %p102, %p103
      %s106 = sadd.s32 %s105, 1
      %p109 = scmp.eq.s32.totalorder %s33, 3
      %p110 = scmp.ne.s32.totalorder %s105, %s107
      %p111 = scmp.eq.s32.totalorder %s33, 0
      %p112 = por %p110, %p111
      %p113 = scmp.ne.s32.totalorder %s105, %s107
      %p114 = scmp.eq.s32.totalorder %s38, 3
      %p115 = por %p113, %p114
      %p116 = scmp.ne.s32.totalorder %s107, %s108
      %p117 = scmp.eq.s32.totalorder %s38, 0
      %p118 = por %p116, %p117
      %p119 = scmp.ne.s32.totalorder %s107, %s108
      %p120 = scmp.eq.s32.totalorder %s39, 3
      %p121 = por %p119, %p120
      %p123 = scmp.ne.s32.totalorder %s108, %s122
      %p124 = scmp.eq.s32.totalorder %s39, 0
      %p125 = por %p123, %p124
      %s126 = ssub.s32 %s41, %s48
      %p127 = scmp.eq.s32.totalorder %s126, 0
      %s129 = sadd.s32 %s128, 1
      %s130 = scalar_select %p127, %s128, %s129
      %p133 = pneg %p127
      %p134 = scmp.eq.s32.totalorder %s33, 3
      %p135 = por %p133, %p134
      %p136 = scmp.ne.s32.totalorder %s128, %s131
      %p137 = scmp.eq.s32.totalorder %s33, 0
      %p138 = por %p136, %p137
      %p139 = scmp.ne.s32.totalorder %s128, %s131
      %p140 = scmp.eq.s32.totalorder %s38, 3
      %p141 = por %p139, %p140
      %p142 = scmp.ne.s32.totalorder %s131, %s132
      %p143 = scmp.eq.s32.totalorder %s38, 0
      %p144 = por %p142, %p143
      %p145 = scmp.ne.s32.totalorder %s131, %s132
      %p146 = scmp.eq.s32.totalorder %s39, 3
      %p147 = por %p145, %p146
      %p149 = scmp.ne.s32.totalorder %s132, %s148
      %p150 = scmp.eq.s32.totalorder %s39, 0
      %p151 = por %p149, %p150
      %s152 = ssub.s32 %s41, %s48
      %p153 = scmp.eq.s32.totalorder %s152, 0
      %s155 = sadd.s32 %s154, 1
      %s156 = scalar_select %p153, %s154, %s155
      %p159 = pneg %p153
      %p160 = scmp.eq.s32.totalorder %s33, 3
      %p161 = por %p159, %p160
      %p162 = scmp.ne.s32.totalorder %s154, %s157
      %p163 = scmp.eq.s32.totalorder %s33, 0
      %p164 = por %p162, %p163
      %p165 = scmp.ne.s32.totalorder %s154, %s157
      %p166 = scmp.eq.s32.totalorder %s38, 3
      %p167 = por %p165, %p166
      %p168 = scmp.ne.s32.totalorder %s157, %s158
      %p169 = scmp.eq.s32.totalorder %s38, 0
      %p170 = por %p168, %p169
      %p171 = scmp.ne.s32.totalorder %s157, %s158
      %p172 = scmp.eq.s32.totalorder %s39, 3
      %p173 = por %p171, %p172
      %p175 = scmp.ne.s32.totalorder %s158, %s174
      %p176 = scmp.eq.s32.totalorder %s39, 0
      %p177 = por %p175, %p176
      %s178 = ssub.s32 %s41, %s48
      %p179 = scmp.eq.s32.totalorder %s178, 0
      %s181 = sadd.s32 %s180, 1
      %s182 = scalar_select %p179, %s180, %s181
      %p185 = pneg %p179
      %p186 = scmp.eq.s32.totalorder %s33, 3
      %p187 = por %p185, %p186
      %p188 = scmp.ne.s32.totalorder %s180, %s183
      %p189 = scmp.eq.s32.totalorder %s33, 0
      %p190 = por %p188, %p189
      %p191 = scmp.ne.s32.totalorder %s180, %s183
      %p192 = scmp.eq.s32.totalorder %s38, 3
      %p193 = por %p191, %p192
      %p194 = scmp.ne.s32.totalorder %s183, %s184
      %p195 = scmp.eq.s32.totalorder %s38, 0
      %p196 = por %p194, %p195
      %p197 = scmp.ne.s32.totalorder %s183, %s184
      %p198 = scmp.eq.s32.totalorder %s39, 3
      %p199 = por %p197, %p198
      %p201 = scmp.ne.s32.totalorder %s184, %s200
      %p202 = scmp.eq.s32.totalorder %s39, 0
      %p203 = por %p201, %p202
      %s204 = ssub.s32 %s41, %s48
      %p205 = scmp.eq.s32.totalorder %s204, 0
      %s207 = sadd.s32 %s206, 1
      %s208 = scalar_select %p205, %s206, %s207
      %p211 = pneg %p205
      %p212 = scmp.eq.s32.totalorder %s33, 3
      %p213 = por %p211, %p212
      %p214 = scmp.ne.s32.totalorder %s206, %s209
      %p215 = scmp.eq.s32.totalorder %s33, 0
      %p216 = por %p214, %p215
      %p217 = scmp.ne.s32.totalorder %s206, %s209
      %p218 = scmp.eq.s32.totalorder %s38, 3
      %p219 = por %p217, %p218
      %p220 = scmp.ne.s32.totalorder %s209, %s210
      %p221 = scmp.eq.s32.totalorder %s38, 0
      %p222 = por %p220, %p221
      %p223 = scmp.ne.s32.totalorder %s209, %s210
      %p224 = scmp.eq.s32.totalorder %s39, 3
      %p225 = por %p223, %p224
      %p227 = scmp.ne.s32.totalorder %s210, %s226
      %p228 = scmp.eq.s32.totalorder %s39, 0
      %p229 = por %p227, %p228
      %s230 = ssub.s32 %s41, %s48
      %p231 = scmp.eq.s32.totalorder %s230, 0
      %s233 = sadd.s32 %s232, 1
      %s234 = scalar_select %p231, %s232, %s233
      %p237 = pneg %p231
      %p238 = scmp.eq.s32.totalorder %s33, 3
      %p239 = por %p237, %p238
      %p240 = scmp.ne.s32.totalorder %s232, %s235
      %p241 = scmp.eq.s32.totalorder %s33, 0
      %p242 = por %p240, %p241
      %p243 = scmp.ne.s32.totalorder %s232, %s235
      %p244 = scmp.eq.s32.totalorder %s38, 3
      %p245 = por %p243, %p244
      %p246 = scmp.ne.s32.totalorder %s235, %s236
      %p247 = scmp.eq.s32.totalorder %s38, 0
      %p248 = por %p246, %p247
      %p249 = scmp.ne.s32.totalorder %s235, %s236
      %p250 = scmp.eq.s32.totalorder %s39, 3
      %p251 = por %p249, %p250
      %p253 = scmp.ne.s32.totalorder %s236, %s252
      %p254 = scmp.eq.s32.totalorder %s39, 0
      %p255 = por %p253, %p254
      %s256 = ssub.s32 %s41, %s48
      %p257 = scmp.eq.s32.totalorder %s256, 0
      %s259 = sadd.s32 %s258, 1
      %s260 = scalar_select %p257, %s258, %s259
      %p263 = pneg %p257
      %p264 = scmp.eq.s32.totalorder %s33, 3
      %p265 = por %p263, %p264
      %p266 = scmp.ne.s32.totalorder %s258, %s261
      %p267 = scmp.eq.s32.totalorder %s33, 0
      %p268 = por %p266, %p267
      %p269 = scmp.ne.s32.totalorder %s258, %s261
      %p270 = scmp.eq.s32.totalorder %s38, 3
      %p271 = por %p269, %p270
      %p272 = scmp.ne.s32.totalorder %s261, %s262
      %p273 = scmp.eq.s32.totalorder %s38, 0
      %p274 = por %p272, %p273
      %p275 = scmp.ne.s32.totalorder %s261, %s262
      %p276 = scmp.eq.s32.totalorder %s39, 3
      %p277 = por %p275, %p276
      %p279 = scmp.ne.s32.totalorder %s262, %s278
      %p280 = scmp.eq.s32.totalorder %s39, 0
      %p281 = por %p279, %p280
      %s282 = ssub.s32 %s41, %s48
      %p283 = scmp.eq.s32.totalorder %s282, 0
      %s285 = sadd.s32 %s284, 1
      %s286 = scalar_select %p283, %s284, %s285
      %p289 = pneg %p283
      %p290 = scmp.eq.s32.totalorder %s33, 3
      %p291 = por %p289, %p290
      %p292 = scmp.ne.s32.totalorder %s284, %s287
      %p293 = scmp.eq.s32.totalorder %s33, 0
      %p294 = por %p292, %p293
      %p295 = scmp.ne.s32.totalorder %s284, %s287
      %p296 = scmp.eq.s32.totalorder %s38, 3
      %p297 = por %p295, %p296
      %p298 = scmp.ne.s32.totalorder %s287, %s288
      %p299 = scmp.eq.s32.totalorder %s38, 0
      %p300 = por %p298, %p299
      %p301 = scmp.ne.s32.totalorder %s287, %s288
      %p302 = scmp.eq.s32.totalorder %s39, 3
      %p303 = por %p301, %p302
      %p305 = scmp.ne.s32.totalorder %s288, %s304
      %p306 = scmp.eq.s32.totalorder %s39, 0
      %p307 = por %p305, %p306
      %s308 = ssub.s32 %s41, %s48
      %p309 = scmp.eq.s32.totalorder %s308, 0
      %s311 = sadd.s32 %s310, 1
      %s312 = scalar_select %p309, %s310, %s311
      %p315 = pneg %p309
      %p316 = scmp.eq.s32.totalorder %s33, 3
      %p317 = por %p315, %p316
      %p318 = scmp.ne.s32.totalorder %s310, %s313
      %p319 = scmp.eq.s32.totalorder %s33, 0
      %p320 = por %p318, %p319
      %p321 = scmp.ne.s32.totalorder %s310, %s313
      %p322 = scmp.eq.s32.totalorder %s38, 3
      %p323 = por %p321, %p322
      %p324 = scmp.ne.s32.totalorder %s313, %s314
      %p325 = scmp.eq.s32.totalorder %s38, 0
      %p326 = por %p324, %p325
      %p327 = scmp.ne.s32.totalorder %s313, %s314
      %p328 = scmp.eq.s32.totalorder %s39, 3
      %p329 = por %p327, %p328
      %p331 = scmp.ne.s32.totalorder %s314, %s330
      %p332 = scmp.eq.s32.totalorder %s39, 0
      %p333 = por %p331, %p332
      %s334 = ssub.s32 %s41, %s48
      %p335 = scmp.eq.s32.totalorder %s334, 0
      %s337 = sadd.s32 %s336, 1
      %s338 = scalar_select %p335, %s336, %s337
      %p341 = pneg %p335
      %p342 = scmp.eq.s32.totalorder %s33, 3
      %p343 = por %p341, %p342
      %p344 = scmp.ne.s32.totalorder %s336, %s339
      %p345 = scmp.eq.s32.totalorder %s33, 0
      %p346 = por %p344, %p345
      %p347 = scmp.ne.s32.totalorder %s336, %s339
      %p348 = scmp.eq.s32.totalorder %s38, 3
      %p349 = por %p347, %p348
      %p350 = scmp.ne.s32.totalorder %s339, %s340
      %p351 = scmp.eq.s32.totalorder %s38, 0
      %p352 = por %p350, %p351
      %p353 = scmp.ne.s32.totalorder %s339, %s340
      %p354 = scmp.eq.s32.totalorder %s39, 3
      %p355 = por %p353, %p354
      %p357 = scmp.ne.s32.totalorder %s340, %s356
      %p358 = scmp.eq.s32.totalorder %s39, 0
      %p359 = por %p357, %p358
      %s360 = ssub.s32 %s40, %s52
      %p361 = scmp.eq.s32.totalorder %s360, 0
      %s363 = sadd.s32 %s362, 1
      %s364 = scalar_select %p361, %s362, %s363
      %p367 = pneg %p361
      %p368 = scmp.eq.s32.totalorder %s33, 3
      %p369 = por %p367, %p368
      %p370 = scmp.ne.s32.totalorder %s362, %s365
      %p371 = scmp.eq.s32.totalorder %s33, 0
      %p372 = por %p370, %p371
      %p373 = scmp.ne.s32.totalorder %s362, %s365
      %p374 = scmp.eq.s32.totalorder %s38, 3
      %p375 = por %p373, %p374
      %p376 = scmp.ne.s32.totalorder %s365, %s366
      %p377 = scmp.eq.s32.totalorder %s38, 0
      %p378 = por %p376, %p377
      %p379 = scmp.ne.s32.totalorder %s365, %s366
      %p380 = scmp.eq.s32.totalorder %s39, 3
      %p381 = por %p379, %p380
      %p383 = scmp.ne.s32.totalorder %s366, %s382
      %p384 = scmp.eq.s32.totalorder %s39, 0
      %p385 = por %p383, %p384
      %p386 = scmp.le.s32.totalorder 1, %s33
      %p387 = scmp.lt.s32.totalorder %s33, 5
      %p388 = pnand %p386, %p387
      %p389 = pneg %p388
      // Predicated region
      $region9: #{tpu_custom_call.1} parent=5 // pred_check
        _
      $region10: #{tpu_custom_call.1} parent=5 // pred_check_branch
        %391 = sbr.rel (%p388) target = $region12
      $region11: #{tpu_custom_call.1} parent=5 // pred_region
        %s392 = ssub.s32 %s33, 1
        // Predicated region
        $region13: #{tpu_custom_call.1} parent=11 // pred_check
          %p393 = pneg %p118
        $region14: #{tpu_custom_call.1} parent=11 // pred_check_branch
          %395 = sbr.rel (%p393) target = $region16
        $region15: #{tpu_custom_call.1} parent=11 // pred_region
          %s397 = ssub.s32 16, 16
          %398 = vsyncadd [#allocation7], %s397
          %s400 = sshll.u32 [#allocation8], 4
          %s401 = int_to_ptr.vmem [resolvable:$true] %s400
          %403 = dma.hbm_to_vmem [thread:$0]  %s2, 16, %s401, [#allocation7]
        $region16: #{tpu_custom_call.1} parent=11 // pred_fallthru
          _
      $region12: #{tpu_custom_call.1} parent=5 // pred_fallthru
        _
      %p404 = scmp.lt.s32.totalorder %s33, 4
      // Predicated region
      $region17: #{tpu_custom_call.1} parent=5 // pred_check
        %p405 = pneg %p404
      $region18: #{tpu_custom_call.1} parent=5 // pred_check_branch
        %407 = sbr.rel (%p405) target = $region20
      $region19: #{tpu_custom_call.1} parent=5 // pred_region
        // Predicated region
        $region21: #{tpu_custom_call.1} parent=19 // pred_check
          %p408 = pneg %p65
        $region22: #{tpu_custom_call.1} parent=19 // pred_check_branch
          %410 = sbr.rel (%p408) target = $region24
        $region23: #{tpu_custom_call.1} parent=19 // pred_region
          %s411 = sand.u32 %s55, 1
          %s412 = scalar_lea.sflag [#allocation4], %s411
          %s413 = sand.u32 %s55, 1
          %s414 = smul.addr %s413, 128
          %s415 = scalar_lea.vmem [#allocation3], %s414
          %s417 = ssub.s32 2048, 2048
          %418 = vsyncadd %s412, %s417
          %s419 = smul.addr %s40, 16
          %s420 = smul.addr %s419, 128
          %s421 = scalar_lea.hbm %s0, %s420
          %s422 = sshll.u32 %s415, 4
          %s423 = int_to_ptr.vmem [resolvable:$true] %s422
          %428 = dma.hbm_to_vmem [thread:$0]  %s421, 2048, %s423, %s412, 128, 128, 8
        $region24: #{tpu_custom_call.1} parent=19 // pred_fallthru
          _
        // Predicated region
        $region25: #{tpu_custom_call.1} parent=19 // pred_check
          %p429 = pneg %p91
        $region26: #{tpu_custom_call.1} parent=19 // pred_check_branch
          %431 = sbr.rel (%p429) target = $region28
        $region27: #{tpu_custom_call.1} parent=19 // pred_region
          %s432 = sand.u32 %s33, 1
          %s433 = scalar_lea.sflag [#allocation7], %s432
          %s434 = sand.u32 %s81, 1
          %s435 = scalar_lea.vmem [#allocation6], %s434
          %s437 = ssub.s32 16, 16
          %438 = vsyncadd %s433, %s437
          %s439 = smul.addr %s40, 16
          %s440 = scalar_lea.hbm %s1, %s439
          %s442 = sshll.u32 %s435, 4
          %s443 = int_to_ptr.vmem [resolvable:$true] %s442
          %445 = dma.hbm_to_vmem [thread:$0]  %s440, 16, %s443, %s433
        $region28: #{tpu_custom_call.1} parent=19 // pred_fallthru
          _
        // Predicated region
        $region29: #{tpu_custom_call.1} parent=19 // pred_check
          %p446 = pneg %p138
        $region30: #{tpu_custom_call.1} parent=19 // pred_check_branch
          %448 = sbr.rel (%p446) target = $region32
        $region31: #{tpu_custom_call.1} parent=19 // pred_region
          %s449 = sand.u32 %s33, 1
          %s450 = scalar_lea.sflag [#allocation10], %s449
          %s451 = sand.u32 %s128, 1
          %s452 = smul.addr %s451, 192
          %s453 = scalar_lea.vmem [#allocation9], %s452
          %s455 = ssub.s32 3072, 3072
          %456 = vsyncadd %s450, %s455
          %s457 = smul.addr %s41, 48
          %s458 = smul.addr %s457, 64
          %s459 = scalar_lea.hbm %s3, %s458
          %s460 = sshll.u32 %s453, 4
          %s461 = int_to_ptr.vmem [resolvable:$true] %s460
          %466 = dma.hbm_to_vmem [thread:$0]  %s459, 3072, %s461, %s450, 192, 192, 12
        $region32: #{tpu_custom_call.1} parent=19 // pred_fallthru
          _
        // Predicated region
        $region33: #{tpu_custom_call.1} parent=19 // pred_check
          %p467 = pneg %p164
        $region34: #{tpu_custom_call.1} parent=19 // pred_check_branch
          %469 = sbr.rel (%p467) target = $region36
        $region35: #{tpu_custom_call.1} parent=19 // pred_region
          %p470 = scmp.lt.s32.totalorder %s41, 1
          %s471 = scalar_select %p470, %s41, 1
          %s472 = smul.addr %s471, 3
          %s473 = scalar_lea.vmem %s4, %s472
        $region36: #{tpu_custom_call.1} parent=19 // pred_fallthru
          _
        // Predicated region
        $region37: #{tpu_custom_call.1} parent=19 // pred_check
          %p474 = pneg %p190
        $region38: #{tpu_custom_call.1} parent=19 // pred_check_branch
          %476 = sbr.rel (%p474) target = $region40
        $region39: #{tpu_custom_call.1} parent=19 // pred_region
          %s477 = sand.u32 %s33, 1
          %s478 = scalar_lea.sflag [#allocation10], %s477
          %s479 = sand.u32 %s180, 1
          %s480 = smul.addr %s479, 64
          %s481 = scalar_lea.vmem [#allocation11], %s480
          %s483 = ssub.s32 1024, 1024
          %484 = vsyncadd %s478, %s483
          %s485 = smul.addr %s41, 16
          %s486 = smul.addr %s485, 64
          %s487 = scalar_lea.hbm %s5, %s486
          %s488 = sshll.u32 %s481, 4
          %s489 = int_to_ptr.vmem [resolvable:$true] %s488
          %494 = dma.hbm_to_vmem [thread:$0]  %s487, 1024, %s489, %s478, 64, 64, 4
        $region40: #{tpu_custom_call.1} parent=19 // pred_fallthru
          _
        // Predicated region
        $region41: #{tpu_custom_call.1} parent=19 // pred_check
          %p495 = pneg %p216
        $region42: #{tpu_custom_call.1} parent=19 // pred_check_branch
          %497 = sbr.rel (%p495) target = $region44
        $region43: #{tpu_custom_call.1} parent=19 // pred_region
          %p498 = scmp.lt.s32.totalorder %s41, 1
          %s499 = scalar_select %p498, %s41, 1
          %s500 = scalar_lea.vmem %s6, %s499
        $region44: #{tpu_custom_call.1} parent=19 // pred_fallthru
          _
        // Predicated region
        $region45: #{tpu_custom_call.1} parent=19 // pred_check
          %p501 = pneg %p242
        $region46: #{tpu_custom_call.1} parent=19 // pred_check_branch
          %503 = sbr.rel (%p501) target = $region48
        $region47: #{tpu_custom_call.1} parent=19 // pred_region
          %p504 = scmp.lt.s32.totalorder %s41, 1
          %s505 = scalar_select %p504, %s41, 1
          %s506 = smul.addr %s505, 4
          %s507 = scalar_lea.vmem %s7, %s506
        $region48: #{tpu_custom_call.1} parent=19 // pred_fallthru
          _
        // Predicated region
        $region49: #{tpu_custom_call.1} parent=19 // pred_check
          %p508 = pneg %p268
        $region50: #{tpu_custom_call.1} parent=19 // pred_check_branch
          %510 = sbr.rel (%p508) target = $region52
        $region51: #{tpu_custom_call.1} parent=19 // pred_region
          %s511 = sand.u32 %s33, 1
          %s512 = scalar_lea.sflag [#allocation13], %s511
          %s513 = sand.u32 %s258, 1
          %s514 = smul.addr %s513, 128
          %s515 = scalar_lea.vmem [#allocation12], %s514
          %s517 = ssub.s32 2048, 2048
          %518 = vsyncadd %s512, %s517
          %s519 = smul.addr %s41, 32
          %s520 = smul.addr %s519, 64
          %s521 = scalar_lea.hbm %s8, %s520
          %s522 = sshll.u32 %s515, 4
          %s523 = int_to_ptr.vmem [resolvable:$true] %s522
          %528 = dma.hbm_to_vmem [thread:$0]  %s521, 2048, %s523, %s512, 128, 128, 8
        $region52: #{tpu_custom_call.1} parent=19 // pred_fallthru
          _
        // Predicated region
        $region53: #{tpu_custom_call.1} parent=19 // pred_check
          %p529 = pneg %p294
        $region54: #{tpu_custom_call.1} parent=19 // pred_check_branch
          %531 = sbr.rel (%p529) target = $region56
        $region55: #{tpu_custom_call.1} parent=19 // pred_region
          %p532 = scmp.lt.s32.totalorder %s41, 1
          %s533 = scalar_select %p532, %s41, 1
          %s534 = smul.addr %s533, 2
          %s535 = scalar_lea.vmem %s9, %s534
        $region56: #{tpu_custom_call.1} parent=19 // pred_fallthru
          _
        // Predicated region
        $region57: #{tpu_custom_call.1} parent=19 // pred_check
          %p536 = pneg %p320
        $region58: #{tpu_custom_call.1} parent=19 // pred_check_branch
          %538 = sbr.rel (%p536) target = $region60
        $region59: #{tpu_custom_call.1} parent=19 // pred_region
          %s539 = sand.u32 %s33, 1
          %s540 = scalar_lea.sflag [#allocation13], %s539
          %s541 = sand.u32 %s310, 1
          %s542 = smul.addr %s541, 128
          %s543 = scalar_lea.vmem [#allocation14], %s542
          %s545 = ssub.s32 2048, 2048
          %546 = vsyncadd %s540, %s545
          %s547 = smul.addr %s41, 32
          %s548 = smul.addr %s547, 64
          %s549 = scalar_lea.hbm %s10, %s548
          %s550 = sshll.u32 %s543, 4
          %s551 = int_to_ptr.vmem [resolvable:$true] %s550
          %556 = dma.hbm_to_vmem [thread:$0]  %s549, 2048, %s551, %s540, 64, 64, 4
        $region60: #{tpu_custom_call.1} parent=19 // pred_fallthru
          _
        // Predicated region
        $region61: #{tpu_custom_call.1} parent=19 // pred_check
          %p557 = pneg %p346
        $region62: #{tpu_custom_call.1} parent=19 // pred_check_branch
          %559 = sbr.rel (%p557) target = $region64
        $region63: #{tpu_custom_call.1} parent=19 // pred_region
          %p560 = scmp.lt.s32.totalorder %s41, 1
          %s561 = scalar_select %p560, %s41, 1
          %s562 = scalar_lea.vmem %s11, %s561
        $region64: #{tpu_custom_call.1} parent=19 // pred_fallthru
          _
      $region20: #{tpu_custom_call.1} parent=5 // pred_fallthru
        _
      %p563 = scmp.le.s32.totalorder 1, %s33
      %p564 = scmp.lt.s32.totalorder %s33, 5
      %p565 = pnand %p563, %p564
      %p566 = pneg %p565
      // Predicated region
      $region65: #{tpu_custom_call.1} parent=5 // pred_check
        _
      $region66: #{tpu_custom_call.1} parent=5 // pred_check_branch
        %568 = sbr.rel (%p565) target = $region68
      $region67: #{tpu_custom_call.1} parent=5 // pred_region
        %s569 = ssub.s32 %s33, 1
        %s570 = sand.u32 %s58, 1
        %s571 = scalar_lea.sflag [#allocation4], %s570
        %s572 = sand.u32 %s58, 1
        %s573 = smul.addr %s572, 128
        %s574 = scalar_lea.vmem [#allocation3], %s573
        // Predicated region
        $region69: #{tpu_custom_call.1} parent=67 // pred_check
          %p575 = pneg %p71
        $region70: #{tpu_custom_call.1} parent=67 // pred_check_branch
          %577 = sbr.rel (%p575) target = $region72
        $region71: #{tpu_custom_call.1} parent=67 // pred_region
          %578 = dma.done %s571, 2048
        $region72: #{tpu_custom_call.1} parent=67 // pred_fallthru
          _
        %s579 = sand.u32 %s38, 1
        %s580 = scalar_lea.sflag [#allocation7], %s579
        %s581 = sand.u32 %s84, 1
        %s582 = scalar_lea.vmem [#allocation6], %s581
        // Predicated region
        $region73: #{tpu_custom_call.1} parent=67 // pred_check
          %p583 = pneg %p97
        $region74: #{tpu_custom_call.1} parent=67 // pred_check_branch
          %585 = sbr.rel (%p583) target = $region76
        $region75: #{tpu_custom_call.1} parent=67 // pred_region
          %586 = dma.done %s580, 16
        $region76: #{tpu_custom_call.1} parent=67 // pred_fallthru
          _
        // Predicated region
        $region77: #{tpu_custom_call.1} parent=67 // pred_check
          %p587 = pneg %p118
        $region78: #{tpu_custom_call.1} parent=67 // pred_check_branch
          %589 = sbr.rel (%p587) target = $region80
        $region79: #{tpu_custom_call.1} parent=67 // pred_region
          %590 = dma.done [#allocation7], 16
        $region80: #{tpu_custom_call.1} parent=67 // pred_fallthru
          _
        %s591 = sand.u32 %s38, 1
        %s592 = scalar_lea.sflag [#allocation10], %s591
        %s593 = sand.u32 %s131, 1
        %s594 = smul.addr %s593, 192
        %s595 = scalar_lea.vmem [#allocation9], %s594
        // Predicated region
        $region81: #{tpu_custom_call.1} parent=67 // pred_check
          %p596 = pneg %p144
        $region82: #{tpu_custom_call.1} parent=67 // pred_check_branch
          %598 = sbr.rel (%p596) target = $region84
        $region83: #{tpu_custom_call.1} parent=67 // pred_region
          %599 = dma.done %s592, 3072
        $region84: #{tpu_custom_call.1} parent=67 // pred_fallthru
          _
        %s600 = sand.u32 %s38, 1
        %s601 = scalar_lea.sflag [#allocation10], %s600
        %s602 = sand.u32 %s183, 1
        %s603 = smul.addr %s602, 64
        %s604 = scalar_lea.vmem [#allocation11], %s603
        // Predicated region
        $region85: #{tpu_custom_call.1} parent=67 // pred_check
          %p605 = pneg %p196
        $region86: #{tpu_custom_call.1} parent=67 // pred_check_branch
          %607 = sbr.rel (%p605) target = $region88
        $region87: #{tpu_custom_call.1} parent=67 // pred_region
          %608 = dma.done %s601, 1024
        $region88: #{tpu_custom_call.1} parent=67 // pred_fallthru
          _
        %s609 = sand.u32 %s38, 1
        %s610 = scalar_lea.sflag [#allocation13], %s609
        %s611 = sand.u32 %s261, 1
        %s612 = smul.addr %s611, 128
        %s613 = scalar_lea.vmem [#allocation12], %s612
        // Predicated region
        $region89: #{tpu_custom_call.1} parent=67 // pred_check
          %p614 = pneg %p274
        $region90: #{tpu_custom_call.1} parent=67 // pred_check_branch
          %616 = sbr.rel (%p614) target = $region92
        $region91: #{tpu_custom_call.1} parent=67 // pred_region
          %617 = dma.done %s610, 2048
        $region92: #{tpu_custom_call.1} parent=67 // pred_fallthru
          _
        %s618 = sand.u32 %s38, 1
        %s619 = scalar_lea.sflag [#allocation13], %s618
        %s620 = sand.u32 %s313, 1
        %s621 = smul.addr %s620, 128
        %s622 = scalar_lea.vmem [#allocation14], %s621
        // Predicated region
        $region93: #{tpu_custom_call.1} parent=67 // pred_check
          %p623 = pneg %p326
        $region94: #{tpu_custom_call.1} parent=67 // pred_check_branch
          %625 = sbr.rel (%p623) target = $region96
        $region95: #{tpu_custom_call.1} parent=67 // pred_region
          %626 = dma.done %s619, 2048
        $region96: #{tpu_custom_call.1} parent=67 // pred_fallthru
          _
        %s627 = sand.u32 %s58, 1
        %s628 = scalar_lea.sflag [#allocation4], %s627
        %s629 = sand.u32 %s58, 1
        %s630 = smul.addr %s629, 128
        %s631 = scalar_lea.vmem [#allocation3], %s630
        %p632 = pneg %p71
        %p633 = pneg %p68
        %s634 = sand.u32 %s38, 1
        %s635 = scalar_lea.sflag [#allocation7], %s634
        %s636 = sand.u32 %s84, 1
        %s637 = scalar_lea.vmem [#allocation6], %s636
        %p638 = pneg %p97
        %p639 = pneg %p94
        %p640 = pneg %p118
        %p641 = pneg %p115
        %s642 = sand.u32 %s38, 1
        %s643 = scalar_lea.sflag [#allocation10], %s642
        %s644 = sand.u32 %s131, 1
        %s645 = smul.addr %s644, 192
        %s646 = scalar_lea.vmem [#allocation9], %s645
        %p647 = pneg %p144
        %p648 = pneg %p141
        %p649 = scmp.lt.s32.totalorder %s43, 1
        %s650 = scalar_select %p649, %s43, 1
        %s651 = smul.addr %s650, 3
        %s652 = scalar_lea.vmem %s4, %s651
        %p653 = pneg %p170
        %p654 = pneg %p167
        %s655 = sand.u32 %s38, 1
        %s656 = scalar_lea.sflag [#allocation10], %s655
        %s657 = sand.u32 %s183, 1
        %s658 = smul.addr %s657, 64
        %s659 = scalar_lea.vmem [#allocation11], %s658
        %p660 = pneg %p196
        %p661 = pneg %p193
        %p662 = scmp.lt.s32.totalorder %s43, 1
        %s663 = scalar_select %p662, %s43, 1
        %s664 = scalar_lea.vmem %s6, %s663
        %p665 = pneg %p222
        %p666 = pneg %p219
        %p667 = scmp.lt.s32.totalorder %s43, 1
        %s668 = scalar_select %p667, %s43, 1
        %s669 = smul.addr %s668, 4
        %s670 = scalar_lea.vmem %s7, %s669
        %p671 = pneg %p248
        %p672 = pneg %p245
        %s673 = sand.u32 %s38, 1
        %s674 = scalar_lea.sflag [#allocation13], %s673
        %s675 = sand.u32 %s261, 1
        %s676 = smul.addr %s675, 128
        %s677 = scalar_lea.vmem [#allocation12], %s676
        %p678 = pneg %p274
        %p679 = pneg %p271
        %p680 = scmp.lt.s32.totalorder %s43, 1
        %s681 = scalar_select %p680, %s43, 1
        %s682 = smul.addr %s681, 2
        %s683 = scalar_lea.vmem %s9, %s682
        %p684 = pneg %p300
        %p685 = pneg %p297
        %s686 = sand.u32 %s38, 1
        %s687 = scalar_lea.sflag [#allocation13], %s686
        %s688 = sand.u32 %s313, 1
        %s689 = smul.addr %s688, 128
        %s690 = scalar_lea.vmem [#allocation14], %s689
        %p691 = pneg %p326
        %p692 = pneg %p323
        %p693 = scmp.lt.s32.totalorder %s43, 1
        %s694 = scalar_select %p693, %s43, 1
        %s695 = scalar_lea.vmem %s11, %s694
        %p696 = pneg %p352
        %p697 = pneg %p349
        %p698 = pneg %p378
        %p699 = pneg %p375
        %s700 = sand.u32 %s365, 1
        %s701 = scalar_lea.sflag [#allocation5], %s700
        %s702 = sand.u32 %s365, 1
        %s703 = scalar_lea.vmem [#allocation15], %s702
        %p704 = scmp.lt.s32.totalorder %s43, 1
        %s705 = scalar_select %p704, %s43, 1
        %s706 = smul.addr %s705, 3
        %s707 = scalar_lea.vmem %s4, %s706
        %p708 = scmp.lt.s32.totalorder %s43, 1
        %s709 = scalar_select %p708, %s43, 1
        %s710 = scalar_lea.vmem %s6, %s709
        %p711 = scmp.lt.s32.totalorder %s43, 1
        %s712 = scalar_select %p711, %s43, 1
        %s713 = smul.addr %s712, 4
        %s714 = scalar_lea.vmem %s7, %s713
        %p715 = scmp.lt.s32.totalorder %s43, 1
        %s716 = scalar_select %p715, %s43, 1
        %s717 = smul.addr %s716, 2
        %s718 = scalar_lea.vmem %s9, %s717
        %p719 = scmp.lt.s32.totalorder %s43, 1
        %s720 = scalar_select %p719, %s43, 1
        %s721 = scalar_lea.vmem %s11, %s720
        %p723 = scmp.eq.s32.totalorder %s43, 0
        // Predicated region
        $region97: #{tpu_custom_call.1} parent=67 // pred_check
          %p724 = pneg %p723
        $region98: #{tpu_custom_call.1} parent=67 // pred_check_branch
          %726 = sbr.rel (%p724) target = $region100
        $region99: #{tpu_custom_call.1} parent=67 // pred_region
          %v727 = vld [vmem:[%s574] sm:$0xff]
          %v728 = vld [vmem:[%s574 + $0x8] sm:$0xff]
          %v729 = vld [vmem:[%s574 + $0x10] sm:$0xff]
          %v730 = vld [vmem:[%s574 + $0x18] sm:$0xff]
          %v731 = vld [vmem:[%s574 + $0x20] sm:$0xff]
          %v732 = vld [vmem:[%s574 + $0x28] sm:$0xff]
          %v733 = vld [vmem:[%s574 + $0x30] sm:$0xff]
          %v734 = vld [vmem:[%s574 + $0x38] sm:$0xff]
          %v735 = vld [vmem:[%s574 + $0x40] sm:$0xff]
          %v736 = vld [vmem:[%s574 + $0x48] sm:$0xff]
          %v737 = vld [vmem:[%s574 + $0x50] sm:$0xff]
          %v738 = vld [vmem:[%s574 + $0x58] sm:$0xff]
          %v739 = vld [vmem:[%s574 + $0x60] sm:$0xff]
          %v740 = vld [vmem:[%s574 + $0x68] sm:$0xff]
          %v741 = vld [vmem:[%s574 + $0x70] sm:$0xff]
          %v742 = vld [vmem:[%s574 + $0x78] sm:$0xff]
          %743 = vst [vmem:[#allocation2] sm:$0xff] %v727
          %744 = vst [vmem:[#allocation2 + $0x8] sm:$0xff] %v728
          %745 = vst [vmem:[#allocation2 + $0x10] sm:$0xff] %v729
          %746 = vst [vmem:[#allocation2 + $0x18] sm:$0xff] %v730
          %747 = vst [vmem:[#allocation2 + $0x20] sm:$0xff] %v731
          %748 = vst [vmem:[#allocation2 + $0x28] sm:$0xff] %v732
          %749 = vst [vmem:[#allocation2 + $0x30] sm:$0xff] %v733
          %750 = vst [vmem:[#allocation2 + $0x38] sm:$0xff] %v734
          %751 = vst [vmem:[#allocation2 + $0x40] sm:$0xff] %v735
          %752 = vst [vmem:[#allocation2 + $0x48] sm:$0xff] %v736
          %753 = vst [vmem:[#allocation2 + $0x50] sm:$0xff] %v737
          %754 = vst [vmem:[#allocation2 + $0x58] sm:$0xff] %v738
          %755 = vst [vmem:[#allocation2 + $0x60] sm:$0xff] %v739
          %756 = vst [vmem:[#allocation2 + $0x68] sm:$0xff] %v740
          %757 = vst [vmem:[#allocation2 + $0x70] sm:$0xff] %v741
          %758 = vst [vmem:[#allocation2 + $0x78] sm:$0xff] %v742
        $region100: #{tpu_custom_call.1} parent=67 // pred_fallthru
          _
        %v759 = vld [vmem:[#allocation2] sm:$0xff]
        %v760 = vld [vmem:[#allocation2 + $0x8] sm:$0xff]
        %v761 = vld [vmem:[#allocation2 + $0x10] sm:$0xff]
        %v762 = vld [vmem:[#allocation2 + $0x18] sm:$0xff]
        %v763 = vld [vmem:[#allocation2 + $0x20] sm:$0xff]
        %v764 = vld [vmem:[#allocation2 + $0x28] sm:$0xff]
        %v765 = vld [vmem:[#allocation2 + $0x30] sm:$0xff]
        %v766 = vld [vmem:[#allocation2 + $0x38] sm:$0xff]
        %v767 = vld [vmem:[#allocation2 + $0x40] sm:$0xff]
        %v768 = vld [vmem:[#allocation2 + $0x48] sm:$0xff]
        %v769 = vld [vmem:[#allocation2 + $0x50] sm:$0xff]
        %v770 = vld [vmem:[#allocation2 + $0x58] sm:$0xff]
        %v771 = vld [vmem:[#allocation2 + $0x60] sm:$0xff]
        %v772 = vld [vmem:[#allocation2 + $0x68] sm:$0xff]
        %v773 = vld [vmem:[#allocation2 + $0x70] sm:$0xff]
        %v774 = vld [vmem:[#allocation2 + $0x78] sm:$0xff]
        %v775 = vpack.c.bf16 %v760, %v759
        %v776 = vpack.c.bf16 %v762, %v761
        %v777 = vpack.c.bf16 %v764, %v763
        %v778 = vpack.c.bf16 %v766, %v765
        %v779 = vpack.c.bf16 %v768, %v767
        %v780 = vpack.c.bf16 %v770, %v769
        %v781 = vpack.c.bf16 %v772, %v771
        %v782 = vpack.c.bf16 %v774, %v773
        %v783 = vld [vmem:[%s595] sm:$0xff]
        %v784 = vld [vmem:[%s595 + $0x8] sm:$0xf]
        %v785 = vld [vmem:[%s595 + $0xc] sm:$0xff]
        %v786 = vld [vmem:[%s595 + $0x14] sm:$0xf]
        %v787 = vld [vmem:[%s595 + $0x18] sm:$0xff]
        %v788 = vld [vmem:[%s595 + $0x20] sm:$0xf]
        %v789 = vld [vmem:[%s595 + $0x24] sm:$0xff]
        %v790 = vld [vmem:[%s595 + $0x2c] sm:$0xf]
        %v791 = vld [vmem:[%s595 + $0x30] sm:$0xff]
        %v792 = vld [vmem:[%s595 + $0x38] sm:$0xf]
        %v793 = vld [vmem:[%s595 + $0x3c] sm:$0xff]
        %v794 = vld [vmem:[%s595 + $0x44] sm:$0xf]
        %v795 = vld [vmem:[%s595 + $0x48] sm:$0xff]
        %v796 = vld [vmem:[%s595 + $0x50] sm:$0xf]
        %v797 = vld [vmem:[%s595 + $0x54] sm:$0xff]
        %v798 = vld [vmem:[%s595 + $0x5c] sm:$0xf]
        %v799 = vld [vmem:[%s595 + $0x60] sm:$0xff]
        %v800 = vld [vmem:[%s595 + $0x68] sm:$0xf]
        %v801 = vld [vmem:[%s595 + $0x6c] sm:$0xff]
        %v802 = vld [vmem:[%s595 + $0x74] sm:$0xf]
        %v803 = vld [vmem:[%s595 + $0x78] sm:$0xff]
        %v804 = vld [vmem:[%s595 + $0x80] sm:$0xf]
        %v805 = vld [vmem:[%s595 + $0x84] sm:$0xff]
        %v806 = vld [vmem:[%s595 + $0x8c] sm:$0xf]
        %v807 = vld [vmem:[%s595 + $0x90] sm:$0xff]
        %v808 = vld [vmem:[%s595 + $0x98] sm:$0xf]
        %v809 = vld [vmem:[%s595 + $0x9c] sm:$0xff]
        %v810 = vld [vmem:[%s595 + $0xa4] sm:$0xf]
        %v811 = vld [vmem:[%s595 + $0xa8] sm:$0xff]
        %v812 = vld [vmem:[%s595 + $0xb0] sm:$0xf]
        %v813 = vld [vmem:[%s595 + $0xb4] sm:$0xff]
        %v814 = vld [vmem:[%s595 + $0xbc] sm:$0xf]
        %v815 = vld [vmem:[%s707] sm:$0x7]
        %v817 = vlaneseq
        %v818 = vshrl.u32 %v817, 7
        %v819 = vsub.s32 0, %v818
        %v820 = vrot.slane %v815, %v819
        %v821 = vlaneseq
        %v822 = vshrl.u32 %v821, 7
        %v823 = vsub.s32 1, %v822
        %v824 = vrot.slane %v815, %v823
        %v825 = vlaneseq
        %v826 = vshrl.u32 %v825, 7
        %v827 = vsub.s32 2, %v826
        %v828 = vrot.slane %v815, %v827
        %v864 = vunpack.c.l.b16 %v783
        %v865 = vunpack.c.h.b16 %v783
        %v866 = vunpack.c.l.b16 %v784
        %v867 = vunpack.c.l.b16 %v785
        %v868 = vunpack.c.h.b16 %v785
        %v869 = vunpack.c.l.b16 %v786
        %v870 = vunpack.c.l.b16 %v787
        %v871 = vunpack.c.h.b16 %v787
        %v872 = vunpack.c.l.b16 %v788
        %v873 = vunpack.c.l.b16 %v789
        %v874 = vunpack.c.h.b16 %v789
        %v875 = vunpack.c.l.b16 %v790
        %v876 = vunpack.c.l.b16 %v791
        %v877 = vunpack.c.h.b16 %v791
        %v878 = vunpack.c.l.b16 %v792
        %v879 = vunpack.c.l.b16 %v793
        %v880 = vunpack.c.h.b16 %v793
        %v881 = vunpack.c.l.b16 %v794
        %v882 = vunpack.c.l.b16 %v795
        %v883 = vunpack.c.h.b16 %v795
        %v884 = vunpack.c.l.b16 %v796
        %v885 = vunpack.c.l.b16 %v797
        %v886 = vunpack.c.h.b16 %v797
        %v887 = vunpack.c.l.b16 %v798
        %v888 = vunpack.c.l.b16 %v799
        %v889 = vunpack.c.h.b16 %v799
        %v890 = vunpack.c.l.b16 %v800
        %v891 = vunpack.c.l.b16 %v801
        %v892 = vunpack.c.h.b16 %v801
        %v893 = vunpack.c.l.b16 %v802
        %v894 = vunpack.c.l.b16 %v803
        %v895 = vunpack.c.h.b16 %v803
        %v896 = vunpack.c.l.b16 %v804
        %v897 = vunpack.c.l.b16 %v805
        %v898 = vunpack.c.h.b16 %v805
        %v899 = vunpack.c.l.b16 %v806
        %v900 = vunpack.c.l.b16 %v807
        %v901 = vunpack.c.h.b16 %v807
        %v902 = vunpack.c.l.b16 %v808
        %v903 = vunpack.c.l.b16 %v809
        %v904 = vunpack.c.h.b16 %v809
        %v905 = vunpack.c.l.b16 %v810
        %v906 = vunpack.c.l.b16 %v811
        %v907 = vunpack.c.h.b16 %v811
        %v908 = vunpack.c.l.b16 %v812
        %v909 = vunpack.c.l.b16 %v813
        %v910 = vunpack.c.h.b16 %v813
        %v911 = vunpack.c.l.b16 %v814
        %v912 = vpack.c.b16 %v867, %v864
        %v913 = vpack.c.b16 %v868, %v865
        %v914 = vpack.c.b16 %v869, %v866
        %v915 = vpack.c.b16 %v873, %v870
        %v916 = vpack.c.b16 %v874, %v871
        %v917 = vpack.c.b16 %v875, %v872
        %v918 = vpack.c.b16 %v879, %v876
        %v919 = vpack.c.b16 %v880, %v877
        %v920 = vpack.c.b16 %v881, %v878
        %v921 = vpack.c.b16 %v885, %v882
        %v922 = vpack.c.b16 %v886, %v883
        %v923 = vpack.c.b16 %v887, %v884
        %v924 = vpack.c.b16 %v891, %v888
        %v925 = vpack.c.b16 %v892, %v889
        %v926 = vpack.c.b16 %v893, %v890
        %v927 = vpack.c.b16 %v897, %v894
        %v928 = vpack.c.b16 %v898, %v895
        %v929 = vpack.c.b16 %v899, %v896
        %v930 = vpack.c.b16 %v903, %v900
        %v931 = vpack.c.b16 %v904, %v901
        %v932 = vpack.c.b16 %v905, %v902
        %v933 = vpack.c.b16 %v909, %v906
        %v934 = vpack.c.b16 %v910, %v907
        %v935 = vpack.c.b16 %v911, %v908
        %960 = vmatprep.subr.bf16.mxu0 %v913
        %961 = vmatpush1.bf16.msra.mxu0 %v912
        %962 = vmatprep.subr.bf16.mxu0 %v916
        %963 = vmatpush1.bf16.msra.mxu0 %v915
        %964 = vmatprep.subr.bf16.mxu0 %v919
        %965 = vmatpush1.bf16.msra.mxu0 %v918
        %966 = vmatprep.subr.bf16.mxu0 %v922
        %967 = vmatpush1.bf16.msra.mxu0 %v921
        %968 = vmatprep.subr.bf16.mxu0 %v925
        %969 = vmatpush1.bf16.msra.mxu0 %v924
        %970 = vmatprep.subr.bf16.mxu0 %v928
        %971 = vmatpush1.bf16.msra.mxu0 %v927
        %972 = vmatprep.subr.bf16.mxu0 %v931
        %973 = vmatpush1.bf16.msra.mxu0 %v930
        %974 = vmatprep.subr.bf16.mxu0 %v934
        %975 = vmatpush1.bf16.msra.mxu0 %v933
        %976 = vmatprep.subr.bf16.mxu0 0
        %977 = vmatpush1.bf16.msra.mxu0 0
        %978 = vmatprep.subr.bf16.mxu0 0
        %979 = vmatpush1.bf16.msra.mxu0 0
        %980 = vmatprep.subr.bf16.mxu0 0
        %981 = vmatpush1.bf16.msra.mxu0 0
        %982 = vmatprep.subr.bf16.mxu0 0
        %983 = vmatpush1.bf16.msra.mxu0 0
        %984 = vmatprep.subr.bf16.mxu0 0
        %985 = vmatpush1.bf16.msra.mxu0 0
        %986 = vmatprep.subr.bf16.mxu0 0
        %987 = vmatpush1.bf16.msra.mxu0 0
        %988 = vmatprep.subr.bf16.mxu0 0
        %989 = vmatpush1.bf16.msra.mxu0 0
        %990 = vmatprep.subr.bf16.mxu0 0
        %991 = vmatpush1.bf16.msra.mxu0 0
        %992 = vmatprep.mubr.bf16.mxu0 0
        %993 = vmatmul.mubr.bf16.gmra.mrb[0].mxu0 %v775
        %v994 = vpop.f32.mrb[0].mxu0
        %v995 = vadd.f32 %v820, %v994
        %v996 = vpop.f32.mrb[0].mxu0
        %v997 = vadd.f32 %v824, %v996
        %v998 = vpop.f32.mrb[0].mxu0
        %v999 = vadd.f32 %v820, %v998
        %v1000 = vpop.f32.mrb[0].mxu0
        %v1001 = vadd.f32 %v824, %v1000
        %1002 = vmatprep.mubr.bf16.mxu0 0
        %1003 = vmatmul.mubr.bf16.gmra.mrb[0].mxu0 %v776
        %v1004 = vpop.f32.mrb[0].mxu0
        %v1005 = vadd.f32 %v820, %v1004
        %v1006 = vpop.f32.mrb[0].mxu0
        %v1007 = vadd.f32 %v824, %v1006
        %v1008 = vpop.f32.mrb[0].mxu0
        %v1009 = vadd.f32 %v820, %v1008
        %v1010 = vpop.f32.mrb[0].mxu0
        %v1011 = vadd.f32 %v824, %v1010
        %1012 = vmatprep.mubr.bf16.mxu0 0
        %1013 = vmatmul.mubr.bf16.gmra.mrb[0].mxu0 %v777
        %v1014 = vpop.f32.mrb[0].mxu0
        %v1015 = vadd.f32 %v820, %v1014
        %v1016 = vpop.f32.mrb[0].mxu0
        %v1017 = vadd.f32 %v824, %v1016
        %v1018 = vpop.f32.mrb[0].mxu0
        %v1019 = vadd.f32 %v820, %v1018
        %v1020 = vpop.f32.mrb[0].mxu0
        %v1021 = vadd.f32 %v824, %v1020
        %1022 = vmatprep.mubr.bf16.mxu0 0
        %1023 = vmatmul.mubr.bf16.gmra.mrb[0].mxu0 %v778
        %v1024 = vpop.f32.mrb[0].mxu0
        %v1025 = vadd.f32 %v820, %v1024
        %v1026 = vpop.f32.mrb[0].mxu0
        %v1027 = vadd.f32 %v824, %v1026
        %v1028 = vpop.f32.mrb[0].mxu0
        %v1029 = vadd.f32 %v820, %v1028
        %v1030 = vpop.f32.mrb[0].mxu0
        %v1031 = vadd.f32 %v824, %v1030
        %1032 = vmatprep.mubr.bf16.mxu0 0
        %1033 = vmatmul.mubr.bf16.gmra.mrb[0].mxu0 %v779
        %v1034 = vpop.f32.mrb[0].mxu0
        %v1035 = vadd.f32 %v820, %v1034
        %v1036 = vpop.f32.mrb[0].mxu0
        %v1037 = vadd.f32 %v824, %v1036
        %v1038 = vpop.f32.mrb[0].mxu0
        %v1039 = vadd.f32 %v820, %v1038
        %v1040 = vpop.f32.mrb[0].mxu0
        %v1041 = vadd.f32 %v824, %v1040
        %1042 = vmatprep.mubr.bf16.mxu0 0
        %1043 = vmatmul.mubr.bf16.gmra.mrb[0].mxu0 %v780
        %v1044 = vpop.f32.mrb[0].mxu0
        %v1045 = vadd.f32 %v820, %v1044
        %v1046 = vpop.f32.mrb[0].mxu0
        %v1047 = vadd.f32 %v824, %v1046
        %v1048 = vpop.f32.mrb[0].mxu0
        %v1049 = vadd.f32 %v820, %v1048
        %v1050 = vpop.f32.mrb[0].mxu0
        %v1051 = vadd.f32 %v824, %v1050
        %1052 = vmatprep.mubr.bf16.mxu0 0
        %1053 = vmatmul.mubr.bf16.gmra.mrb[0].mxu0 %v781
        %v1054 = vpop.f32.mrb[0].mxu0
        %v1055 = vadd.f32 %v820, %v1054
        %v1056 = vpop.f32.mrb[0].mxu0
        %v1057 = vadd.f32 %v824, %v1056
        %v1058 = vpop.f32.mrb[0].mxu0
        %v1059 = vadd.f32 %v820, %v1058
        %v1060 = vpop.f32.mrb[0].mxu0
        %v1061 = vadd.f32 %v824, %v1060
        %1062 = vmatprep.mubr.bf16.mxu0 0
        %1063 = vmatmul.mubr.bf16.gmra.mrb[0].mxu0 %v782
        %v1064 = vpop.f32.mrb[0].mxu0
        %v1065 = vadd.f32 %v820, %v1064
        %v1066 = vpop.f32.mrb[0].mxu0
        %v1067 = vadd.f32 %v824, %v1066
        %v1068 = vpop.f32.mrb[0].mxu0
        %v1069 = vadd.f32 %v820, %v1068
        %v1070 = vpop.f32.mrb[0].mxu0
        %v1071 = vadd.f32 %v824, %v1070
        %1072 = vdwg.mxu0
        %1073 = vmatprep.subr.bf16.mxu0 0
        %1074 = vmatpush1.bf16.msra.mxu0 %v914
        %1075 = vmatprep.subr.bf16.mxu0 0
        %1076 = vmatpush1.bf16.msra.mxu0 %v917
        %1077 = vmatprep.subr.bf16.mxu0 0
        %1078 = vmatpush1.bf16.msra.mxu0 %v920
        %1079 = vmatprep.subr.bf16.mxu0 0
        %1080 = vmatpush1.bf16.msra.mxu0 %v923
        %1081 = vmatprep.subr.bf16.mxu0 0
        %1082 = vmatpush1.bf16.msra.mxu0 %v926
        %1083 = vmatprep.subr.bf16.mxu0 0
        %1084 = vmatpush1.bf16.msra.mxu0 %v929
        %1085 = vmatprep.subr.bf16.mxu0 0
        %1086 = vmatpush1.bf16.msra.mxu0 %v932
        %1087 = vmatprep.subr.bf16.mxu0 0
        %1088 = vmatpush1.bf16.msra.mxu0 %v935
        %1089 = vmatprep.subr.bf16.mxu0 0
        %1090 = vmatpush1.bf16.msra.mxu0 0
        %1091 = vmatprep.subr.bf16.mxu0 0
        %1092 = vmatpush1.bf16.msra.mxu0 0
        %1093 = vmatprep.subr.bf16.mxu0 0
        %1094 = vmatpush1.bf16.msra.mxu0 0
        %1095 = vmatprep.subr.bf16.mxu0 0
        %1096 = vmatpush1.bf16.msra.mxu0 0
        %1097 = vmatprep.subr.bf16.mxu0 0
        %1098 = vmatpush1.bf16.msra.mxu0 0
        %1099 = vmatprep.subr.bf16.mxu0 0
        %1100 = vmatpush1.bf16.msra.mxu0 0
        %1101 = vmatprep.subr.bf16.mxu0 0
        %1102 = vmatpush1.bf16.msra.mxu0 0
        %1103 = vmatprep.subr.bf16.mxu0 0
        %1104 = vmatpush1.bf16.msra.mxu0 0
        %1105 = vmatprep.mubr.bf16.mxu0 0
        %1106 = vmatmul.mubr.bf16.gmra.mrb[0].mxu0 %v775
        %v1107 = vpop.f32.mrb[0].mxu0
        %v1108 = vadd.f32 %v828, %v1107
        %v1109 = vpop.f32.mrb[0].mxu0
        %v1110 = vpop.f32.mrb[0].mxu0
        %v1111 = vadd.f32 %v828, %v1110
        %v1112 = vpop.f32.mrb[0].mxu0
        %1113 = vmatprep.mubr.bf16.mxu0 0
        %1114 = vmatmul.mubr.bf16.gmra.mrb[0].mxu0 %v776
        %v1115 = vpop.f32.mrb[0].mxu0
        %v1116 = vadd.f32 %v828, %v1115
        %v1117 = vpop.f32.mrb[0].mxu0
        %v1118 = vpop.f32.mrb[0].mxu0
        %v1119 = vadd.f32 %v828, %v1118
        %v1120 = vpop.f32.mrb[0].mxu0
        %1121 = vmatprep.mubr.bf16.mxu0 0
        %1122 = vmatmul.mubr.bf16.gmra.mrb[0].mxu0 %v777
        %v1123 = vpop.f32.mrb[0].mxu0
        %v1124 = vadd.f32 %v828, %v1123
        %v1125 = vpop.f32.mrb[0].mxu0
        %v1126 = vpop.f32.mrb[0].mxu0
        %v1127 = vadd.f32 %v828, %v1126
        %v1128 = vpop.f32.mrb[0].mxu0
        %1129 = vmatprep.mubr.bf16.mxu0 0
        %1130 = vmatmul.mubr.bf16.gmra.mrb[0].mxu0 %v778
        %v1131 = vpop.f32.mrb[0].mxu0
        %v1132 = vadd.f32 %v828, %v1131
        %v1133 = vpop.f32.mrb[0].mxu0
        %v1134 = vpop.f32.mrb[0].mxu0
        %v1135 = vadd.f32 %v828, %v1134
        %v1136 = vpop.f32.mrb[0].mxu0
        %1137 = vmatprep.mubr.bf16.mxu0 0
        %1138 = vmatmul.mubr.bf16.gmra.mrb[0].mxu0 %v779
        %v1139 = vpop.f32.mrb[0].mxu0
        %v1140 = vadd.f32 %v828, %v1139
        %v1141 = vpop.f32.mrb[0].mxu0
        %v1142 = vpop.f32.mrb[0].mxu0
        %v1143 = vadd.f32 %v828, %v1142
        %v1144 = vpop.f32.mrb[0].mxu0
        %1145 = vmatprep.mubr.bf16.mxu0 0
        %1146 = vmatmul.mubr.bf16.gmra.mrb[0].mxu0 %v780
        %v1147 = vpop.f32.mrb[0].mxu0
        %v1148 = vadd.f32 %v828, %v1147
        %v1149 = vpop.f32.mrb[0].mxu0
        %v1150 = vpop.f32.mrb[0].mxu0
        %v1151 = vadd.f32 %v828, %v1150
        %v1152 = vpop.f32.mrb[0].mxu0
        %1153 = vmatprep.mubr.bf16.mxu0 0
        %1154 = vmatmul.mubr.bf16.gmra.mrb[0].mxu0 %v781
        %v1155 = vpop.f32.mrb[0].mxu0
        %v1156 = vadd.f32 %v828, %v1155
        %v1157 = vpop.f32.mrb[0].mxu0
        %v1158 = vpop.f32.mrb[0].mxu0
        %v1159 = vadd.f32 %v828, %v1158
        %v1160 = vpop.f32.mrb[0].mxu0
        %1161 = vmatprep.mubr.bf16.mxu0 0
        %1162 = vmatmul.mubr.bf16.gmra.mrb[0].mxu0 %v782
        %v1163 = vpop.f32.mrb[0].mxu0
        %v1164 = vadd.f32 %v828, %v1163
        %v1165 = vpop.f32.mrb[0].mxu0
        %v1166 = vpop.f32.mrb[0].mxu0
        %v1167 = vadd.f32 %v828, %v1166
        %v1168 = vpop.f32.mrb[0].mxu0
        %1169 = vdwg.mxu0
        %v1170 = vpack.c.bf16 %v999, %v995
        %v1171 = vpack.c.bf16 %v1009, %v1005
        %v1172 = vpack.c.bf16 %v1019, %v1015
        %v1173 = vpack.c.bf16 %v1029, %v1025
        %v1174 = vpack.c.bf16 %v1039, %v1035
        %v1175 = vpack.c.bf16 %v1049, %v1045
        %v1176 = vpack.c.bf16 %v1059, %v1055
        %v1177 = vpack.c.bf16 %v1069, %v1065
        %v1178 = vpack.c.bf16 %v1001, %v997
        %v1179 = vpack.c.bf16 %v1011, %v1007
        %v1180 = vpack.c.bf16 %v1021, %v1017
        %v1181 = vpack.c.bf16 %v1031, %v1027
        %v1182 = vpack.c.bf16 %v1041, %v1037
        %v1183 = vpack.c.bf16 %v1051, %v1047
        %v1184 = vpack.c.bf16 %v1061, %v1057
        %v1185 = vpack.c.bf16 %v1071, %v1067
        %v1186 = vpack.c.bf16 %v1111, %v1108
        %v1187 = vpack.c.bf16 %v1119, %v1116
        %v1188 = vpack.c.bf16 %v1127, %v1124
        %v1189 = vpack.c.bf16 %v1135, %v1132
        %v1190 = vpack.c.bf16 %v1143, %v1140
        %v1191 = vpack.c.bf16 %v1151, %v1148
        %v1192 = vpack.c.bf16 %v1159, %v1156
        %v1193 = vpack.c.bf16 %v1167, %v1164
        %v1194 = vld [vmem:[%s582] sm:$0x1]
        %v1196 = vlaneseq
        %v1197 = vshrl.u32 %v1196, 7
        %v1198 = vsub.s32 0, %v1197
        %v1199 = vrot.slane %v1194, %v1198
        %1201 = vmatprep.subr.bf16.mxu0 0
        %1202 = vmatpush1.bf16.xpose.msra.mxu0 %v1178
        %1203 = vmatprep.subr.bf16.mxu0 0
        %1204 = vmatpush1.bf16.xpose.msra.mxu0 %v1179
        %1205 = vmatprep.subr.bf16.mxu0 0
        %1206 = vmatpush1.bf16.xpose.msra.mxu0 %v1180
        %1207 = vmatprep.subr.bf16.mxu0 0
        %1208 = vmatpush1.bf16.xpose.msra.mxu0 %v1181
        %1209 = vmatprep.subr.bf16.mxu0 0
        %1210 = vmatpush1.bf16.xpose.msra.mxu0 %v1182
        %1211 = vmatprep.subr.bf16.mxu0 0
        %1212 = vmatpush1.bf16.xpose.msra.mxu0 %v1183
        %1213 = vmatprep.subr.bf16.mxu0 0
        %1214 = vmatpush1.bf16.xpose.msra.mxu0 %v1184
        %1215 = vmatprep.subr.bf16.mxu0 0
        %1216 = vmatpush1.bf16.xpose.msra.mxu0 %v1185
        %1217 = vmatprep.subr.bf16.mxu0 0
        %1218 = vmatpush1.bf16.xpose.msra.mxu0 0
        %1219 = vmatprep.subr.bf16.mxu0 0
        %1220 = vmatpush1.bf16.xpose.msra.mxu0 0
        %1221 = vmatprep.subr.bf16.mxu0 0
        %1222 = vmatpush1.bf16.xpose.msra.mxu0 0
        %1223 = vmatprep.subr.bf16.mxu0 0
        %1224 = vmatpush1.bf16.xpose.msra.mxu0 0
        %1225 = vmatprep.subr.bf16.mxu0 0
        %1226 = vmatpush1.bf16.xpose.msra.mxu0 0
        %1227 = vmatprep.subr.bf16.mxu0 0
        %1228 = vmatpush1.bf16.xpose.msra.mxu0 0
        %1229 = vmatprep.subr.bf16.mxu0 0
        %1230 = vmatpush1.bf16.xpose.msra.mxu0 0
        %1231 = vmatprep.subr.bf16.mxu0 0
        %1232 = vmatpush1.bf16.xpose.msra.mxu0 0
        %1233 = vmatprep.mubr.bf16.mxu0 0
        %1234 = vmatmul.mubr.bf16.gmra.mrb[0].mxu0 %v1170
        %v1235 = vpop.f32.mrb[0].mxu0
        %v1236 = vadd.f32 %v1199, %v1235
        %v1237 = vpop.f32.mrb[0].mxu0
        %v1238 = vpop.f32.mrb[0].mxu0
        %v1239 = vadd.f32 %v1199, %v1238
        %v1240 = vpop.f32.mrb[0].mxu0
        %1241 = vmatprep.mubr.bf16.mxu0 0
        %1242 = vmatmul.mubr.bf16.gmra.mrb[0].mxu0 %v1171
        %v1243 = vpop.f32.mrb[0].mxu0
        %v1244 = vadd.f32 %v1199, %v1243
        %v1245 = vpop.f32.mrb[0].mxu0
        %v1246 = vpop.f32.mrb[0].mxu0
        %v1247 = vadd.f32 %v1199, %v1246
        %v1248 = vpop.f32.mrb[0].mxu0
        %1249 = vmatprep.mubr.bf16.mxu0 0
        %1250 = vmatmul.mubr.bf16.gmra.mrb[0].mxu0 %v1172
        %v1251 = vpop.f32.mrb[0].mxu0
        %v1252 = vadd.f32 %v1199, %v1251
        %v1253 = vpop.f32.mrb[0].mxu0
        %v1254 = vpop.f32.mrb[0].mxu0
        %v1255 = vadd.f32 %v1199, %v1254
        %v1256 = vpop.f32.mrb[0].mxu0
        %1257 = vmatprep.mubr.bf16.mxu0 0
        %1258 = vmatmul.mubr.bf16.gmra.mrb[0].mxu0 %v1173
        %v1259 = vpop.f32.mrb[0].mxu0
        %v1260 = vadd.f32 %v1199, %v1259
        %v1261 = vpop.f32.mrb[0].mxu0
        %v1262 = vpop.f32.mrb[0].mxu0
        %v1263 = vadd.f32 %v1199, %v1262
        %v1264 = vpop.f32.mrb[0].mxu0
        %1265 = vmatprep.mubr.bf16.mxu0 0
        %1266 = vmatmul.mubr.bf16.gmra.mrb[0].mxu0 %v1174
        %v1267 = vpop.f32.mrb[0].mxu0
        %v1268 = vadd.f32 %v1199, %v1267
        %v1269 = vpop.f32.mrb[0].mxu0
        %v1270 = vpop.f32.mrb[0].mxu0
        %v1271 = vadd.f32 %v1199, %v1270
        %v1272 = vpop.f32.mrb[0].mxu0
        %1273 = vmatprep.mubr.bf16.mxu0 0
        %1274 = vmatmul.mubr.bf16.gmra.mrb[0].mxu0 %v1175
        %v1275 = vpop.f32.mrb[0].mxu0
        %v1276 = vadd.f32 %v1199, %v1275
        %v1277 = vpop.f32.mrb[0].mxu0
        %v1278 = vpop.f32.mrb[0].mxu0
        %v1279 = vadd.f32 %v1199, %v1278
        %v1280 = vpop.f32.mrb[0].mxu0
        %1281 = vmatprep.mubr.bf16.mxu0 0
        %1282 = vmatmul.mubr.bf16.gmra.mrb[0].mxu0 %v1176
        %v1283 = vpop.f32.mrb[0].mxu0
        %v1284 = vadd.f32 %v1199, %v1283
        %v1285 = vpop.f32.mrb[0].mxu0
        %v1286 = vpop.f32.mrb[0].mxu0
        %v1287 = vadd.f32 %v1199, %v1286
        %v1288 = vpop.f32.mrb[0].mxu0
        %1289 = vmatprep.mubr.bf16.mxu0 0
        %1290 = vmatmul.mubr.bf16.gmra.mrb[0].mxu0 %v1177
        %v1291 = vpop.f32.mrb[0].mxu0
        %v1292 = vadd.f32 %v1199, %v1291
        %v1293 = vpop.f32.mrb[0].mxu0
        %v1294 = vpop.f32.mrb[0].mxu0
        %v1295 = vadd.f32 %v1199, %v1294
        %v1296 = vpop.f32.mrb[0].mxu0
        %1297 = vdwg.mxu0
        %1298 = vmax.xlane.f32.xlu0 %v1236
        %v1299 = vpop.xlane.xlu0 %1298
        %1300 = vmax.xlane.f32.xlu0 %v1239
        %v1301 = vpop.xlane.xlu0 %1300
        %1302 = vmax.xlane.f32.xlu0 %v1244
        %v1303 = vpop.xlane.xlu0 %1302
        %1304 = vmax.xlane.f32.xlu0 %v1247
        %v1305 = vpop.xlane.xlu0 %1304
        %1306 = vmax.xlane.f32.xlu0 %v1252
        %v1307 = vpop.xlane.xlu0 %1306
        %1308 = vmax.xlane.f32.xlu0 %v1255
        %v1309 = vpop.xlane.xlu0 %1308
        %1310 = vmax.xlane.f32.xlu0 %v1260
        %v1311 = vpop.xlane.xlu0 %1310
        %1312 = vmax.xlane.f32.xlu0 %v1263
        %v1313 = vpop.xlane.xlu0 %1312
        %1314 = vmax.xlane.f32.xlu0 %v1268
        %v1315 = vpop.xlane.xlu0 %1314
        %1316 = vmax.xlane.f32.xlu0 %v1271
        %v1317 = vpop.xlane.xlu0 %1316
        %1318 = vmax.xlane.f32.xlu0 %v1276
        %v1319 = vpop.xlane.xlu0 %1318
        %1320 = vmax.xlane.f32.xlu0 %v1279
        %v1321 = vpop.xlane.xlu0 %1320
        %1322 = vmax.xlane.f32.xlu0 %v1284
        %v1323 = vpop.xlane.xlu0 %1322
        %1324 = vmax.xlane.f32.xlu0 %v1287
        %v1325 = vpop.xlane.xlu0 %1324
        %1326 = vmax.xlane.f32.xlu0 %v1292
        %v1327 = vpop.xlane.xlu0 %1326
        %1328 = vmax.xlane.f32.xlu0 %v1295
        %v1329 = vpop.xlane.xlu0 %1328
        %v1330 = vsub.f32 -inf, %v1299
        %v1331 = vsub.f32 -inf, %v1301
        %v1332 = vsub.f32 -inf, %v1303
        %v1333 = vsub.f32 -inf, %v1305
        %v1334 = vsub.f32 -inf, %v1307
        %v1335 = vsub.f32 -inf, %v1309
        %v1336 = vsub.f32 -inf, %v1311
        %v1337 = vsub.f32 -inf, %v1313
        %v1338 = vsub.f32 -inf, %v1315
        %v1339 = vsub.f32 -inf, %v1317
        %v1340 = vsub.f32 -inf, %v1319
        %v1341 = vsub.f32 -inf, %v1321
        %v1342 = vsub.f32 -inf, %v1323
        %v1343 = vsub.f32 -inf, %v1325
        %v1344 = vsub.f32 -inf, %v1327
        %v1345 = vsub.f32 -inf, %v1329
        %v1346 = vmul.f32 %v1330, 1.442695
        %v1347 = vpow.pop %v1346
        %v1348 = vmul.f32 %v1331, 1.442695
        %v1349 = vpow.pop %v1348
        %v1350 = vmul.f32 %v1332, 1.442695
        %v1351 = vpow.pop %v1350
        %v1352 = vmul.f32 %v1333, 1.442695
        %v1353 = vpow.pop %v1352
        %v1354 = vmul.f32 %v1334, 1.442695
        %v1355 = vpow.pop %v1354
        %v1356 = vmul.f32 %v1335, 1.442695
        %v1357 = vpow.pop %v1356
        %v1358 = vmul.f32 %v1336, 1.442695
        %v1359 = vpow.pop %v1358
        %v1360 = vmul.f32 %v1337, 1.442695
        %v1361 = vpow.pop %v1360
        %v1362 = vmul.f32 %v1338, 1.442695
        %v1363 = vpow.pop %v1362
        %v1364 = vmul.f32 %v1339, 1.442695
        %v1365 = vpow.pop %v1364
        %v1366 = vmul.f32 %v1340, 1.442695
        %v1367 = vpow.pop %v1366
        %v1368 = vmul.f32 %v1341, 1.442695
        %v1369 = vpow.pop %v1368
        %v1370 = vmul.f32 %v1342, 1.442695
        %v1371 = vpow.pop %v1370
        %v1372 = vmul.f32 %v1343, 1.442695
        %v1373 = vpow.pop %v1372
        %v1374 = vmul.f32 %v1344, 1.442695
        %v1375 = vpow.pop %v1374
        %v1376 = vmul.f32 %v1345, 1.442695
        %v1377 = vpow.pop %v1376
        %v1378 = vsub.f32 %v1236, %v1299
        %v1379 = vsub.f32 %v1239, %v1301
        %v1380 = vsub.f32 %v1244, %v1303
        %v1381 = vsub.f32 %v1247, %v1305
        %v1382 = vsub.f32 %v1252, %v1307
        %v1383 = vsub.f32 %v1255, %v1309
        %v1384 = vsub.f32 %v1260, %v1311
        %v1385 = vsub.f32 %v1263, %v1313
        %v1386 = vsub.f32 %v1268, %v1315
        %v1387 = vsub.f32 %v1271, %v1317
        %v1388 = vsub.f32 %v1276, %v1319
        %v1389 = vsub.f32 %v1279, %v1321
        %v1390 = vsub.f32 %v1284, %v1323
        %v1391 = vsub.f32 %v1287, %v1325
        %v1392 = vsub.f32 %v1292, %v1327
        %v1393 = vsub.f32 %v1295, %v1329
        %v1394 = vmul.f32 %v1378, 1.442695
        %v1395 = vpow.pop %v1394
        %v1396 = vmul.f32 %v1379, 1.442695
        %v1397 = vpow.pop %v1396
        %v1398 = vmul.f32 %v1380, 1.442695
        %v1399 = vpow.pop %v1398
        %v1400 = vmul.f32 %v1381, 1.442695
        %v1401 = vpow.pop %v1400
        %v1402 = vmul.f32 %v1382, 1.442695
        %v1403 = vpow.pop %v1402
        %v1404 = vmul.f32 %v1383, 1.442695
        %v1405 = vpow.pop %v1404
        %v1406 = vmul.f32 %v1384, 1.442695
        %v1407 = vpow.pop %v1406
        %v1408 = vmul.f32 %v1385, 1.442695
        %v1409 = vpow.pop %v1408
        %v1410 = vmul.f32 %v1386, 1.442695
        %v1411 = vpow.pop %v1410
        %v1412 = vmul.f32 %v1387, 1.442695
        %v1413 = vpow.pop %v1412
        %v1414 = vmul.f32 %v1388, 1.442695
        %v1415 = vpow.pop %v1414
        %v1416 = vmul.f32 %v1389, 1.442695
        %v1417 = vpow.pop %v1416
        %v1418 = vmul.f32 %v1390, 1.442695
        %v1419 = vpow.pop %v1418
        %v1420 = vmul.f32 %v1391, 1.442695
        %v1421 = vpow.pop %v1420
        %v1422 = vmul.f32 %v1392, 1.442695
        %v1423 = vpow.pop %v1422
        %v1424 = vmul.f32 %v1393, 1.442695
        %v1425 = vpow.pop %v1424
        %v1426 = vmul.f32 %v1347, 0.0
        %v1427 = vmul.f32 %v1349, 0.0
        %v1428 = vmul.f32 %v1351, 0.0
        %v1429 = vmul.f32 %v1353, 0.0
        %v1430 = vmul.f32 %v1355, 0.0
        %v1431 = vmul.f32 %v1357, 0.0
        %v1432 = vmul.f32 %v1359, 0.0
        %v1433 = vmul.f32 %v1361, 0.0
        %v1434 = vmul.f32 %v1363, 0.0
        %v1435 = vmul.f32 %v1365, 0.0
        %v1436 = vmul.f32 %v1367, 0.0
        %v1437 = vmul.f32 %v1369, 0.0
        %v1438 = vmul.f32 %v1371, 0.0
        %v1439 = vmul.f32 %v1373, 0.0
        %v1440 = vmul.f32 %v1375, 0.0
        %v1441 = vmul.f32 %v1377, 0.0
        %1442 = vadd.xlane.f32.xlu0 %v1395
        %v1443 = vpop.xlane.xlu0 %1442
        %1444 = vadd.xlane.f32.xlu0 %v1397
        %v1445 = vpop.xlane.xlu0 %1444
        %1446 = vadd.xlane.f32.xlu0 %v1399
        %v1447 = vpop.xlane.xlu0 %1446
        %1448 = vadd.xlane.f32.xlu0 %v1401
        %v1449 = vpop.xlane.xlu0 %1448
        %1450 = vadd.xlane.f32.xlu0 %v1403
        %v1451 = vpop.xlane.xlu0 %1450
        %1452 = vadd.xlane.f32.xlu0 %v1405
        %v1453 = vpop.xlane.xlu0 %1452
        %1454 = vadd.xlane.f32.xlu0 %v1407
        %v1455 = vpop.xlane.xlu0 %1454
        %1456 = vadd.xlane.f32.xlu0 %v1409
        %v1457 = vpop.xlane.xlu0 %1456
        %1458 = vadd.xlane.f32.xlu0 %v1411
        %v1459 = vpop.xlane.xlu0 %1458
        %1460 = vadd.xlane.f32.xlu0 %v1413
        %v1461 = vpop.xlane.xlu0 %1460
        %1462 = vadd.xlane.f32.xlu0 %v1415
        %v1463 = vpop.xlane.xlu0 %1462
        %1464 = vadd.xlane.f32.xlu0 %v1417
        %v1465 = vpop.xlane.xlu0 %1464
        %1466 = vadd.xlane.f32.xlu0 %v1419
        %v1467 = vpop.xlane.xlu0 %1466
        %1468 = vadd.xlane.f32.xlu0 %v1421
        %v1469 = vpop.xlane.xlu0 %1468
        %1470 = vadd.xlane.f32.xlu0 %v1423
        %v1471 = vpop.xlane.xlu0 %1470
        %1472 = vadd.xlane.f32.xlu0 %v1425
        %v1473 = vpop.xlane.xlu0 %1472
        %v1474 = vadd.f32 %v1426, %v1443
        %v1475 = vadd.f32 %v1427, %v1445
        %v1476 = vadd.f32 %v1428, %v1447
        %v1477 = vadd.f32 %v1429, %v1449
        %v1478 = vadd.f32 %v1430, %v1451
        %v1479 = vadd.f32 %v1431, %v1453
        %v1480 = vadd.f32 %v1432, %v1455
        %v1481 = vadd.f32 %v1433, %v1457
        %v1482 = vadd.f32 %v1434, %v1459
        %v1483 = vadd.f32 %v1435, %v1461
        %v1484 = vadd.f32 %v1436, %v1463
        %v1485 = vadd.f32 %v1437, %v1465
        %v1486 = vadd.f32 %v1438, %v1467
        %v1487 = vadd.f32 %v1439, %v1469
        %v1488 = vadd.f32 %v1440, %v1471
        %v1489 = vadd.f32 %v1441, %v1473
        %v1490 = vpack.c.bf16 %v1397, %v1395
        %v1491 = vpack.c.bf16 %v1401, %v1399
        %v1492 = vpack.c.bf16 %v1405, %v1403
        %v1493 = vpack.c.bf16 %v1409, %v1407
        %v1494 = vpack.c.bf16 %v1413, %v1411
        %v1495 = vpack.c.bf16 %v1417, %v1415
        %v1496 = vpack.c.bf16 %v1421, %v1419
        %v1497 = vpack.c.bf16 %v1425, %v1423
        %1498 = vmatprep.subr.bf16.mxu0 0
        %1499 = vmatpush1.bf16.msra.mxu0 %v1186
        %1500 = vmatprep.subr.bf16.mxu0 0
        %1501 = vmatpush1.bf16.msra.mxu0 %v1187
        %1502 = vmatprep.subr.bf16.mxu0 0
        %1503 = vmatpush1.bf16.msra.mxu0 %v1188
        %1504 = vmatprep.subr.bf16.mxu0 0
        %1505 = vmatpush1.bf16.msra.mxu0 %v1189
        %1506 = vmatprep.subr.bf16.mxu0 0
        %1507 = vmatpush1.bf16.msra.mxu0 %v1190
        %1508 = vmatprep.subr.bf16.mxu0 0
        %1509 = vmatpush1.bf16.msra.mxu0 %v1191
        %1510 = vmatprep.subr.bf16.mxu0 0
        %1511 = vmatpush1.bf16.msra.mxu0 %v1192
        %1512 = vmatprep.subr.bf16.mxu0 0
        %1513 = vmatpush1.bf16.msra.mxu0 %v1193
        %1514 = vmatprep.subr.bf16.mxu0 0
        %1515 = vmatpush1.bf16.msra.mxu0 0
        %1516 = vmatprep.subr.bf16.mxu0 0
        %1517 = vmatpush1.bf16.msra.mxu0 0
        %1518 = vmatprep.subr.bf16.mxu0 0
        %1519 = vmatpush1.bf16.msra.mxu0 0
        %1520 = vmatprep.subr.bf16.mxu0 0
        %1521 = vmatpush1.bf16.msra.mxu0 0
        %1522 = vmatprep.subr.bf16.mxu0 0
        %1523 = vmatpush1.bf16.msra.mxu0 0
        %1524 = vmatprep.subr.bf16.mxu0 0
        %1525 = vmatpush1.bf16.msra.mxu0 0
        %1526 = vmatprep.subr.bf16.mxu0 0
        %1527 = vmatpush1.bf16.msra.mxu0 0
        %1528 = vmatprep.subr.bf16.mxu0 0
        %1529 = vmatpush1.bf16.msra.mxu0 0
        %1530 = vmatprep.mubr.bf16.mxu0 0
        %1531 = vmatmul.mubr.bf16.gmra.mrb[0].mxu0 %v1490
        %v1532 = vpop.f32.mrb[0].mxu0
        %v1533 = vadd.f32 0.0, %v1532
        %v1534 = vpop.f32.mrb[0].mxu0
        %v1535 = vpop.f32.mrb[0].mxu0
        %v1536 = vadd.f32 0.0, %v1535
        %v1537 = vpop.f32.mrb[0].mxu0
        %1538 = vmatprep.mubr.bf16.mxu0 0
        %1539 = vmatmul.mubr.bf16.gmra.mrb[0].mxu0 %v1491
        %v1540 = vpop.f32.mrb[0].mxu0
        %v1541 = vadd.f32 0.0, %v1540
        %v1542 = vpop.f32.mrb[0].mxu0
        %v1543 = vpop.f32.mrb[0].mxu0
        %v1544 = vadd.f32 0.0, %v1543
        %v1545 = vpop.f32.mrb[0].mxu0
        %1546 = vmatprep.mubr.bf16.mxu0 0
        %1547 = vmatmul.mubr.bf16.gmra.mrb[0].mxu0 %v1492
        %v1548 = vpop.f32.mrb[0].mxu0
        %v1549 = vadd.f32 0.0, %v1548
        %v1550 = vpop.f32.mrb[0].mxu0
        %v1551 = vpop.f32.mrb[0].mxu0
        %v1552 = vadd.f32 0.0, %v1551
        %v1553 = vpop.f32.mrb[0].mxu0
        %1554 = vmatprep.mubr.bf16.mxu0 0
        %1555 = vmatmul.mubr.bf16.gmra.mrb[0].mxu0 %v1493
        %v1556 = vpop.f32.mrb[0].mxu0
        %v1557 = vadd.f32 0.0, %v1556
        %v1558 = vpop.f32.mrb[0].mxu0
        %v1559 = vpop.f32.mrb[0].mxu0
        %v1560 = vadd.f32 0.0, %v1559
        %v1561 = vpop.f32.mrb[0].mxu0
        %1562 = vmatprep.mubr.bf16.mxu0 0
        %1563 = vmatmul.mubr.bf16.gmra.mrb[0].mxu0 %v1494
        %v1564 = vpop.f32.mrb[0].mxu0
        %v1565 = vadd.f32 0.0, %v1564
        %v1566 = vpop.f32.mrb[0].mxu0
        %v1567 = vpop.f32.mrb[0].mxu0
        %v1568 = vadd.f32 0.0, %v1567
        %v1569 = vpop.f32.mrb[0].mxu0
        %1570 = vmatprep.mubr.bf16.mxu0 0
        %1571 = vmatmul.mubr.bf16.gmra.mrb[0].mxu0 %v1495
        %v1572 = vpop.f32.mrb[0].mxu0
        %v1573 = vadd.f32 0.0, %v1572
        %v1574 = vpop.f32.mrb[0].mxu0
        %v1575 = vpop.f32.mrb[0].mxu0
        %v1576 = vadd.f32 0.0, %v1575
        %v1577 = vpop.f32.mrb[0].mxu0
        %1578 = vmatprep.mubr.bf16.mxu0 0
        %1579 = vmatmul.mubr.bf16.gmra.mrb[0].mxu0 %v1496
        %v1580 = vpop.f32.mrb[0].mxu0
        %v1581 = vadd.f32 0.0, %v1580
        %v1582 = vpop.f32.mrb[0].mxu0
        %v1583 = vpop.f32.mrb[0].mxu0
        %v1584 = vadd.f32 0.0, %v1583
        %v1585 = vpop.f32.mrb[0].mxu0
        %1586 = vmatprep.mubr.bf16.mxu0 0
        %1587 = vmatmul.mubr.bf16.gmra.mrb[0].mxu0 %v1497
        %v1588 = vpop.f32.mrb[0].mxu0
        %v1589 = vadd.f32 0.0, %v1588
        %v1590 = vpop.f32.mrb[0].mxu0
        %v1591 = vpop.f32.mrb[0].mxu0
        %v1592 = vadd.f32 0.0, %v1591
        %v1593 = vpop.f32.mrb[0].mxu0
        %1594 = vdwg.mxu0
        %v1595 = vadd.f32 %v1426, %v1533
        %v1596 = vadd.f32 %v1427, %v1536
        %v1597 = vadd.f32 %v1428, %v1541
        %v1598 = vadd.f32 %v1429, %v1544
        %v1599 = vadd.f32 %v1430, %v1549
        %v1600 = vadd.f32 %v1431, %v1552
        %v1601 = vadd.f32 %v1432, %v1557
        %v1602 = vadd.f32 %v1433, %v1560
        %v1603 = vadd.f32 %v1434, %v1565
        %v1604 = vadd.f32 %v1435, %v1568
        %v1605 = vadd.f32 %v1436, %v1573
        %v1606 = vadd.f32 %v1437, %v1576
        %v1607 = vadd.f32 %v1438, %v1581
        %v1608 = vadd.f32 %v1439, %v1584
        %v1609 = vadd.f32 %v1440, %v1589
        %v1610 = vadd.f32 %v1441, %v1592
        %v1611 = vrcp.pop %v1474
        %v1612 = vrcp.pop %v1475
        %v1613 = vrcp.pop %v1476
        %v1614 = vrcp.pop %v1477
        %v1615 = vrcp.pop %v1478
        %v1616 = vrcp.pop %v1479
        %v1617 = vrcp.pop %v1480
        %v1618 = vrcp.pop %v1481
        %v1619 = vrcp.pop %v1482
        %v1620 = vrcp.pop %v1483
        %v1621 = vrcp.pop %v1484
        %v1622 = vrcp.pop %v1485
        %v1623 = vrcp.pop %v1486
        %v1624 = vrcp.pop %v1487
        %v1625 = vrcp.pop %v1488
        %v1626 = vrcp.pop %v1489
        %v1627 = vmul.f32 %v1595, %v1611
        %v1628 = vmul.f32 %v1596, %v1612
        %v1629 = vmul.f32 %v1597, %v1613
        %v1630 = vmul.f32 %v1598, %v1614
        %v1631 = vmul.f32 %v1599, %v1615
        %v1632 = vmul.f32 %v1600, %v1616
        %v1633 = vmul.f32 %v1601, %v1617
        %v1634 = vmul.f32 %v1602, %v1618
        %v1635 = vmul.f32 %v1603, %v1619
        %v1636 = vmul.f32 %v1604, %v1620
        %v1637 = vmul.f32 %v1605, %v1621
        %v1638 = vmul.f32 %v1606, %v1622
        %v1639 = vmul.f32 %v1607, %v1623
        %v1640 = vmul.f32 %v1608, %v1624
        %v1641 = vmul.f32 %v1609, %v1625
        %v1642 = vmul.f32 %v1610, %v1626
        %v1643 = vpack.c.bf16 %v1628, %v1627
        %v1644 = vpack.c.bf16 %v1630, %v1629
        %v1645 = vpack.c.bf16 %v1632, %v1631
        %v1646 = vpack.c.bf16 %v1634, %v1633
        %v1647 = vpack.c.bf16 %v1636, %v1635
        %v1648 = vpack.c.bf16 %v1638, %v1637
        %v1649 = vpack.c.bf16 %v1640, %v1639
        %v1650 = vpack.c.bf16 %v1642, %v1641
        %v1651 = vld [vmem:[%s604] sm:$0xf]
        %v1652 = vld [vmem:[%s604 + $0x4] sm:$0xf]
        %v1653 = vld [vmem:[%s604 + $0x8] sm:$0xf]
        %v1654 = vld [vmem:[%s604 + $0xc] sm:$0xf]
        %v1655 = vld [vmem:[%s604 + $0x10] sm:$0xf]
        %v1656 = vld [vmem:[%s604 + $0x14] sm:$0xf]
        %v1657 = vld [vmem:[%s604 + $0x18] sm:$0xf]
        %v1658 = vld [vmem:[%s604 + $0x1c] sm:$0xf]
        %v1659 = vld [vmem:[%s604 + $0x20] sm:$0xf]
        %v1660 = vld [vmem:[%s604 + $0x24] sm:$0xf]
        %v1661 = vld [vmem:[%s604 + $0x28] sm:$0xf]
        %v1662 = vld [vmem:[%s604 + $0x2c] sm:$0xf]
        %v1663 = vld [vmem:[%s604 + $0x30] sm:$0xf]
        %v1664 = vld [vmem:[%s604 + $0x34] sm:$0xf]
        %v1665 = vld [vmem:[%s604 + $0x38] sm:$0xf]
        %v1666 = vld [vmem:[%s604 + $0x3c] sm:$0xf]
        %v1667 = vld [vmem:[%s710] sm:$0x1]
        %v1669 = vlaneseq
        %v1670 = vshrl.u32 %v1669, 7
        %v1671 = vsub.s32 0, %v1670
        %v1672 = vrot.slane %v1667, %v1671
        %v1690 = vunpack.c.l.b16 %v1651
        %v1691 = vunpack.c.l.b16 %v1652
        %v1692 = vunpack.c.l.b16 %v1653
        %v1693 = vunpack.c.l.b16 %v1654
        %v1694 = vunpack.c.l.b16 %v1655
        %v1695 = vunpack.c.l.b16 %v1656
        %v1696 = vunpack.c.l.b16 %v1657
        %v1697 = vunpack.c.l.b16 %v1658
        %v1698 = vunpack.c.l.b16 %v1659
        %v1699 = vunpack.c.l.b16 %v1660
        %v1700 = vunpack.c.l.b16 %v1661
        %v1701 = vunpack.c.l.b16 %v1662
        %v1702 = vunpack.c.l.b16 %v1663
        %v1703 = vunpack.c.l.b16 %v1664
        %v1704 = vunpack.c.l.b16 %v1665
        %v1705 = vunpack.c.l.b16 %v1666
        %v1706 = vpack.c.b16 %v1691, %v1690
        %v1707 = vpack.c.b16 %v1693, %v1692
        %v1708 = vpack.c.b16 %v1695, %v1694
        %v1709 = vpack.c.b16 %v1697, %v1696
        %v1710 = vpack.c.b16 %v1699, %v1698
        %v1711 = vpack.c.b16 %v1701, %v1700
        %v1712 = vpack.c.b16 %v1703, %v1702
        %v1713 = vpack.c.b16 %v1705, %v1704
        %1722 = vmatprep.subr.bf16.mxu0 0
        %1723 = vmatpush1.bf16.msra.mxu0 %v1706
        %1724 = vmatprep.subr.bf16.mxu0 0
        %1725 = vmatpush1.bf16.msra.mxu0 %v1707
        %1726 = vmatprep.subr.bf16.mxu0 0
        %1727 = vmatpush1.bf16.msra.mxu0 %v1708
        %1728 = vmatprep.subr.bf16.mxu0 0
        %1729 = vmatpush1.bf16.msra.mxu0 %v1709
        %1730 = vmatprep.subr.bf16.mxu0 0
        %1731 = vmatpush1.bf16.msra.mxu0 %v1710
        %1732 = vmatprep.subr.bf16.mxu0 0
        %1733 = vmatpush1.bf16.msra.mxu0 %v1711
        %1734 = vmatprep.subr.bf16.mxu0 0
        %1735 = vmatpush1.bf16.msra.mxu0 %v1712
        %1736 = vmatprep.subr.bf16.mxu0 0
        %1737 = vmatpush1.bf16.msra.mxu0 %v1713
        %1738 = vmatprep.subr.bf16.mxu0 0
        %1739 = vmatpush1.bf16.msra.mxu0 0
        %1740 = vmatprep.subr.bf16.mxu0 0
        %1741 = vmatpush1.bf16.msra.mxu0 0
        %1742 = vmatprep.subr.bf16.mxu0 0
        %1743 = vmatpush1.bf16.msra.mxu0 0
        %1744 = vmatprep.subr.bf16.mxu0 0
        %1745 = vmatpush1.bf16.msra.mxu0 0
        %1746 = vmatprep.subr.bf16.mxu0 0
        %1747 = vmatpush1.bf16.msra.mxu0 0
        %1748 = vmatprep.subr.bf16.mxu0 0
        %1749 = vmatpush1.bf16.msra.mxu0 0
        %1750 = vmatprep.subr.bf16.mxu0 0
        %1751 = vmatpush1.bf16.msra.mxu0 0
        %1752 = vmatprep.subr.bf16.mxu0 0
        %1753 = vmatpush1.bf16.msra.mxu0 0
        %1754 = vmatprep.mubr.bf16.mxu0 0
        %1755 = vmatmul.mubr.bf16.gmra.mrb[0].mxu0 %v1643
        %v1756 = vpop.f32.mrb[0].mxu0
        %v1757 = vadd.f32 %v1672, %v1756
        %v1758 = vpop.f32.mrb[0].mxu0
        %v1759 = vpop.f32.mrb[0].mxu0
        %v1760 = vadd.f32 %v1672, %v1759
        %v1761 = vpop.f32.mrb[0].mxu0
        %1762 = vmatprep.mubr.bf16.mxu0 0
        %1763 = vmatmul.mubr.bf16.gmra.mrb[0].mxu0 %v1644
        %v1764 = vpop.f32.mrb[0].mxu0
        %v1765 = vadd.f32 %v1672, %v1764
        %v1766 = vpop.f32.mrb[0].mxu0
        %v1767 = vpop.f32.mrb[0].mxu0
        %v1768 = vadd.f32 %v1672, %v1767
        %v1769 = vpop.f32.mrb[0].mxu0
        %1770 = vmatprep.mubr.bf16.mxu0 0
        %1771 = vmatmul.mubr.bf16.gmra.mrb[0].mxu0 %v1645
        %v1772 = vpop.f32.mrb[0].mxu0
        %v1773 = vadd.f32 %v1672, %v1772
        %v1774 = vpop.f32.mrb[0].mxu0
        %v1775 = vpop.f32.mrb[0].mxu0
        %v1776 = vadd.f32 %v1672, %v1775
        %v1777 = vpop.f32.mrb[0].mxu0
        %1778 = vmatprep.mubr.bf16.mxu0 0
        %1779 = vmatmul.mubr.bf16.gmra.mrb[0].mxu0 %v1646
        %v1780 = vpop.f32.mrb[0].mxu0
        %v1781 = vadd.f32 %v1672, %v1780
        %v1782 = vpop.f32.mrb[0].mxu0
        %v1783 = vpop.f32.mrb[0].mxu0
        %v1784 = vadd.f32 %v1672, %v1783
        %v1785 = vpop.f32.mrb[0].mxu0
        %1786 = vmatprep.mubr.bf16.mxu0 0
        %1787 = vmatmul.mubr.bf16.gmra.mrb[0].mxu0 %v1647
        %v1788 = vpop.f32.mrb[0].mxu0
        %v1789 = vadd.f32 %v1672, %v1788
        %v1790 = vpop.f32.mrb[0].mxu0
        %v1791 = vpop.f32.mrb[0].mxu0
        %v1792 = vadd.f32 %v1672, %v1791
        %v1793 = vpop.f32.mrb[0].mxu0
        %1794 = vmatprep.mubr.bf16.mxu0 0
        %1795 = vmatmul.mubr.bf16.gmra.mrb[0].mxu0 %v1648
        %v1796 = vpop.f32.mrb[0].mxu0
        %v1797 = vadd.f32 %v1672, %v1796
        %v1798 = vpop.f32.mrb[0].mxu0
        %v1799 = vpop.f32.mrb[0].mxu0
        %v1800 = vadd.f32 %v1672, %v1799
        %v1801 = vpop.f32.mrb[0].mxu0
        %1802 = vmatprep.mubr.bf16.mxu0 0
        %1803 = vmatmul.mubr.bf16.gmra.mrb[0].mxu0 %v1649
        %v1804 = vpop.f32.mrb[0].mxu0
        %v1805 = vadd.f32 %v1672, %v1804
        %v1806 = vpop.f32.mrb[0].mxu0
        %v1807 = vpop.f32.mrb[0].mxu0
        %v1808 = vadd.f32 %v1672, %v1807
        %v1809 = vpop.f32.mrb[0].mxu0
        %1810 = vmatprep.mubr.bf16.mxu0 0
        %1811 = vmatmul.mubr.bf16.gmra.mrb[0].mxu0 %v1650
        %v1812 = vpop.f32.mrb[0].mxu0
        %v1813 = vadd.f32 %v1672, %v1812
        %v1814 = vpop.f32.mrb[0].mxu0
        %v1815 = vpop.f32.mrb[0].mxu0
        %v1816 = vadd.f32 %v1672, %v1815
        %v1817 = vpop.f32.mrb[0].mxu0
        %1818 = vdwg.mxu0
        %v1819 = vld [vmem:[%s714] sm:$0xf]
        %v1820 = vadd.f32 %v759, %v1757
        %v1821 = vadd.f32 %v760, %v1760
        %v1822 = vadd.f32 %v761, %v1765
        %v1823 = vadd.f32 %v762, %v1768
        %v1824 = vadd.f32 %v763, %v1773
        %v1825 = vadd.f32 %v764, %v1776
        %v1826 = vadd.f32 %v765, %v1781
        %v1827 = vadd.f32 %v766, %v1784
        %v1828 = vadd.f32 %v767, %v1789
        %v1829 = vadd.f32 %v768, %v1792
        %v1830 = vadd.f32 %v769, %v1797
        %v1831 = vadd.f32 %v770, %v1800
        %v1832 = vadd.f32 %v771, %v1805
        %v1833 = vadd.f32 %v772, %v1808
        %v1834 = vadd.f32 %v773, %v1813
        %v1835 = vadd.f32 %v774, %v1816
        %1836 = vadd.xlane.f32.xlu0 %v1820
        %v1837 = vpop.xlane.xlu0 %1836
        %1838 = vadd.xlane.f32.xlu0 %v1821
        %v1839 = vpop.xlane.xlu0 %1838
        %1840 = vadd.xlane.f32.xlu0 %v1822
        %v1841 = vpop.xlane.xlu0 %1840
        %1842 = vadd.xlane.f32.xlu0 %v1823
        %v1843 = vpop.xlane.xlu0 %1842
        %1844 = vadd.xlane.f32.xlu0 %v1824
        %v1845 = vpop.xlane.xlu0 %1844
        %1846 = vadd.xlane.f32.xlu0 %v1825
        %v1847 = vpop.xlane.xlu0 %1846
        %1848 = vadd.xlane.f32.xlu0 %v1826
        %v1849 = vpop.xlane.xlu0 %1848
        %1850 = vadd.xlane.f32.xlu0 %v1827
        %v1851 = vpop.xlane.xlu0 %1850
        %1852 = vadd.xlane.f32.xlu0 %v1828
        %v1853 = vpop.xlane.xlu0 %1852
        %1854 = vadd.xlane.f32.xlu0 %v1829
        %v1855 = vpop.xlane.xlu0 %1854
        %1856 = vadd.xlane.f32.xlu0 %v1830
        %v1857 = vpop.xlane.xlu0 %1856
        %1858 = vadd.xlane.f32.xlu0 %v1831
        %v1859 = vpop.xlane.xlu0 %1858
        %1860 = vadd.xlane.f32.xlu0 %v1832
        %v1861 = vpop.xlane.xlu0 %1860
        %1862 = vadd.xlane.f32.xlu0 %v1833
        %v1863 = vpop.xlane.xlu0 %1862
        %1864 = vadd.xlane.f32.xlu0 %v1834
        %v1865 = vpop.xlane.xlu0 %1864
        %1866 = vadd.xlane.f32.xlu0 %v1835
        %v1867 = vpop.xlane.xlu0 %1866
        %v1868 = vrcp.pop 128.0
        %v1869 = vmul.f32 %v1837, %v1868
        %v1870 = vmul.f32 %v1839, %v1868
        %v1871 = vmul.f32 %v1841, %v1868
        %v1872 = vmul.f32 %v1843, %v1868
        %v1873 = vmul.f32 %v1845, %v1868
        %v1874 = vmul.f32 %v1847, %v1868
        %v1875 = vmul.f32 %v1849, %v1868
        %v1876 = vmul.f32 %v1851, %v1868
        %v1877 = vmul.f32 %v1853, %v1868
        %v1878 = vmul.f32 %v1855, %v1868
        %v1879 = vmul.f32 %v1857, %v1868
        %v1880 = vmul.f32 %v1859, %v1868
        %v1881 = vmul.f32 %v1861, %v1868
        %v1882 = vmul.f32 %v1863, %v1868
        %v1883 = vmul.f32 %v1865, %v1868
        %v1884 = vmul.f32 %v1867, %v1868
        %v1885 = vsub.f32 %v1820, %v1869
        %v1886 = vsub.f32 %v1821, %v1870
        %v1887 = vsub.f32 %v1822, %v1871
        %v1888 = vsub.f32 %v1823, %v1872
        %v1889 = vsub.f32 %v1824, %v1873
        %v1890 = vsub.f32 %v1825, %v1874
        %v1891 = vsub.f32 %v1826, %v1875
        %v1892 = vsub.f32 %v1827, %v1876
        %v1893 = vsub.f32 %v1828, %v1877
        %v1894 = vsub.f32 %v1829, %v1878
        %v1895 = vsub.f32 %v1830, %v1879
        %v1896 = vsub.f32 %v1831, %v1880
        %v1897 = vsub.f32 %v1832, %v1881
        %v1898 = vsub.f32 %v1833, %v1882
        %v1899 = vsub.f32 %v1834, %v1883
        %v1900 = vsub.f32 %v1835, %v1884
        %v1901 = vmul.f32 %v1885, %v1885
        %v1902 = vmul.f32 %v1886, %v1886
        %v1903 = vmul.f32 %v1887, %v1887
        %v1904 = vmul.f32 %v1888, %v1888
        %v1905 = vmul.f32 %v1889, %v1889
        %v1906 = vmul.f32 %v1890, %v1890
        %v1907 = vmul.f32 %v1891, %v1891
        %v1908 = vmul.f32 %v1892, %v1892
        %v1909 = vmul.f32 %v1893, %v1893
        %v1910 = vmul.f32 %v1894, %v1894
        %v1911 = vmul.f32 %v1895, %v1895
        %v1912 = vmul.f32 %v1896, %v1896
        %v1913 = vmul.f32 %v1897, %v1897
        %v1914 = vmul.f32 %v1898, %v1898
        %v1915 = vmul.f32 %v1899, %v1899
        %v1916 = vmul.f32 %v1900, %v1900
        %1917 = vadd.xlane.f32.xlu0 %v1901
        %v1918 = vpop.xlane.xlu0 %1917
        %1919 = vadd.xlane.f32.xlu0 %v1902
        %v1920 = vpop.xlane.xlu0 %1919
        %1921 = vadd.xlane.f32.xlu0 %v1903
        %v1922 = vpop.xlane.xlu0 %1921
        %1923 = vadd.xlane.f32.xlu0 %v1904
        %v1924 = vpop.xlane.xlu0 %1923
        %1925 = vadd.xlane.f32.xlu0 %v1905
        %v1926 = vpop.xlane.xlu0 %1925
        %1927 = vadd.xlane.f32.xlu0 %v1906
        %v1928 = vpop.xlane.xlu0 %1927
        %1929 = vadd.xlane.f32.xlu0 %v1907
        %v1930 = vpop.xlane.xlu0 %1929
        %1931 = vadd.xlane.f32.xlu0 %v1908
        %v1932 = vpop.xlane.xlu0 %1931
        %1933 = vadd.xlane.f32.xlu0 %v1909
        %v1934 = vpop.xlane.xlu0 %1933
        %1935 = vadd.xlane.f32.xlu0 %v1910
        %v1936 = vpop.xlane.xlu0 %1935
        %1937 = vadd.xlane.f32.xlu0 %v1911
        %v1938 = vpop.xlane.xlu0 %1937
        %1939 = vadd.xlane.f32.xlu0 %v1912
        %v1940 = vpop.xlane.xlu0 %1939
        %1941 = vadd.xlane.f32.xlu0 %v1913
        %v1942 = vpop.xlane.xlu0 %1941
        %1943 = vadd.xlane.f32.xlu0 %v1914
        %v1944 = vpop.xlane.xlu0 %1943
        %1945 = vadd.xlane.f32.xlu0 %v1915
        %v1946 = vpop.xlane.xlu0 %1945
        %1947 = vadd.xlane.f32.xlu0 %v1916
        %v1948 = vpop.xlane.xlu0 %1947
        %v1949 = vmul.f32 %v1918, %v1868
        %v1950 = vmul.f32 %v1920, %v1868
        %v1951 = vmul.f32 %v1922, %v1868
        %v1952 = vmul.f32 %v1924, %v1868
        %v1953 = vmul.f32 %v1926, %v1868
        %v1954 = vmul.f32 %v1928, %v1868
        %v1955 = vmul.f32 %v1930, %v1868
        %v1956 = vmul.f32 %v1932, %v1868
        %v1957 = vmul.f32 %v1934, %v1868
        %v1958 = vmul.f32 %v1936, %v1868
        %v1959 = vmul.f32 %v1938, %v1868
        %v1960 = vmul.f32 %v1940, %v1868
        %v1961 = vmul.f32 %v1942, %v1868
        %v1962 = vmul.f32 %v1944, %v1868
        %v1963 = vmul.f32 %v1946, %v1868
        %v1964 = vmul.f32 %v1948, %v1868
        %v1965 = vadd.f32 %v1949, 1e-05
        %v1966 = vadd.f32 %v1950, 1e-05
        %v1967 = vadd.f32 %v1951, 1e-05
        %v1968 = vadd.f32 %v1952, 1e-05
        %v1969 = vadd.f32 %v1953, 1e-05
        %v1970 = vadd.f32 %v1954, 1e-05
        %v1971 = vadd.f32 %v1955, 1e-05
        %v1972 = vadd.f32 %v1956, 1e-05
        %v1973 = vadd.f32 %v1957, 1e-05
        %v1974 = vadd.f32 %v1958, 1e-05
        %v1975 = vadd.f32 %v1959, 1e-05
        %v1976 = vadd.f32 %v1960, 1e-05
        %v1977 = vadd.f32 %v1961, 1e-05
        %v1978 = vadd.f32 %v1962, 1e-05
        %v1979 = vadd.f32 %v1963, 1e-05
        %v1980 = vadd.f32 %v1964, 1e-05
        %v1981 = vrsqrt.pop %v1965
        %v1982 = vrsqrt.pop %v1966
        %v1983 = vrsqrt.pop %v1967
        %v1984 = vrsqrt.pop %v1968
        %v1985 = vrsqrt.pop %v1969
        %v1986 = vrsqrt.pop %v1970
        %v1987 = vrsqrt.pop %v1971
        %v1988 = vrsqrt.pop %v1972
        %v1989 = vrsqrt.pop %v1973
        %v1990 = vrsqrt.pop %v1974
        %v1991 = vrsqrt.pop %v1975
        %v1992 = vrsqrt.pop %v1976
        %v1993 = vrsqrt.pop %v1977
        %v1994 = vrsqrt.pop %v1978
        %v1995 = vrsqrt.pop %v1979
        %v1996 = vrsqrt.pop %v1980
        %v1997 = vmul.f32 %v1885, %v1981
        %v1998 = vmul.f32 %v1886, %v1982
        %v1999 = vmul.f32 %v1887, %v1983
        %v2000 = vmul.f32 %v1888, %v1984
        %v2001 = vmul.f32 %v1889, %v1985
        %v2002 = vmul.f32 %v1890, %v1986
        %v2003 = vmul.f32 %v1891, %v1987
        %v2004 = vmul.f32 %v1892, %v1988
        %v2005 = vmul.f32 %v1893, %v1989
        %v2006 = vmul.f32 %v1894, %v1990
        %v2007 = vmul.f32 %v1895, %v1991
        %v2008 = vmul.f32 %v1896, %v1992
        %v2009 = vmul.f32 %v1897, %v1993
        %v2010 = vmul.f32 %v1898, %v1994
        %v2011 = vmul.f32 %v1899, %v1995
        %v2012 = vmul.f32 %v1900, %v1996
        %v2013 = vlaneseq
        %v2014 = vshrl.u32 %v2013, 7
        %v2015 = vsub.s32 0, %v2014
        %v2016 = vrot.slane %v1819, %v2015
        %v2017 = vmul.f32 %v1997, %v2016
        %v2018 = vmul.f32 %v1998, %v2016
        %v2019 = vmul.f32 %v1999, %v2016
        %v2020 = vmul.f32 %v2000, %v2016
        %v2021 = vmul.f32 %v2001, %v2016
        %v2022 = vmul.f32 %v2002, %v2016
        %v2023 = vmul.f32 %v2003, %v2016
        %v2024 = vmul.f32 %v2004, %v2016
        %v2025 = vmul.f32 %v2005, %v2016
        %v2026 = vmul.f32 %v2006, %v2016
        %v2027 = vmul.f32 %v2007, %v2016
        %v2028 = vmul.f32 %v2008, %v2016
        %v2029 = vmul.f32 %v2009, %v2016
        %v2030 = vmul.f32 %v2010, %v2016
        %v2031 = vmul.f32 %v2011, %v2016
        %v2032 = vmul.f32 %v2012, %v2016
        %v2033 = vlaneseq
        %v2034 = vshrl.u32 %v2033, 7
        %v2035 = vsub.s32 1, %v2034
        %v2036 = vrot.slane %v1819, %v2035
        %v2037 = vadd.f32 %v2017, %v2036
        %v2038 = vadd.f32 %v2018, %v2036
        %v2039 = vadd.f32 %v2019, %v2036
        %v2040 = vadd.f32 %v2020, %v2036
        %v2041 = vadd.f32 %v2021, %v2036
        %v2042 = vadd.f32 %v2022, %v2036
        %v2043 = vadd.f32 %v2023, %v2036
        %v2044 = vadd.f32 %v2024, %v2036
        %v2045 = vadd.f32 %v2025, %v2036
        %v2046 = vadd.f32 %v2026, %v2036
        %v2047 = vadd.f32 %v2027, %v2036
        %v2048 = vadd.f32 %v2028, %v2036
        %v2049 = vadd.f32 %v2029, %v2036
        %v2050 = vadd.f32 %v2030, %v2036
        %v2051 = vadd.f32 %v2031, %v2036
        %v2052 = vadd.f32 %v2032, %v2036
        %v2053 = vpack.c.bf16 %v2038, %v2037
        %v2054 = vpack.c.bf16 %v2040, %v2039
        %v2055 = vpack.c.bf16 %v2042, %v2041
        %v2056 = vpack.c.bf16 %v2044, %v2043
        %v2057 = vpack.c.bf16 %v2046, %v2045
        %v2058 = vpack.c.bf16 %v2048, %v2047
        %v2059 = vpack.c.bf16 %v2050, %v2049
        %v2060 = vpack.c.bf16 %v2052, %v2051
        %v2061 = vld [vmem:[%s613] sm:$0xff]
        %v2062 = vld [vmem:[%s613 + $0x8] sm:$0xff]
        %v2063 = vld [vmem:[%s613 + $0x10] sm:$0xff]
        %v2064 = vld [vmem:[%s613 + $0x18] sm:$0xff]
        %v2065 = vld [vmem:[%s613 + $0x20] sm:$0xff]
        %v2066 = vld [vmem:[%s613 + $0x28] sm:$0xff]
        %v2067 = vld [vmem:[%s613 + $0x30] sm:$0xff]
        %v2068 = vld [vmem:[%s613 + $0x38] sm:$0xff]
        %v2069 = vld [vmem:[%s613 + $0x40] sm:$0xff]
        %v2070 = vld [vmem:[%s613 + $0x48] sm:$0xff]
        %v2071 = vld [vmem:[%s613 + $0x50] sm:$0xff]
        %v2072 = vld [vmem:[%s613 + $0x58] sm:$0xff]
        %v2073 = vld [vmem:[%s613 + $0x60] sm:$0xff]
        %v2074 = vld [vmem:[%s613 + $0x68] sm:$0xff]
        %v2075 = vld [vmem:[%s613 + $0x70] sm:$0xff]
        %v2076 = vld [vmem:[%s613 + $0x78] sm:$0xff]
        %v2077 = vld [vmem:[%s718] sm:$0x3]
        %v2079 = vlaneseq
        %v2080 = vshrl.u32 %v2079, 7
        %v2081 = vsub.s32 0, %v2080
        %v2082 = vrot.slane %v2077, %v2081
        %v2083 = vlaneseq
        %v2084 = vshrl.u32 %v2083, 7
        %v2085 = vsub.s32 1, %v2084
        %v2086 = vrot.slane %v2077, %v2085
        %v2105 = vunpack.c.l.b16 %v2061
        %v2106 = vunpack.c.h.b16 %v2061
        %v2107 = vunpack.c.l.b16 %v2062
        %v2108 = vunpack.c.h.b16 %v2062
        %v2109 = vunpack.c.l.b16 %v2063
        %v2110 = vunpack.c.h.b16 %v2063
        %v2111 = vunpack.c.l.b16 %v2064
        %v2112 = vunpack.c.h.b16 %v2064
        %v2113 = vunpack.c.l.b16 %v2065
        %v2114 = vunpack.c.h.b16 %v2065
        %v2115 = vunpack.c.l.b16 %v2066
        %v2116 = vunpack.c.h.b16 %v2066
        %v2117 = vunpack.c.l.b16 %v2067
        %v2118 = vunpack.c.h.b16 %v2067
        %v2119 = vunpack.c.l.b16 %v2068
        %v2120 = vunpack.c.h.b16 %v2068
        %v2121 = vunpack.c.l.b16 %v2069
        %v2122 = vunpack.c.h.b16 %v2069
        %v2123 = vunpack.c.l.b16 %v2070
        %v2124 = vunpack.c.h.b16 %v2070
        %v2125 = vunpack.c.l.b16 %v2071
        %v2126 = vunpack.c.h.b16 %v2071
        %v2127 = vunpack.c.l.b16 %v2072
        %v2128 = vunpack.c.h.b16 %v2072
        %v2129 = vunpack.c.l.b16 %v2073
        %v2130 = vunpack.c.h.b16 %v2073
        %v2131 = vunpack.c.l.b16 %v2074
        %v2132 = vunpack.c.h.b16 %v2074
        %v2133 = vunpack.c.l.b16 %v2075
        %v2134 = vunpack.c.h.b16 %v2075
        %v2135 = vunpack.c.l.b16 %v2076
        %v2136 = vunpack.c.h.b16 %v2076
        %v2137 = vpack.c.b16 %v2107, %v2105
        %v2138 = vpack.c.b16 %v2108, %v2106
        %v2139 = vpack.c.b16 %v2111, %v2109
        %v2140 = vpack.c.b16 %v2112, %v2110
        %v2141 = vpack.c.b16 %v2115, %v2113
        %v2142 = vpack.c.b16 %v2116, %v2114
        %v2143 = vpack.c.b16 %v2119, %v2117
        %v2144 = vpack.c.b16 %v2120, %v2118
        %v2145 = vpack.c.b16 %v2123, %v2121
        %v2146 = vpack.c.b16 %v2124, %v2122
        %v2147 = vpack.c.b16 %v2127, %v2125
        %v2148 = vpack.c.b16 %v2128, %v2126
        %v2149 = vpack.c.b16 %v2131, %v2129
        %v2150 = vpack.c.b16 %v2132, %v2130
        %v2151 = vpack.c.b16 %v2135, %v2133
        %v2152 = vpack.c.b16 %v2136, %v2134
        %2169 = vmatprep.subr.bf16.mxu0 %v2138
        %2170 = vmatpush1.bf16.msra.mxu0 %v2137
        %2171 = vmatprep.subr.bf16.mxu0 %v2140
        %2172 = vmatpush1.bf16.msra.mxu0 %v2139
        %2173 = vmatprep.subr.bf16.mxu0 %v2142
        %2174 = vmatpush1.bf16.msra.mxu0 %v2141
        %2175 = vmatprep.subr.bf16.mxu0 %v2144
        %2176 = vmatpush1.bf16.msra.mxu0 %v2143
        %2177 = vmatprep.subr.bf16.mxu0 %v2146
        %2178 = vmatpush1.bf16.msra.mxu0 %v2145
        %2179 = vmatprep.subr.bf16.mxu0 %v2148
        %2180 = vmatpush1.bf16.msra.mxu0 %v2147
        %2181 = vmatprep.subr.bf16.mxu0 %v2150
        %2182 = vmatpush1.bf16.msra.mxu0 %v2149
        %2183 = vmatprep.subr.bf16.mxu0 %v2152
        %2184 = vmatpush1.bf16.msra.mxu0 %v2151
        %2185 = vmatprep.subr.bf16.mxu0 0
        %2186 = vmatpush1.bf16.msra.mxu0 0
        %2187 = vmatprep.subr.bf16.mxu0 0
        %2188 = vmatpush1.bf16.msra.mxu0 0
        %2189 = vmatprep.subr.bf16.mxu0 0
        %2190 = vmatpush1.bf16.msra.mxu0 0
        %2191 = vmatprep.subr.bf16.mxu0 0
        %2192 = vmatpush1.bf16.msra.mxu0 0
        %2193 = vmatprep.subr.bf16.mxu0 0
        %2194 = vmatpush1.bf16.msra.mxu0 0
        %2195 = vmatprep.subr.bf16.mxu0 0
        %2196 = vmatpush1.bf16.msra.mxu0 0
        %2197 = vmatprep.subr.bf16.mxu0 0
        %2198 = vmatpush1.bf16.msra.mxu0 0
        %2199 = vmatprep.subr.bf16.mxu0 0
        %2200 = vmatpush1.bf16.msra.mxu0 0
        %2201 = vmatprep.mubr.bf16.mxu0 0
        %2202 = vmatmul.mubr.bf16.gmra.mrb[0].mxu0 %v2053
        %v2203 = vpop.f32.mrb[0].mxu0
        %v2204 = vadd.f32 %v2082, %v2203
        %v2205 = vpop.f32.mrb[0].mxu0
        %v2206 = vadd.f32 %v2086, %v2205
        %v2207 = vpop.f32.mrb[0].mxu0
        %v2208 = vadd.f32 %v2082, %v2207
        %v2209 = vpop.f32.mrb[0].mxu0
        %v2210 = vadd.f32 %v2086, %v2209
        %2211 = vmatprep.mubr.bf16.mxu0 0
        %2212 = vmatmul.mubr.bf16.gmra.mrb[0].mxu0 %v2054
        %v2213 = vpop.f32.mrb[0].mxu0
        %v2214 = vadd.f32 %v2082, %v2213
        %v2215 = vpop.f32.mrb[0].mxu0
        %v2216 = vadd.f32 %v2086, %v2215
        %v2217 = vpop.f32.mrb[0].mxu0
        %v2218 = vadd.f32 %v2082, %v2217
        %v2219 = vpop.f32.mrb[0].mxu0
        %v2220 = vadd.f32 %v2086, %v2219
        %2221 = vmatprep.mubr.bf16.mxu0 0
        %2222 = vmatmul.mubr.bf16.gmra.mrb[0].mxu0 %v2055
        %v2223 = vpop.f32.mrb[0].mxu0
        %v2224 = vadd.f32 %v2082, %v2223
        %v2225 = vpop.f32.mrb[0].mxu0
        %v2226 = vadd.f32 %v2086, %v2225
        %v2227 = vpop.f32.mrb[0].mxu0
        %v2228 = vadd.f32 %v2082, %v2227
        %v2229 = vpop.f32.mrb[0].mxu0
        %v2230 = vadd.f32 %v2086, %v2229
        %2231 = vmatprep.mubr.bf16.mxu0 0
        %2232 = vmatmul.mubr.bf16.gmra.mrb[0].mxu0 %v2056
        %v2233 = vpop.f32.mrb[0].mxu0
        %v2234 = vadd.f32 %v2082, %v2233
        %v2235 = vpop.f32.mrb[0].mxu0
        %v2236 = vadd.f32 %v2086, %v2235
        %v2237 = vpop.f32.mrb[0].mxu0
        %v2238 = vadd.f32 %v2082, %v2237
        %v2239 = vpop.f32.mrb[0].mxu0
        %v2240 = vadd.f32 %v2086, %v2239
        %2241 = vmatprep.mubr.bf16.mxu0 0
        %2242 = vmatmul.mubr.bf16.gmra.mrb[0].mxu0 %v2057
        %v2243 = vpop.f32.mrb[0].mxu0
        %v2244 = vadd.f32 %v2082, %v2243
        %v2245 = vpop.f32.mrb[0].mxu0
        %v2246 = vadd.f32 %v2086, %v2245
        %v2247 = vpop.f32.mrb[0].mxu0
        %v2248 = vadd.f32 %v2082, %v2247
        %v2249 = vpop.f32.mrb[0].mxu0
        %v2250 = vadd.f32 %v2086, %v2249
        %2251 = vmatprep.mubr.bf16.mxu0 0
        %2252 = vmatmul.mubr.bf16.gmra.mrb[0].mxu0 %v2058
        %v2253 = vpop.f32.mrb[0].mxu0
        %v2254 = vadd.f32 %v2082, %v2253
        %v2255 = vpop.f32.mrb[0].mxu0
        %v2256 = vadd.f32 %v2086, %v2255
        %v2257 = vpop.f32.mrb[0].mxu0
        %v2258 = vadd.f32 %v2082, %v2257
        %v2259 = vpop.f32.mrb[0].mxu0
        %v2260 = vadd.f32 %v2086, %v2259
        %2261 = vmatprep.mubr.bf16.mxu0 0
        %2262 = vmatmul.mubr.bf16.gmra.mrb[0].mxu0 %v2059
        %v2263 = vpop.f32.mrb[0].mxu0
        %v2264 = vadd.f32 %v2082, %v2263
        %v2265 = vpop.f32.mrb[0].mxu0
        %v2266 = vadd.f32 %v2086, %v2265
        %v2267 = vpop.f32.mrb[0].mxu0
        %v2268 = vadd.f32 %v2082, %v2267
        %v2269 = vpop.f32.mrb[0].mxu0
        %v2270 = vadd.f32 %v2086, %v2269
        %2271 = vmatprep.mubr.bf16.mxu0 0
        %2272 = vmatmul.mubr.bf16.gmra.mrb[0].mxu0 %v2060
        %v2273 = vpop.f32.mrb[0].mxu0
        %v2274 = vadd.f32 %v2082, %v2273
        %v2275 = vpop.f32.mrb[0].mxu0
        %v2276 = vadd.f32 %v2086, %v2275
        %v2277 = vpop.f32.mrb[0].mxu0
        %v2278 = vadd.f32 %v2082, %v2277
        %v2279 = vpop.f32.mrb[0].mxu0
        %v2280 = vadd.f32 %v2086, %v2279
        %2281 = vdwg.mxu0
        %v2282 = vmax.f32 %v2204, 0.0
        %v2283 = vmax.f32 %v2206, 0.0
        %v2284 = vmax.f32 %v2208, 0.0
        %v2285 = vmax.f32 %v2210, 0.0
        %v2286 = vmax.f32 %v2214, 0.0
        %v2287 = vmax.f32 %v2216, 0.0
        %v2288 = vmax.f32 %v2218, 0.0
        %v2289 = vmax.f32 %v2220, 0.0
        %v2290 = vmax.f32 %v2224, 0.0
        %v2291 = vmax.f32 %v2226, 0.0
        %v2292 = vmax.f32 %v2228, 0.0
        %v2293 = vmax.f32 %v2230, 0.0
        %v2294 = vmax.f32 %v2234, 0.0
        %v2295 = vmax.f32 %v2236, 0.0
        %v2296 = vmax.f32 %v2238, 0.0
        %v2297 = vmax.f32 %v2240, 0.0
        %v2298 = vmax.f32 %v2244, 0.0
        %v2299 = vmax.f32 %v2246, 0.0
        %v2300 = vmax.f32 %v2248, 0.0
        %v2301 = vmax.f32 %v2250, 0.0
        %v2302 = vmax.f32 %v2254, 0.0
        %v2303 = vmax.f32 %v2256, 0.0
        %v2304 = vmax.f32 %v2258, 0.0
        %v2305 = vmax.f32 %v2260, 0.0
        %v2306 = vmax.f32 %v2264, 0.0
        %v2307 = vmax.f32 %v2266, 0.0
        %v2308 = vmax.f32 %v2268, 0.0
        %v2309 = vmax.f32 %v2270, 0.0
        %v2310 = vmax.f32 %v2274, 0.0
        %v2311 = vmax.f32 %v2276, 0.0
        %v2312 = vmax.f32 %v2278, 0.0
        %v2313 = vmax.f32 %v2280, 0.0
        %v2314 = vpack.c.bf16 %v2284, %v2282
        %v2315 = vpack.c.bf16 %v2285, %v2283
        %v2316 = vpack.c.bf16 %v2288, %v2286
        %v2317 = vpack.c.bf16 %v2289, %v2287
        %v2318 = vpack.c.bf16 %v2292, %v2290
        %v2319 = vpack.c.bf16 %v2293, %v2291
        %v2320 = vpack.c.bf16 %v2296, %v2294
        %v2321 = vpack.c.bf16 %v2297, %v2295
        %v2322 = vpack.c.bf16 %v2300, %v2298
        %v2323 = vpack.c.bf16 %v2301, %v2299
        %v2324 = vpack.c.bf16 %v2304, %v2302
        %v2325 = vpack.c.bf16 %v2305, %v2303
        %v2326 = vpack.c.bf16 %v2308, %v2306
        %v2327 = vpack.c.bf16 %v2309, %v2307
        %v2328 = vpack.c.bf16 %v2312, %v2310
        %v2329 = vpack.c.bf16 %v2313, %v2311
        %v2330 = vld [vmem:[%s622] sm:$0xf]
        %v2331 = vld [vmem:[%s622 + $0x4] sm:$0xf]
        %v2332 = vld [vmem:[%s622 + $0x8] sm:$0xf]
        %v2333 = vld [vmem:[%s622 + $0xc] sm:$0xf]
        %v2334 = vld [vmem:[%s622 + $0x10] sm:$0xf]
        %v2335 = vld [vmem:[%s622 + $0x14] sm:$0xf]
        %v2336 = vld [vmem:[%s622 + $0x18] sm:$0xf]
        %v2337 = vld [vmem:[%s622 + $0x1c] sm:$0xf]
        %v2338 = vld [vmem:[%s622 + $0x20] sm:$0xf]
        %v2339 = vld [vmem:[%s622 + $0x24] sm:$0xf]
        %v2340 = vld [vmem:[%s622 + $0x28] sm:$0xf]
        %v2341 = vld [vmem:[%s622 + $0x2c] sm:$0xf]
        %v2342 = vld [vmem:[%s622 + $0x30] sm:$0xf]
        %v2343 = vld [vmem:[%s622 + $0x34] sm:$0xf]
        %v2344 = vld [vmem:[%s622 + $0x38] sm:$0xf]
        %v2345 = vld [vmem:[%s622 + $0x3c] sm:$0xf]
        %v2346 = vld [vmem:[%s622 + $0x40] sm:$0xf]
        %v2347 = vld [vmem:[%s622 + $0x44] sm:$0xf]
        %v2348 = vld [vmem:[%s622 + $0x48] sm:$0xf]
        %v2349 = vld [vmem:[%s622 + $0x4c] sm:$0xf]
        %v2350 = vld [vmem:[%s622 + $0x50] sm:$0xf]
        %v2351 = vld [vmem:[%s622 + $0x54] sm:$0xf]
        %v2352 = vld [vmem:[%s622 + $0x58] sm:$0xf]
        %v2353 = vld [vmem:[%s622 + $0x5c] sm:$0xf]
        %v2354 = vld [vmem:[%s622 + $0x60] sm:$0xf]
        %v2355 = vld [vmem:[%s622 + $0x64] sm:$0xf]
        %v2356 = vld [vmem:[%s622 + $0x68] sm:$0xf]
        %v2357 = vld [vmem:[%s622 + $0x6c] sm:$0xf]
        %v2358 = vld [vmem:[%s622 + $0x70] sm:$0xf]
        %v2359 = vld [vmem:[%s622 + $0x74] sm:$0xf]
        %v2360 = vld [vmem:[%s622 + $0x78] sm:$0xf]
        %v2361 = vld [vmem:[%s622 + $0x7c] sm:$0xf]
        %v2362 = vld [vmem:[%s721] sm:$0x1]
        %v2364 = vlaneseq
        %v2365 = vshrl.u32 %v2364, 7
        %v2366 = vsub.s32 0, %v2365
        %v2367 = vrot.slane %v2362, %v2366
        %v2401 = vunpack.c.l.b16 %v2330
        %v2402 = vunpack.c.l.b16 %v2331
        %v2403 = vunpack.c.l.b16 %v2332
        %v2404 = vunpack.c.l.b16 %v2333
        %v2405 = vunpack.c.l.b16 %v2334
        %v2406 = vunpack.c.l.b16 %v2335
        %v2407 = vunpack.c.l.b16 %v2336
        %v2408 = vunpack.c.l.b16 %v2337
        %v2409 = vunpack.c.l.b16 %v2338
        %v2410 = vunpack.c.l.b16 %v2339
        %v2411 = vunpack.c.l.b16 %v2340
        %v2412 = vunpack.c.l.b16 %v2341
        %v2413 = vunpack.c.l.b16 %v2342
        %v2414 = vunpack.c.l.b16 %v2343
        %v2415 = vunpack.c.l.b16 %v2344
        %v2416 = vunpack.c.l.b16 %v2345
        %v2417 = vunpack.c.l.b16 %v2346
        %v2418 = vunpack.c.l.b16 %v2347
        %v2419 = vunpack.c.l.b16 %v2348
        %v2420 = vunpack.c.l.b16 %v2349
        %v2421 = vunpack.c.l.b16 %v2350
        %v2422 = vunpack.c.l.b16 %v2351
        %v2423 = vunpack.c.l.b16 %v2352
        %v2424 = vunpack.c.l.b16 %v2353
        %v2425 = vunpack.c.l.b16 %v2354
        %v2426 = vunpack.c.l.b16 %v2355
        %v2427 = vunpack.c.l.b16 %v2356
        %v2428 = vunpack.c.l.b16 %v2357
        %v2429 = vunpack.c.l.b16 %v2358
        %v2430 = vunpack.c.l.b16 %v2359
        %v2431 = vunpack.c.l.b16 %v2360
        %v2432 = vunpack.c.l.b16 %v2361
        %v2433 = vpack.c.b16 %v2402, %v2401
        %v2434 = vpack.c.b16 %v2404, %v2403
        %v2435 = vpack.c.b16 %v2406, %v2405
        %v2436 = vpack.c.b16 %v2408, %v2407
        %v2437 = vpack.c.b16 %v2410, %v2409
        %v2438 = vpack.c.b16 %v2412, %v2411
        %v2439 = vpack.c.b16 %v2414, %v2413
        %v2440 = vpack.c.b16 %v2416, %v2415
        %v2441 = vpack.c.b16 %v2418, %v2417
        %v2442 = vpack.c.b16 %v2420, %v2419
        %v2443 = vpack.c.b16 %v2422, %v2421
        %v2444 = vpack.c.b16 %v2424, %v2423
        %v2445 = vpack.c.b16 %v2426, %v2425
        %v2446 = vpack.c.b16 %v2428, %v2427
        %v2447 = vpack.c.b16 %v2430, %v2429
        %v2448 = vpack.c.b16 %v2432, %v2431
        %2465 = vmatprep.subr.bf16.mxu0 0
        %2466 = vmatpush1.bf16.msra.mxu0 %v2433
        %2467 = vmatprep.subr.bf16.mxu0 0
        %2468 = vmatpush1.bf16.msra.mxu0 %v2434
        %2469 = vmatprep.subr.bf16.mxu0 0
        %2470 = vmatpush1.bf16.msra.mxu0 %v2435
        %2471 = vmatprep.subr.bf16.mxu0 0
        %2472 = vmatpush1.bf16.msra.mxu0 %v2436
        %2473 = vmatprep.subr.bf16.mxu0 0
        %2474 = vmatpush1.bf16.msra.mxu0 %v2437
        %2475 = vmatprep.subr.bf16.mxu0 0
        %2476 = vmatpush1.bf16.msra.mxu0 %v2438
        %2477 = vmatprep.subr.bf16.mxu0 0
        %2478 = vmatpush1.bf16.msra.mxu0 %v2439
        %2479 = vmatprep.subr.bf16.mxu0 0
        %2480 = vmatpush1.bf16.msra.mxu0 %v2440
        %2481 = vmatprep.subr.bf16.mxu0 0
        %2482 = vmatpush1.bf16.msra.mxu0 %v2441
        %2483 = vmatprep.subr.bf16.mxu0 0
        %2484 = vmatpush1.bf16.msra.mxu0 %v2442
        %2485 = vmatprep.subr.bf16.mxu0 0
        %2486 = vmatpush1.bf16.msra.mxu0 %v2443
        %2487 = vmatprep.subr.bf16.mxu0 0
        %2488 = vmatpush1.bf16.msra.mxu0 %v2444
        %2489 = vmatprep.subr.bf16.mxu0 0
        %2490 = vmatpush1.bf16.msra.mxu0 %v2445
        %2491 = vmatprep.subr.bf16.mxu0 0
        %2492 = vmatpush1.bf16.msra.mxu0 %v2446
        %2493 = vmatprep.subr.bf16.mxu0 0
        %2494 = vmatpush1.bf16.msra.mxu0 %v2447
        %2495 = vmatprep.subr.bf16.mxu0 0
        %2496 = vmatpush1.bf16.msra.mxu0 %v2448
        %2497 = vmatprep.mubr.bf16.mxu0 %v2315
        %2498 = vmatmul.mubr.bf16.gmra.mrb[0].mxu0 %v2314
        %v2499 = vpop.f32.mrb[0].mxu0
        %v2500 = vadd.f32 %v2367, %v2499
        %v2501 = vpop.f32.mrb[0].mxu0
        %v2502 = vpop.f32.mrb[0].mxu0
        %v2503 = vadd.f32 %v2367, %v2502
        %v2504 = vpop.f32.mrb[0].mxu0
        %2505 = vmatprep.mubr.bf16.mxu0 %v2317
        %2506 = vmatmul.mubr.bf16.gmra.mrb[0].mxu0 %v2316
        %v2507 = vpop.f32.mrb[0].mxu0
        %v2508 = vadd.f32 %v2367, %v2507
        %v2509 = vpop.f32.mrb[0].mxu0
        %v2510 = vpop.f32.mrb[0].mxu0
        %v2511 = vadd.f32 %v2367, %v2510
        %v2512 = vpop.f32.mrb[0].mxu0
        %2513 = vmatprep.mubr.bf16.mxu0 %v2319
        %2514 = vmatmul.mubr.bf16.gmra.mrb[0].mxu0 %v2318
        %v2515 = vpop.f32.mrb[0].mxu0
        %v2516 = vadd.f32 %v2367, %v2515
        %v2517 = vpop.f32.mrb[0].mxu0
        %v2518 = vpop.f32.mrb[0].mxu0
        %v2519 = vadd.f32 %v2367, %v2518
        %v2520 = vpop.f32.mrb[0].mxu0
        %2521 = vmatprep.mubr.bf16.mxu0 %v2321
        %2522 = vmatmul.mubr.bf16.gmra.mrb[0].mxu0 %v2320
        %v2523 = vpop.f32.mrb[0].mxu0
        %v2524 = vadd.f32 %v2367, %v2523
        %v2525 = vpop.f32.mrb[0].mxu0
        %v2526 = vpop.f32.mrb[0].mxu0
        %v2527 = vadd.f32 %v2367, %v2526
        %v2528 = vpop.f32.mrb[0].mxu0
        %2529 = vmatprep.mubr.bf16.mxu0 %v2323
        %2530 = vmatmul.mubr.bf16.gmra.mrb[0].mxu0 %v2322
        %v2531 = vpop.f32.mrb[0].mxu0
        %v2532 = vadd.f32 %v2367, %v2531
        %v2533 = vpop.f32.mrb[0].mxu0
        %v2534 = vpop.f32.mrb[0].mxu0
        %v2535 = vadd.f32 %v2367, %v2534
        %v2536 = vpop.f32.mrb[0].mxu0
        %2537 = vmatprep.mubr.bf16.mxu0 %v2325
        %2538 = vmatmul.mubr.bf16.gmra.mrb[0].mxu0 %v2324
        %v2539 = vpop.f32.mrb[0].mxu0
        %v2540 = vadd.f32 %v2367, %v2539
        %v2541 = vpop.f32.mrb[0].mxu0
        %v2542 = vpop.f32.mrb[0].mxu0
        %v2543 = vadd.f32 %v2367, %v2542
        %v2544 = vpop.f32.mrb[0].mxu0
        %2545 = vmatprep.mubr.bf16.mxu0 %v2327
        %2546 = vmatmul.mubr.bf16.gmra.mrb[0].mxu0 %v2326
        %v2547 = vpop.f32.mrb[0].mxu0
        %v2548 = vadd.f32 %v2367, %v2547
        %v2549 = vpop.f32.mrb[0].mxu0
        %v2550 = vpop.f32.mrb[0].mxu0
        %v2551 = vadd.f32 %v2367, %v2550
        %v2552 = vpop.f32.mrb[0].mxu0
        %2553 = vmatprep.mubr.bf16.mxu0 %v2329
        %2554 = vmatmul.mubr.bf16.gmra.mrb[0].mxu0 %v2328
        %v2555 = vpop.f32.mrb[0].mxu0
        %v2556 = vadd.f32 %v2367, %v2555
        %v2557 = vpop.f32.mrb[0].mxu0
        %v2558 = vpop.f32.mrb[0].mxu0
        %v2559 = vadd.f32 %v2367, %v2558
        %v2560 = vpop.f32.mrb[0].mxu0
        %2561 = vdwg.mxu0
        %v2562 = vadd.f32 %v2037, %v2500
        %v2563 = vadd.f32 %v2038, %v2503
        %v2564 = vadd.f32 %v2039, %v2508
        %v2565 = vadd.f32 %v2040, %v2511
        %v2566 = vadd.f32 %v2041, %v2516
        %v2567 = vadd.f32 %v2042, %v2519
        %v2568 = vadd.f32 %v2043, %v2524
        %v2569 = vadd.f32 %v2044, %v2527
        %v2570 = vadd.f32 %v2045, %v2532
        %v2571 = vadd.f32 %v2046, %v2535
        %v2572 = vadd.f32 %v2047, %v2540
        %v2573 = vadd.f32 %v2048, %v2543
        %v2574 = vadd.f32 %v2049, %v2548
        %v2575 = vadd.f32 %v2050, %v2551
        %v2576 = vadd.f32 %v2051, %v2556
        %v2577 = vadd.f32 %v2052, %v2559
        %2578 = vadd.xlane.f32.xlu0 %v2562
        %v2579 = vpop.xlane.xlu0 %2578
        %2580 = vadd.xlane.f32.xlu0 %v2563
        %v2581 = vpop.xlane.xlu0 %2580
        %2582 = vadd.xlane.f32.xlu0 %v2564
        %v2583 = vpop.xlane.xlu0 %2582
        %2584 = vadd.xlane.f32.xlu0 %v2565
        %v2585 = vpop.xlane.xlu0 %2584
        %2586 = vadd.xlane.f32.xlu0 %v2566
        %v2587 = vpop.xlane.xlu0 %2586
        %2588 = vadd.xlane.f32.xlu0 %v2567
        %v2589 = vpop.xlane.xlu0 %2588
        %2590 = vadd.xlane.f32.xlu0 %v2568
        %v2591 = vpop.xlane.xlu0 %2590
        %2592 = vadd.xlane.f32.xlu0 %v2569
        %v2593 = vpop.xlane.xlu0 %2592
        %2594 = vadd.xlane.f32.xlu0 %v2570
        %v2595 = vpop.xlane.xlu0 %2594
        %2596 = vadd.xlane.f32.xlu0 %v2571
        %v2597 = vpop.xlane.xlu0 %2596
        %2598 = vadd.xlane.f32.xlu0 %v2572
        %v2599 = vpop.xlane.xlu0 %2598
        %2600 = vadd.xlane.f32.xlu0 %v2573
        %v2601 = vpop.xlane.xlu0 %2600
        %2602 = vadd.xlane.f32.xlu0 %v2574
        %v2603 = vpop.xlane.xlu0 %2602
        %2604 = vadd.xlane.f32.xlu0 %v2575
        %v2605 = vpop.xlane.xlu0 %2604
        %2606 = vadd.xlane.f32.xlu0 %v2576
        %v2607 = vpop.xlane.xlu0 %2606
        %2608 = vadd.xlane.f32.xlu0 %v2577
        %v2609 = vpop.xlane.xlu0 %2608
        %v2610 = vmul.f32 %v2579, %v1868
        %v2611 = vmul.f32 %v2581, %v1868
        %v2612 = vmul.f32 %v2583, %v1868
        %v2613 = vmul.f32 %v2585, %v1868
        %v2614 = vmul.f32 %v2587, %v1868
        %v2615 = vmul.f32 %v2589, %v1868
        %v2616 = vmul.f32 %v2591, %v1868
        %v2617 = vmul.f32 %v2593, %v1868
        %v2618 = vmul.f32 %v2595, %v1868
        %v2619 = vmul.f32 %v2597, %v1868
        %v2620 = vmul.f32 %v2599, %v1868
        %v2621 = vmul.f32 %v2601, %v1868
        %v2622 = vmul.f32 %v2603, %v1868
        %v2623 = vmul.f32 %v2605, %v1868
        %v2624 = vmul.f32 %v2607, %v1868
        %v2625 = vmul.f32 %v2609, %v1868
        %v2626 = vsub.f32 %v2562, %v2610
        %v2627 = vsub.f32 %v2563, %v2611
        %v2628 = vsub.f32 %v2564, %v2612
        %v2629 = vsub.f32 %v2565, %v2613
        %v2630 = vsub.f32 %v2566, %v2614
        %v2631 = vsub.f32 %v2567, %v2615
        %v2632 = vsub.f32 %v2568, %v2616
        %v2633 = vsub.f32 %v2569, %v2617
        %v2634 = vsub.f32 %v2570, %v2618
        %v2635 = vsub.f32 %v2571, %v2619
        %v2636 = vsub.f32 %v2572, %v2620
        %v2637 = vsub.f32 %v2573, %v2621
        %v2638 = vsub.f32 %v2574, %v2622
        %v2639 = vsub.f32 %v2575, %v2623
        %v2640 = vsub.f32 %v2576, %v2624
        %v2641 = vsub.f32 %v2577, %v2625
        %v2642 = vmul.f32 %v2626, %v2626
        %v2643 = vmul.f32 %v2627, %v2627
        %v2644 = vmul.f32 %v2628, %v2628
        %v2645 = vmul.f32 %v2629, %v2629
        %v2646 = vmul.f32 %v2630, %v2630
        %v2647 = vmul.f32 %v2631, %v2631
        %v2648 = vmul.f32 %v2632, %v2632
        %v2649 = vmul.f32 %v2633, %v2633
        %v2650 = vmul.f32 %v2634, %v2634
        %v2651 = vmul.f32 %v2635, %v2635
        %v2652 = vmul.f32 %v2636, %v2636
        %v2653 = vmul.f32 %v2637, %v2637
        %v2654 = vmul.f32 %v2638, %v2638
        %v2655 = vmul.f32 %v2639, %v2639
        %v2656 = vmul.f32 %v2640, %v2640
        %v2657 = vmul.f32 %v2641, %v2641
        %2658 = vadd.xlane.f32.xlu0 %v2642
        %v2659 = vpop.xlane.xlu0 %2658
        %2660 = vadd.xlane.f32.xlu0 %v2643
        %v2661 = vpop.xlane.xlu0 %2660
        %2662 = vadd.xlane.f32.xlu0 %v2644
        %v2663 = vpop.xlane.xlu0 %2662
        %2664 = vadd.xlane.f32.xlu0 %v2645
        %v2665 = vpop.xlane.xlu0 %2664
        %2666 = vadd.xlane.f32.xlu0 %v2646
        %v2667 = vpop.xlane.xlu0 %2666
        %2668 = vadd.xlane.f32.xlu0 %v2647
        %v2669 = vpop.xlane.xlu0 %2668
        %2670 = vadd.xlane.f32.xlu0 %v2648
        %v2671 = vpop.xlane.xlu0 %2670
        %2672 = vadd.xlane.f32.xlu0 %v2649
        %v2673 = vpop.xlane.xlu0 %2672
        %2674 = vadd.xlane.f32.xlu0 %v2650
        %v2675 = vpop.xlane.xlu0 %2674
        %2676 = vadd.xlane.f32.xlu0 %v2651
        %v2677 = vpop.xlane.xlu0 %2676
        %2678 = vadd.xlane.f32.xlu0 %v2652
        %v2679 = vpop.xlane.xlu0 %2678
        %2680 = vadd.xlane.f32.xlu0 %v2653
        %v2681 = vpop.xlane.xlu0 %2680
        %2682 = vadd.xlane.f32.xlu0 %v2654
        %v2683 = vpop.xlane.xlu0 %2682
        %2684 = vadd.xlane.f32.xlu0 %v2655
        %v2685 = vpop.xlane.xlu0 %2684
        %2686 = vadd.xlane.f32.xlu0 %v2656
        %v2687 = vpop.xlane.xlu0 %2686
        %2688 = vadd.xlane.f32.xlu0 %v2657
        %v2689 = vpop.xlane.xlu0 %2688
        %v2690 = vmul.f32 %v2659, %v1868
        %v2691 = vmul.f32 %v2661, %v1868
        %v2692 = vmul.f32 %v2663, %v1868
        %v2693 = vmul.f32 %v2665, %v1868
        %v2694 = vmul.f32 %v2667, %v1868
        %v2695 = vmul.f32 %v2669, %v1868
        %v2696 = vmul.f32 %v2671, %v1868
        %v2697 = vmul.f32 %v2673, %v1868
        %v2698 = vmul.f32 %v2675, %v1868
        %v2699 = vmul.f32 %v2677, %v1868
        %v2700 = vmul.f32 %v2679, %v1868
        %v2701 = vmul.f32 %v2681, %v1868
        %v2702 = vmul.f32 %v2683, %v1868
        %v2703 = vmul.f32 %v2685, %v1868
        %v2704 = vmul.f32 %v2687, %v1868
        %v2705 = vmul.f32 %v2689, %v1868
        %v2706 = vadd.f32 %v2690, 1e-05
        %v2707 = vadd.f32 %v2691, 1e-05
        %v2708 = vadd.f32 %v2692, 1e-05
        %v2709 = vadd.f32 %v2693, 1e-05
        %v2710 = vadd.f32 %v2694, 1e-05
        %v2711 = vadd.f32 %v2695, 1e-05
        %v2712 = vadd.f32 %v2696, 1e-05
        %v2713 = vadd.f32 %v2697, 1e-05
        %v2714 = vadd.f32 %v2698, 1e-05
        %v2715 = vadd.f32 %v2699, 1e-05
        %v2716 = vadd.f32 %v2700, 1e-05
        %v2717 = vadd.f32 %v2701, 1e-05
        %v2718 = vadd.f32 %v2702, 1e-05
        %v2719 = vadd.f32 %v2703, 1e-05
        %v2720 = vadd.f32 %v2704, 1e-05
        %v2721 = vadd.f32 %v2705, 1e-05
        %v2722 = vrsqrt.pop %v2706
        %v2723 = vrsqrt.pop %v2707
        %v2724 = vrsqrt.pop %v2708
        %v2725 = vrsqrt.pop %v2709
        %v2726 = vrsqrt.pop %v2710
        %v2727 = vrsqrt.pop %v2711
        %v2728 = vrsqrt.pop %v2712
        %v2729 = vrsqrt.pop %v2713
        %v2730 = vrsqrt.pop %v2714
        %v2731 = vrsqrt.pop %v2715
        %v2732 = vrsqrt.pop %v2716
        %v2733 = vrsqrt.pop %v2717
        %v2734 = vrsqrt.pop %v2718
        %v2735 = vrsqrt.pop %v2719
        %v2736 = vrsqrt.pop %v2720
        %v2737 = vrsqrt.pop %v2721
        %v2738 = vmul.f32 %v2626, %v2722
        %v2739 = vmul.f32 %v2627, %v2723
        %v2740 = vmul.f32 %v2628, %v2724
        %v2741 = vmul.f32 %v2629, %v2725
        %v2742 = vmul.f32 %v2630, %v2726
        %v2743 = vmul.f32 %v2631, %v2727
        %v2744 = vmul.f32 %v2632, %v2728
        %v2745 = vmul.f32 %v2633, %v2729
        %v2746 = vmul.f32 %v2634, %v2730
        %v2747 = vmul.f32 %v2635, %v2731
        %v2748 = vmul.f32 %v2636, %v2732
        %v2749 = vmul.f32 %v2637, %v2733
        %v2750 = vmul.f32 %v2638, %v2734
        %v2751 = vmul.f32 %v2639, %v2735
        %v2752 = vmul.f32 %v2640, %v2736
        %v2753 = vmul.f32 %v2641, %v2737
        %v2754 = vlaneseq
        %v2755 = vshrl.u32 %v2754, 7
        %v2756 = vsub.s32 2, %v2755
        %v2757 = vrot.slane %v1819, %v2756
        %v2758 = vmul.f32 %v2738, %v2757
        %v2759 = vmul.f32 %v2739, %v2757
        %v2760 = vmul.f32 %v2740, %v2757
        %v2761 = vmul.f32 %v2741, %v2757
        %v2762 = vmul.f32 %v2742, %v2757
        %v2763 = vmul.f32 %v2743, %v2757
        %v2764 = vmul.f32 %v2744, %v2757
        %v2765 = vmul.f32 %v2745, %v2757
        %v2766 = vmul.f32 %v2746, %v2757
        %v2767 = vmul.f32 %v2747, %v2757
        %v2768 = vmul.f32 %v2748, %v2757
        %v2769 = vmul.f32 %v2749, %v2757
        %v2770 = vmul.f32 %v2750, %v2757
        %v2771 = vmul.f32 %v2751, %v2757
        %v2772 = vmul.f32 %v2752, %v2757
        %v2773 = vmul.f32 %v2753, %v2757
        %v2774 = vlaneseq
        %v2775 = vshrl.u32 %v2774, 7
        %v2776 = vsub.s32 3, %v2775
        %v2777 = vrot.slane %v1819, %v2776
        %v2778 = vadd.f32 %v2758, %v2777
        %v2779 = vadd.f32 %v2759, %v2777
        %v2780 = vadd.f32 %v2760, %v2777
        %v2781 = vadd.f32 %v2761, %v2777
        %v2782 = vadd.f32 %v2762, %v2777
        %v2783 = vadd.f32 %v2763, %v2777
        %v2784 = vadd.f32 %v2764, %v2777
        %v2785 = vadd.f32 %v2765, %v2777
        %v2786 = vadd.f32 %v2766, %v2777
        %v2787 = vadd.f32 %v2767, %v2777
        %v2788 = vadd.f32 %v2768, %v2777
        %v2789 = vadd.f32 %v2769, %v2777
        %v2790 = vadd.f32 %v2770, %v2777
        %v2791 = vadd.f32 %v2771, %v2777
        %v2792 = vadd.f32 %v2772, %v2777
        %v2793 = vadd.f32 %v2773, %v2777
        %2794 = vst [vmem:[#allocation2] sm:$0xff] %v2778
        %2795 = vst [vmem:[#allocation2 + $0x8] sm:$0xff] %v2779
        %2796 = vst [vmem:[#allocation2 + $0x10] sm:$0xff] %v2780
        %2797 = vst [vmem:[#allocation2 + $0x18] sm:$0xff] %v2781
        %2798 = vst [vmem:[#allocation2 + $0x20] sm:$0xff] %v2782
        %2799 = vst [vmem:[#allocation2 + $0x28] sm:$0xff] %v2783
        %2800 = vst [vmem:[#allocation2 + $0x30] sm:$0xff] %v2784
        %2801 = vst [vmem:[#allocation2 + $0x38] sm:$0xff] %v2785
        %2802 = vst [vmem:[#allocation2 + $0x40] sm:$0xff] %v2786
        %2803 = vst [vmem:[#allocation2 + $0x48] sm:$0xff] %v2787
        %2804 = vst [vmem:[#allocation2 + $0x50] sm:$0xff] %v2788
        %2805 = vst [vmem:[#allocation2 + $0x58] sm:$0xff] %v2789
        %2806 = vst [vmem:[#allocation2 + $0x60] sm:$0xff] %v2790
        %2807 = vst [vmem:[#allocation2 + $0x68] sm:$0xff] %v2791
        %2808 = vst [vmem:[#allocation2 + $0x70] sm:$0xff] %v2792
        %2809 = vst [vmem:[#allocation2 + $0x78] sm:$0xff] %v2793
        %p2810 = scmp.eq.s32.totalorder %s43, 1
        // Predicated region
        $region101: #{tpu_custom_call.1} parent=67 // pred_check
          %p2811 = pneg %p2810
        $region102: #{tpu_custom_call.1} parent=67 // pred_check_branch
          %2813 = sbr.rel (%p2811) target = $region104
        $region103: #{tpu_custom_call.1} parent=67 // pred_region
          %v2814 = vld [vmem:[#allocation8] sm:$0x1]
          %v2815 = vlaneseq
          %v2816 = vshrl.u32 %v2815, 7
          %v2817 = vsub.s32 0, %v2816
          %v2818 = vrot.slane %v2814, %v2817
          %2820 = vbcast.lane.b32.xlu0 %v2818, 256
          %v2821 = vpop.permute.xlu0 %2820
          %s2823 = sor.u32 256, 8
          %2824 = vbcast.lane.b32.xlu0 %v2818, %s2823
          %v2825 = vpop.permute.xlu0 %2824
          %s2827 = sor.u32 256, 16
          %2828 = vbcast.lane.b32.xlu0 %v2818, %s2827
          %v2829 = vpop.permute.xlu0 %2828
          %s2831 = sor.u32 256, 24
          %2832 = vbcast.lane.b32.xlu0 %v2818, %s2831
          %v2833 = vpop.permute.xlu0 %2832
          %s2835 = sor.u32 256, 32
          %2836 = vbcast.lane.b32.xlu0 %v2818, %s2835
          %v2837 = vpop.permute.xlu0 %2836
          %s2839 = sor.u32 256, 40
          %2840 = vbcast.lane.b32.xlu0 %v2818, %s2839
          %v2841 = vpop.permute.xlu0 %2840
          %s2843 = sor.u32 256, 48
          %2844 = vbcast.lane.b32.xlu0 %v2818, %s2843
          %v2845 = vpop.permute.xlu0 %2844
          %s2847 = sor.u32 256, 56
          %2848 = vbcast.lane.b32.xlu0 %v2818, %s2847
          %v2849 = vpop.permute.xlu0 %2848
          %s2851 = sor.u32 256, 64
          %2852 = vbcast.lane.b32.xlu0 %v2818, %s2851
          %v2853 = vpop.permute.xlu0 %2852
          %s2855 = sor.u32 256, 72
          %2856 = vbcast.lane.b32.xlu0 %v2818, %s2855
          %v2857 = vpop.permute.xlu0 %2856
          %s2859 = sor.u32 256, 80
          %2860 = vbcast.lane.b32.xlu0 %v2818, %s2859
          %v2861 = vpop.permute.xlu0 %2860
          %s2863 = sor.u32 256, 88
          %2864 = vbcast.lane.b32.xlu0 %v2818, %s2863
          %v2865 = vpop.permute.xlu0 %2864
          %s2867 = sor.u32 256, 96
          %2868 = vbcast.lane.b32.xlu0 %v2818, %s2867
          %v2869 = vpop.permute.xlu0 %2868
          %s2871 = sor.u32 256, 104
          %2872 = vbcast.lane.b32.xlu0 %v2818, %s2871
          %v2873 = vpop.permute.xlu0 %2872
          %s2875 = sor.u32 256, 112
          %2876 = vbcast.lane.b32.xlu0 %v2818, %s2875
          %v2877 = vpop.permute.xlu0 %2876
          %s2879 = sor.u32 256, 120
          %2880 = vbcast.lane.b32.xlu0 %v2818, %s2879
          %v2881 = vpop.permute.xlu0 %2880
          %vm2882 = vcmp.gt.f32.partialorder %v2821, 0.5
          %vm2883 = vcmp.gt.f32.partialorder %v2825, 0.5
          %vm2884 = vcmp.gt.f32.partialorder %v2829, 0.5
          %vm2885 = vcmp.gt.f32.partialorder %v2833, 0.5
          %vm2886 = vcmp.gt.f32.partialorder %v2837, 0.5
          %vm2887 = vcmp.gt.f32.partialorder %v2841, 0.5
          %vm2888 = vcmp.gt.f32.partialorder %v2845, 0.5
          %vm2889 = vcmp.gt.f32.partialorder %v2849, 0.5
          %vm2890 = vcmp.gt.f32.partialorder %v2853, 0.5
          %vm2891 = vcmp.gt.f32.partialorder %v2857, 0.5
          %vm2892 = vcmp.gt.f32.partialorder %v2861, 0.5
          %vm2893 = vcmp.gt.f32.partialorder %v2865, 0.5
          %vm2894 = vcmp.gt.f32.partialorder %v2869, 0.5
          %vm2895 = vcmp.gt.f32.partialorder %v2873, 0.5
          %vm2896 = vcmp.gt.f32.partialorder %v2877, 0.5
          %vm2897 = vcmp.gt.f32.partialorder %v2881, 0.5
          %v2898 = vsel %vm2882, 1, 0
          %v2899 = vsel %vm2883, 1, 0
          %v2900 = vsel %vm2884, 1, 0
          %v2901 = vsel %vm2885, 1, 0
          %v2902 = vsel %vm2886, 1, 0
          %v2903 = vsel %vm2887, 1, 0
          %v2904 = vsel %vm2888, 1, 0
          %v2905 = vsel %vm2889, 1, 0
          %v2906 = vsel %vm2890, 1, 0
          %v2907 = vsel %vm2891, 1, 0
          %v2908 = vsel %vm2892, 1, 0
          %v2909 = vsel %vm2893, 1, 0
          %v2910 = vsel %vm2894, 1, 0
          %v2911 = vsel %vm2895, 1, 0
          %v2912 = vsel %vm2896, 1, 0
          %v2913 = vsel %vm2897, 1, 0
          %vm2914 = vcmp.eq.s32.totalorder %v2898, 1
          %vm2915 = vcmp.eq.s32.totalorder %v2899, 1
          %vm2916 = vcmp.eq.s32.totalorder %v2900, 1
          %vm2917 = vcmp.eq.s32.totalorder %v2901, 1
          %vm2918 = vcmp.eq.s32.totalorder %v2902, 1
          %vm2919 = vcmp.eq.s32.totalorder %v2903, 1
          %vm2920 = vcmp.eq.s32.totalorder %v2904, 1
          %vm2921 = vcmp.eq.s32.totalorder %v2905, 1
          %vm2922 = vcmp.eq.s32.totalorder %v2906, 1
          %vm2923 = vcmp.eq.s32.totalorder %v2907, 1
          %vm2924 = vcmp.eq.s32.totalorder %v2908, 1
          %vm2925 = vcmp.eq.s32.totalorder %v2909, 1
          %vm2926 = vcmp.eq.s32.totalorder %v2910, 1
          %vm2927 = vcmp.eq.s32.totalorder %v2911, 1
          %vm2928 = vcmp.eq.s32.totalorder %v2912, 1
          %vm2929 = vcmp.eq.s32.totalorder %v2913, 1
          %v2930 = vsel %vm2914, %v2778, -1e+30
          %v2931 = vsel %vm2915, %v2779, -1e+30
          %v2932 = vsel %vm2916, %v2780, -1e+30
          %v2933 = vsel %vm2917, %v2781, -1e+30
          %v2934 = vsel %vm2918, %v2782, -1e+30
          %v2935 = vsel %vm2919, %v2783, -1e+30
          %v2936 = vsel %vm2920, %v2784, -1e+30
          %v2937 = vsel %vm2921, %v2785, -1e+30
          %v2938 = vsel %vm2922, %v2786, -1e+30
          %v2939 = vsel %vm2923, %v2787, -1e+30
          %v2940 = vsel %vm2924, %v2788, -1e+30
          %v2941 = vsel %vm2925, %v2789, -1e+30
          %v2942 = vsel %vm2926, %v2790, -1e+30
          %v2943 = vsel %vm2927, %v2791, -1e+30
          %v2944 = vsel %vm2928, %v2792, -1e+30
          %v2945 = vsel %vm2929, %v2793, -1e+30
          %v2946 = vmax.f32 %v2930, %v2934
          %v2947 = vmax.f32 %v2931, %v2935
          %v2948 = vmax.f32 %v2932, %v2936
          %v2949 = vmax.f32 %v2933, %v2937
          %v2950 = vmax.f32 %v2946, %v2938
          %v2951 = vmax.f32 %v2947, %v2939
          %v2952 = vmax.f32 %v2948, %v2940
          %v2953 = vmax.f32 %v2949, %v2941
          %v2954 = vmax.f32 %v2950, %v2942
          %v2955 = vmax.f32 %v2951, %v2943
          %v2956 = vmax.f32 %v2952, %v2944
          %v2957 = vmax.f32 %v2953, %v2945
          %v2958 = vmax.f32 %v2954, %v2955
          %v2959 = vmax.f32 %v2956, %v2957
          %v2960 = vmax.f32 %v2958, %v2959
          %v2961 = vrot.slane %v2960, 4
          %v2962 = vmax.f32 %v2960, %v2961
          %v2963 = vrot.slane %v2962, 2
          %v2964 = vmax.f32 %v2962, %v2963
          %v2965 = vrot.slane %v2964, 1
          %v2966 = vmax.f32 %v2964, %v2965
          %2967 = vst [vmem:[%s703] sm:$0x1] %v2966
        $region104: #{tpu_custom_call.1} parent=67 // pred_fallthru
          _
        %s2968 = sand.u32 %s365, 1
        %s2969 = scalar_lea.sflag [#allocation5], %s2968
        %s2970 = sand.u32 %s365, 1
        %s2971 = scalar_lea.vmem [#allocation15], %s2970
        // Predicated region
        $region105: #{tpu_custom_call.1} parent=67 // pred_check
          %p2972 = pneg %p375
        $region106: #{tpu_custom_call.1} parent=67 // pred_check_branch
          %2974 = sbr.rel (%p2972) target = $region108
        $region107: #{tpu_custom_call.1} parent=67 // pred_region
          %s2976 = ssub.s32 16, 16
          %2977 = vsyncadd %s2969, %s2976
          %s2978 = smul.addr %s42, 16
          %s2979 = scalar_lea.hbm %s12, %s2978
          %s2981 = sshll.u32 %s2971, 4
          %s2982 = int_to_ptr.vmem [resolvable:$true] %s2981
          %2984 = dma.vmem_to_hbm [thread:$0]  %s2982, 16, %s2979, %s2969
        $region108: #{tpu_custom_call.1} parent=67 // pred_fallthru
          _
      $region68: #{tpu_custom_call.1} parent=5 // pred_fallthru
        _
      %p2985 = scmp.le.s32.totalorder 2, %s33
      // Predicated region
      $region109: #{tpu_custom_call.1} parent=5 // pred_check
        %p2986 = pneg %p2985
      $region110: #{tpu_custom_call.1} parent=5 // pred_check_branch
        %2988 = sbr.rel (%p2986) target = $region112
      $region111: #{tpu_custom_call.1} parent=5 // pred_region
        %s2989 = ssub.s32 %s33, 2
        // Predicated region
        $region113: #{tpu_custom_call.1} parent=111 // pred_check
          %p2990 = pneg %p381
        $region114: #{tpu_custom_call.1} parent=111 // pred_check_branch
          %2992 = sbr.rel (%p2990) target = $region116
        $region115: #{tpu_custom_call.1} parent=111 // pred_region
          %s2993 = sand.u32 %s366, 1
          %s2994 = scalar_lea.sflag [#allocation5], %s2993
          %s2995 = sand.u32 %s366, 1
          %s2996 = scalar_lea.vmem [#allocation15], %s2995
          %2997 = dma.done %s2994, 16
        $region116: #{tpu_custom_call.1} parent=111 // pred_fallthru
          _
      $region112: #{tpu_custom_call.1} parent=5 // pred_fallthru
        _
    $region6: #{tpu_custom_call.1} parent=1 // loop_footer
      %s37 = sadd.s32 1, %s33
    $region7: #{tpu_custom_call.1} parent=1 // loop_footer_branch
      %32 = sbr.rel target = $region3
    $region8: #{tpu_custom_call.1} parent=1 // loop_exit
      _
    %2998 = vsyncpa [#allocation4], 1
    %s2999 = scalar_lea.sflag [#allocation4], 1
    %3000 = vsyncpa %s2999, 1
    %3001 = vsyncpa [#allocation7], 1
    %s3002 = scalar_lea.sflag [#allocation7], 1
    %3003 = vsyncpa %s3002, 1
    %3004 = vsyncpa [#allocation10], 1
    %s3005 = scalar_lea.sflag [#allocation10], 1
    %3006 = vsyncpa %s3005, 1
    %3007 = vsyncpa [#allocation13], 1
    %s3008 = scalar_lea.sflag [#allocation13], 1
    %3009 = vsyncpa %s3008, 1
    %3010 = vsyncpa [#allocation5], 1
    %s3011 = scalar_lea.sflag [#allocation5], 1
    %3012 = vsyncpa %s3011, 1

</llo_original>
